<compile_context>
chip_gen: v6e
topology: v6e:2x2x1
jax: 0.10.0
libtpu: 0.0.40
codegen_flags: <defaults>
</compile_context>

<pallas_src>
import jax
import jax.numpy as jnp
from jax.experimental import pallas as pl
from jax.experimental.pallas import tpu as pltpu


def attmil_kernel(x_ref, w1_ref, b1_ref, wvu_ref, bvu_ref,
                  wa_ref, ba_ref, wc_ref, bc_ref, y_ref, a_ref):
    BB, N = a_ref.shape
    H1 = wc_ref.shape[-1]
    H2 = wa_ref.shape[-1]

    x = x_ref[...]                                         # (BB*N, D) bf16

    # feature extractor: Linear(D, H1) + ReLU  (MXU bf16 in, f32 accumulate)
    h = jnp.dot(x, w1_ref[...], preferred_element_type=jnp.float32) + b1_ref[...]
    h = jnp.maximum(h, 0.0)                                # (BB*N, H1) f32

    # gated attention: fused [V | U] matmul, then split + activate (EUP, f32)
    vu = jnp.dot(h.astype(jnp.bfloat16), wvu_ref[...],
                 preferred_element_type=jnp.float32) + bvu_ref[...]
    av = jnp.tanh(vu[:, :H2])                              # (BB*N, H2)
    au = jax.nn.sigmoid(vu[:, H2:])                        # (BB*N, H2)
    gate = av * au                                         # (BB*N, H2) f32

    # attention logits: rank-1 head as VPU multiply + cross-lane reduce
    gate3 = gate.reshape(BB, N, H2)
    scores = jnp.sum(gate3 * wa_ref[...], axis=-1) + ba_ref[...]   # (BB, N)

    # per-bag softmax over the N instances (lane-major, max-subtracted)
    m = jnp.max(scores, axis=-1, keepdims=True)
    e = jnp.exp(scores - m)
    a = e * pl.reciprocal(jnp.sum(e, axis=-1, keepdims=True), approx=False)

    # weighted bag embeddings: M[b] = sum_n A[b, n] * h[b, n, :]
    h3 = h.reshape(BB, N, H1)
    mvec = jnp.sum(a[:, :, None] * h3, axis=1)             # (BB, H1)

    # classifier head: rank-1, VPU multiply + cross-lane reduce
    y = jnp.sum(mvec * wc_ref[...], axis=-1, keepdims=True) + bc_ref[...]

    y_ref[...] = y                                         # (BB, 1)
    a_ref[...] = a                                         # (BB, N)


def attmil_forward(x, params, block_bags=8):
    B, N, D = x.shape
    H1 = params["w1"].shape[1]
    H2 = params["wv"].shape[1]

    # Bags per grid step. If B < block_bags the block covers the whole batch;
    # otherwise BB is a multiple of 8 so the (BB, N) output block is tileable.
    BB = B if B < block_bags else block_bags
    Bp = ((B + BB - 1) // BB) * BB
    if Bp != B:
        x = jnp.pad(x, ((0, Bp - B), (0, 0), (0, 0)))

    # Flatten bags outside the kernel (free reshape in XLA); bf16 MXU inputs.
    x2 = x.reshape(Bp * N, D).astype(jnp.bfloat16)
    w1 = params["w1"].astype(jnp.bfloat16)
    wvu = jnp.concatenate([params["wv"], params["wu"]], axis=1).astype(jnp.bfloat16)
    bvu = jnp.concatenate([params["bv"], params["bu"]], axis=1)   # f32 (1, 2*H2)

    full = lambda shape: pl.BlockSpec(shape, lambda i: tuple(0 for _ in shape))

    y, a = pl.pallas_call(
        attmil_kernel,
        out_shape=(
            jax.ShapeDtypeStruct((Bp, 1), jnp.float32),     # Y_prob (pre-reshape)
            jax.ShapeDtypeStruct((Bp, N), jnp.float32),     # A (lane-major slab)
        ),
        grid_spec=pltpu.PrefetchScalarGridSpec(
            num_scalar_prefetch=0,
            grid=(Bp // BB,),
            in_specs=[
                pl.BlockSpec((BB * N, D), lambda i: (i, 0)),  # x: BB bags / step
                full((D, H1)), full((1, H1)),                 # W1, b1
                full((H1, 2 * H2)), full((1, 2 * H2)),        # [Wv|Wu], [bv|bu]
                full((1, H2)), full((1, 1)),                  # wa (row), ba
                full((1, H1)), full((1, 1)),                  # wc (row), bc
            ],
            out_specs=[
                pl.BlockSpec((BB, 1), lambda i: (i, 0)),
                pl.BlockSpec((BB, N), lambda i: (i, 0)),
            ],
        ),
        compiler_params=pltpu.CompilerParams(
            dimension_semantics=("parallel",),
            vmem_limit_bytes=32 * 1024 * 1024,   # safe on v5e/v6e/v7x
        ),
    )(x2, w1, params["b1"], wvu, bvu,
      params["wa"], params["ba"], params["wc"], params["bc"])

    return y[:B], a[:B].reshape(B, 1, N)


def init_params(key, D=1024, H1=512, H2=256):
    ks = jax.random.split(key, 10)
    s = lambda fan_in: 1.0 / jnp.sqrt(fan_in)
    return {
        "w1": jax.random.normal(ks[0], (D, H1), jnp.float32) * s(D),
        "b1": jax.random.normal(ks[1], (1, H1), jnp.float32) * s(D),
        "wv": jax.random.normal(ks[2], (H1, H2), jnp.float32) * s(H1),
        "bv": jax.random.normal(ks[3], (1, H2), jnp.float32) * s(H1),
        "wu": jax.random.normal(ks[4], (H1, H2), jnp.float32) * s(H1),
        "bu": jax.random.normal(ks[5], (1, H2), jnp.float32) * s(H1),
        # wa / wc stored as rows (1, H2) / (1, H1) for the VPU rank-1 heads.
        "wa": jax.random.normal(ks[6], (1, H2), jnp.float32) * s(H2),
        "ba": jax.random.normal(ks[7], (1, 1), jnp.float32) * s(H2),
        "wc": jax.random.normal(ks[8], (1, H1), jnp.float32) * s(H1),
        "bc": jax.random.normal(ks[9], (1, 1), jnp.float32) * s(H1),
    }


def attmil_reference(x, p):
    h = jax.nn.relu(jnp.einsum("bnd,dh->bnh", x, p["w1"]) + p["b1"])
    av = jnp.tanh(jnp.einsum("bnh,hk->bnk", h, p["wv"]) + p["bv"])
    au = jax.nn.sigmoid(jnp.einsum("bnh,hk->bnk", h, p["wu"]) + p["bu"])
    s = jnp.einsum("bnk,k->bn", av * au, p["wa"][0]) + p["ba"][0, 0]   # (B, N)
    a = jax.nn.softmax(s, axis=-1)                                     # (B, N)
    m = jnp.einsum("bn,bnh->bh", a, h)                                 # (B, H1)
    y = m @ p["wc"][0][:, None] + p["bc"]                              # (B, 1)
    return y, a[:, None, :]


if __name__ == "__main__":
    # Small demo shapes consistent with the module: D=1024 (hardcoded in the
    # PyTorch Linear), hd1=512, hd2=256 defaults; 16 bags of 8 instances so
    # the bag grid has 2 parallel steps of 8 bags each.
    B, N, D, H1, H2 = 16, 8, 1024, 512, 256
    key = jax.random.PRNGKey(0)
    kx, kp = jax.random.split(key)
    x = jax.random.normal(kx, (B, N, D), jnp.float32)
    params = init_params(kp, D=D, H1=H1, H2=H2)

    y_prob, A = attmil_forward(x, params, block_bags=8)
    jax.block_until_ready((y_prob, A))

    y_ref, a_ref = attmil_reference(x, params)
    assert y_prob.shape == (B, 1) and A.shape == (B, 1, N)
    # bf16 MXU inputs vs f32 reference -> relaxed tolerance.
    assert jnp.allclose(y_prob, y_ref, atol=3e-2, rtol=3e-2)
    assert jnp.allclose(A, a_ref, atol=3e-2, rtol=3e-2)

    print("KERNEL_OK")
</pallas_src>

<mosaic_0001>
module attributes {stable_mosaic.version = 11 : i64} {
  func.func @attmil_kernel(%arg0: i32, %arg1: memref<64x1024xbf16, #tpu.memory_space<vmem>>, %arg2: memref<1024x512xbf16, #tpu.memory_space<vmem>>, %arg3: memref<1x512xf32, #tpu.memory_space<vmem>>, %arg4: memref<512x512xbf16, #tpu.memory_space<vmem>>, %arg5: memref<1x512xf32, #tpu.memory_space<vmem>>, %arg6: memref<1x256xf32, #tpu.memory_space<vmem>>, %arg7: memref<1x1xf32, #tpu.memory_space<vmem>>, %arg8: memref<1x512xf32, #tpu.memory_space<vmem>>, %arg9: memref<1x1xf32, #tpu.memory_space<vmem>>, %arg10: memref<8x1xf32, #tpu.memory_space<vmem>>, %arg11: memref<8x8xf32, #tpu.memory_space<vmem>>) attributes {dimension_semantics = [#tpu.dimension_semantics<parallel>], iteration_bounds = array<i64: 2>, scalar_prefetch = 0 : i64, scratch_operands = 0 : i64, tpu.core_type = #tpu.core_type<tc>, window_params = [{transform_indices = @transform_0, window_bounds = array<i64: 64, 1024>}, {pipeline_mode = #tpu.pipeline_mode<synchronous>, transform_indices = @transform_1, window_bounds = array<i64: 1024, 512>}, {pipeline_mode = #tpu.pipeline_mode<synchronous>, transform_indices = @transform_2, window_bounds = array<i64: 1, 512>}, {pipeline_mode = #tpu.pipeline_mode<synchronous>, transform_indices = @transform_3, window_bounds = array<i64: 512, 512>}, {pipeline_mode = #tpu.pipeline_mode<synchronous>, transform_indices = @transform_4, window_bounds = array<i64: 1, 512>}, {pipeline_mode = #tpu.pipeline_mode<synchronous>, transform_indices = @transform_5, window_bounds = array<i64: 1, 256>}, {pipeline_mode = #tpu.pipeline_mode<synchronous>, transform_indices = @transform_6, window_bounds = array<i64: 1, 1>}, {pipeline_mode = #tpu.pipeline_mode<synchronous>, transform_indices = @transform_7, window_bounds = array<i64: 1, 512>}, {pipeline_mode = #tpu.pipeline_mode<synchronous>, transform_indices = @transform_8, window_bounds = array<i64: 1, 1>}, {transform_indices = @transform_9, window_bounds = array<i64: 8, 1>}, {transform_indices = @transform_10, window_bounds = array<i64: 8, 8>}]} {
    %c0 = arith.constant 0 : index
    %c0_0 = arith.constant 0 : index
    %0 = vector.load %arg1[%c0, %c0_0] : memref<64x1024xbf16, #tpu.memory_space<vmem>>, vector<64x1024xbf16>
    %c0_1 = arith.constant 0 : index
    %c0_2 = arith.constant 0 : index
    %1 = vector.load %arg2[%c0_1, %c0_2] : memref<1024x512xbf16, #tpu.memory_space<vmem>>, vector<1024x512xbf16>
    %cst = arith.constant dense<0.000000e+00> : vector<64x512xf32>
    %2 = tpu.matmul %0, %1, %cst {dimension_numbers = #tpu.dot_dimension_numbers<[1], [0], [0], [1], [0, 0, 1, 1], [], []>} : vector<64x1024xbf16>, vector<1024x512xbf16>, vector<64x512xf32> -> vector<64x512xf32>
    %c0_3 = arith.constant 0 : index
    %c0_4 = arith.constant 0 : index
    %3 = vector.load %arg3[%c0_3, %c0_4] : memref<1x512xf32, #tpu.memory_space<vmem>>, vector<1x512xf32>
    %4 = vector.broadcast %3 : vector<1x512xf32> to vector<64x512xf32>
    %5 = arith.addf %2, %4 : vector<64x512xf32>
    %cst_5 = arith.constant 0.000000e+00 : f32
    %6 = vector.broadcast %cst_5 : f32 to vector<64x512xf32>
    %7 = arith.maximumf %5, %6 : vector<64x512xf32>
    %8 = arith.truncf %7 : vector<64x512xf32> to vector<64x512xbf16>
    %c0_6 = arith.constant 0 : index
    %c0_7 = arith.constant 0 : index
    %9 = vector.load %arg4[%c0_6, %c0_7] : memref<512x512xbf16, #tpu.memory_space<vmem>>, vector<512x512xbf16>
    %cst_8 = arith.constant dense<0.000000e+00> : vector<64x512xf32>
    %10 = tpu.matmul %8, %9, %cst_8 {dimension_numbers = #tpu.dot_dimension_numbers<[1], [0], [0], [1], [0, 0, 1, 1], [], []>} : vector<64x512xbf16>, vector<512x512xbf16>, vector<64x512xf32> -> vector<64x512xf32>
    %c0_9 = arith.constant 0 : index
    %c0_10 = arith.constant 0 : index
    %11 = vector.load %arg5[%c0_9, %c0_10] : memref<1x512xf32, #tpu.memory_space<vmem>>, vector<1x512xf32>
    %12 = vector.broadcast %11 : vector<1x512xf32> to vector<64x512xf32>
    %13 = arith.addf %10, %12 : vector<64x512xf32>
    %14 = vector.extract_strided_slice %13 {offsets = [0, 0], sizes = [64, 256], strides = [1, 1]} : vector<64x512xf32> to vector<64x256xf32>
    %15 = math.tanh %14 : vector<64x256xf32>
    %16 = vector.extract_strided_slice %13 {offsets = [0, 256], sizes = [64, 256], strides = [1, 1]} : vector<64x512xf32> to vector<64x256xf32>
    %17 = arith.negf %16 : vector<64x256xf32>
    %18 = math.exp %17 : vector<64x256xf32>
    %cst_11 = arith.constant 1.000000e+00 : f32
    %19 = vector.broadcast %cst_11 : f32 to vector<64x256xf32>
    %20 = arith.addf %19, %18 : vector<64x256xf32>
    %21 = arith.divf %19, %20 : vector<64x256xf32>
    %22 = arith.mulf %15, %21 : vector<64x256xf32>
    %23 = vector.shape_cast %22 : vector<64x256xf32> to vector<8x8x256xf32>
    %c0_12 = arith.constant 0 : index
    %c0_13 = arith.constant 0 : index
    %24 = vector.load %arg6[%c0_12, %c0_13] : memref<1x256xf32, #tpu.memory_space<vmem>>, vector<1x256xf32>
    %25 = vector.shape_cast %24 : vector<1x256xf32> to vector<1x1x256xf32>
    %26 = vector.broadcast %25 : vector<1x1x256xf32> to vector<8x8x256xf32>
    %27 = arith.mulf %23, %26 : vector<8x8x256xf32>
    %cst_14 = arith.constant dense<0.000000e+00> : vector<8x8xf32>
    %28 = vector.multi_reduction <add>, %27, %cst_14 [2] : vector<8x8x256xf32> to vector<8x8xf32>
    %c0_15 = arith.constant 0 : index
    %c0_16 = arith.constant 0 : index
    %29 = vector.load %arg7[%c0_15, %c0_16] : memref<1x1xf32, #tpu.memory_space<vmem>>, vector<1x1xf32>
    %30 = vector.broadcast %29 : vector<1x1xf32> to vector<8x8xf32>
    %31 = arith.addf %28, %30 : vector<8x8xf32>
    %cst_17 = arith.constant dense<0xFF800000> : vector<8xf32>
    %32 = vector.multi_reduction <maximumf>, %31, %cst_17 [1] : vector<8x8xf32> to vector<8xf32>
    %33 = vector.shape_cast %32 : vector<8xf32> to vector<8x1xf32>
    %34 = vector.broadcast %33 : vector<8x1xf32> to vector<8x8xf32>
    %35 = arith.subf %31, %34 : vector<8x8xf32>
    %36 = math.exp %35 : vector<8x8xf32>
    %cst_18 = arith.constant dense<0.000000e+00> : vector<8xf32>
    %37 = vector.multi_reduction <add>, %36, %cst_18 [1] : vector<8x8xf32> to vector<8xf32>
    %38 = vector.shape_cast %37 : vector<8xf32> to vector<8x1xf32>
    %39 = tpu.reciprocal %38 : vector<8x1xf32> -> vector<8x1xf32>
    %40 = vector.broadcast %39 : vector<8x1xf32> to vector<8x8xf32>
    %41 = arith.mulf %36, %40 : vector<8x8xf32>
    %42 = vector.shape_cast %7 : vector<64x512xf32> to vector<8x8x512xf32>
    %43 = vector.shape_cast %41 : vector<8x8xf32> to vector<8x8x1xf32>
    %44 = vector.broadcast %43 : vector<8x8x1xf32> to vector<8x8x512xf32>
    %45 = arith.mulf %44, %42 : vector<8x8x512xf32>
    %cst_19 = arith.constant dense<0.000000e+00> : vector<8x512xf32>
    %46 = vector.multi_reduction <add>, %45, %cst_19 [1] : vector<8x8x512xf32> to vector<8x512xf32>
    %c0_20 = arith.constant 0 : index
    %c0_21 = arith.constant 0 : index
    %47 = vector.load %arg8[%c0_20, %c0_21] : memref<1x512xf32, #tpu.memory_space<vmem>>, vector<1x512xf32>
    %48 = vector.broadcast %47 : vector<1x512xf32> to vector<8x512xf32>
    %49 = arith.mulf %46, %48 : vector<8x512xf32>
    %cst_22 = arith.constant dense<0.000000e+00> : vector<8xf32>
    %50 = vector.multi_reduction <add>, %49, %cst_22 [1] : vector<8x512xf32> to vector<8xf32>
    %51 = vector.shape_cast %50 : vector<8xf32> to vector<8x1xf32>
    %c0_23 = arith.constant 0 : index
    %c0_24 = arith.constant 0 : index
    %52 = vector.load %arg9[%c0_23, %c0_24] : memref<1x1xf32, #tpu.memory_space<vmem>>, vector<1x1xf32>
    %53 = vector.broadcast %52 : vector<1x1xf32> to vector<8x1xf32>
    %54 = arith.addf %51, %53 : vector<8x1xf32>
    %c0_25 = arith.constant 0 : index
    %c0_26 = arith.constant 0 : index
    %55 = vector.load %arg10[%c0_25, %c0_26] : memref<8x1xf32, #tpu.memory_space<vmem>>, vector<8x1xf32>
    tpu.vector_store %arg10[%c0_25, %c0_26], %54 {strides = array<i32>} : memref<8x1xf32, #tpu.memory_space<vmem>>, vector<8x1xf32>,
    %c0_27 = arith.constant 0 : index
    %c0_28 = arith.constant 0 : index
    %56 = vector.load %arg11[%c0_27, %c0_28] : memref<8x8xf32, #tpu.memory_space<vmem>>, vector<8x8xf32>
    tpu.vector_store %arg11[%c0_27, %c0_28], %41 {strides = array<i32>} : memref<8x8xf32, #tpu.memory_space<vmem>>, vector<8x8xf32>,
    return
  }
  func.func @transform_0(%arg0: i32) -> (i32, i32) {
    %c0_i32 = arith.constant 0 : i32
    %c0_i32_0 = arith.constant 0 : i32
    return %arg0, %c0_i32 : i32, i32
  }
  func.func @transform_1(%arg0: i32) -> (i32, i32) {
    %c0_i32 = arith.constant 0 : i32
    %c0_i32_0 = arith.constant 0 : i32
    %c0_i32_1 = arith.constant 0 : i32
    return %c0_i32, %c0_i32_0 : i32, i32
  }
  func.func @transform_2(%arg0: i32) -> (i32, i32) {
    %c0_i32 = arith.constant 0 : i32
    %c0_i32_0 = arith.constant 0 : i32
    %c0_i32_1 = arith.constant 0 : i32
    return %c0_i32, %c0_i32_0 : i32, i32
  }
  func.func @transform_3(%arg0: i32) -> (i32, i32) {
    %c0_i32 = arith.constant 0 : i32
    %c0_i32_0 = arith.constant 0 : i32
    %c0_i32_1 = arith.constant 0 : i32
    return %c0_i32, %c0_i32_0 : i32, i32
  }
  func.func @transform_4(%arg0: i32) -> (i32, i32) {
    %c0_i32 = arith.constant 0 : i32
    %c0_i32_0 = arith.constant 0 : i32
    %c0_i32_1 = arith.constant 0 : i32
    return %c0_i32, %c0_i32_0 : i32, i32
  }
  func.func @transform_5(%arg0: i32) -> (i32, i32) {
    %c0_i32 = arith.constant 0 : i32
    %c0_i32_0 = arith.constant 0 : i32
    %c0_i32_1 = arith.constant 0 : i32
    return %c0_i32, %c0_i32_0 : i32, i32
  }
  func.func @transform_6(%arg0: i32) -> (i32, i32) {
    %c0_i32 = arith.constant 0 : i32
    %c0_i32_0 = arith.constant 0 : i32
    %c0_i32_1 = arith.constant 0 : i32
    return %c0_i32, %c0_i32_0 : i32, i32
  }
  func.func @transform_7(%arg0: i32) -> (i32, i32) {
    %c0_i32 = arith.constant 0 : i32
    %c0_i32_0 = arith.constant 0 : i32
    %c0_i32_1 = arith.constant 0 : i32
    return %c0_i32, %c0_i32_0 : i32, i32
  }
  func.func @transform_8(%arg0: i32) -> (i32, i32) {
    %c0_i32 = arith.constant 0 : i32
    %c0_i32_0 = arith.constant 0 : i32
    %c0_i32_1 = arith.constant 0 : i32
    return %c0_i32, %c0_i32_0 : i32, i32
  }
  func.func @transform_9(%arg0: i32) -> (i32, i32) {
    %c0_i32 = arith.constant 0 : i32
    %c0_i32_0 = arith.constant 0 : i32
    return %arg0, %c0_i32 : i32, i32
  }
  func.func @transform_10(%arg0: i32) -> (i32, i32) {
    %c0_i32 = arith.constant 0 : i32
    %c0_i32_0 = arith.constant 0 : i32
    return %arg0, %c0_i32 : i32, i32
  }
}

</mosaic_0001>

<llo_original>
// kernel: tpu_custom_call.1
$region0: #{tpu_custom_call.1}
  #allocation0 [shape = 'u32[]', space=smem, size = 0x4, offset = 0x4, fixed_abs, tag = 'smem constant byte address 0x4 - core index']
  #allocation1 [shape = 'u32[144,128]{1,0:T(1,128)}', space=vmem, size = 0x12000, scoped, tag = 'internal scratch']
  #allocation2 [shape = 'f32[1,1]{1,0:T(1,128)S(1)}', space=vmem, size = 0x200, scoped, tag = 'scoped memory for tpu_custom_call.1']
  #allocation3 [shape = 'f32[1,1]{1,0:T(1,128)S(1)}', space=vmem, size = 0x200, scoped, tag = 'scoped memory for tpu_custom_call.1']
  %s0 = inlined_call_operand.hbm [shape: bf16[128,1024], index: 0, kind: input, shape index: {}]
  %s1 = inlined_call_operand.hbm [shape: bf16[1024,512], index: 1, kind: input, shape index: {}]
  %s2 = inlined_call_operand.vmem [shape: f32[1,512], index: 2, kind: input, shape index: {}]
  %s3 = inlined_call_operand.hbm [shape: bf16[512,512], index: 3, kind: input, shape index: {}]
  %s4 = inlined_call_operand.vmem [shape: f32[1,512], index: 4, kind: input, shape index: {}]
  %s5 = inlined_call_operand.hbm [shape: f32[1,256], index: 5, kind: input, shape index: {}]
  %s6 = inlined_call_operand.<no memory space> [shape: f32[1,1], index: 6, kind: input, shape index: {}]
  %s7 = inlined_call_operand.vmem [shape: f32[1,512], index: 7, kind: input, shape index: {}]
  %s8 = inlined_call_operand.<no memory space> [shape: f32[1,1], index: 8, kind: input, shape index: {}]
  %s9 = inlined_call_operand.vmem [shape: f32[16,1], index: 9, kind: output, shape index: {0}]
  %s10 = inlined_call_operand.vmem [shape: f32[16,8], index: 10, kind: output, shape index: {1}]
  %11 = xla_tuple %s9, %s10
  %s12 = sld [smem:[#allocation0]]
  $region93: #{tpu_custom_call.1} parent=0
    _
  %s14 = ssub.s32 1, %s12
  %s15 = scalar_select 0, %s14, %s12
  %v16 = vstv %s6
  %17 = vst [vmem:[#allocation2] sm:$0x1] %v16
  %v18 = vstv %s8
  %19 = vst [vmem:[#allocation3] sm:$0x1] %v18
  $region1: #{tpu_custom_call.1} parent=0
    #allocation4 [shape = 'u8[262144]{0}', space=vmem, size = 0x40000, scoped, tag = 'input window, operand 0']
    #allocation5 [shape = 's32[2]{0}', space=sflag, size = 0x8, scoped, tag = 'scoped memory for tpu_custom_call.1']
    #allocation6 [shape = 'u8[1048576]{0}', space=vmem, size = 0x100000, scoped, tag = 'input window, operand 1, single buffered']
    #allocation7 [shape = 's32[1]{0}', space=sflag, size = 0x4, scoped, tag = 'scoped memory for tpu_custom_call.1']
    #allocation8 [shape = 'u8[524288]{0}', space=vmem, size = 0x80000, scoped, tag = 'input window, operand 3, single buffered']
    #allocation9 [shape = 'u8[1024]{0}', space=vmem, size = 0x400, scoped, tag = 'input window, operand 5, single buffered']
    #allocation10 [shape = 's32[1]{0}', space=sflag, size = 0x4, scoped, tag = 'scoped memory for tpu_custom_call.1']
    %20 = vsyncpa [#allocation5], 0
    %s21 = scalar_lea.sflag [#allocation5], 1
    %22 = vsyncpa %s21, 0
    %23 = vsyncpa [#allocation7], 0
    %24 = vsyncpa [#allocation10], 0
    loop: start=0, step=1, limit=4
    $region2: #{tpu_custom_call.1} parent=1 // loop_pre_header
      _
    $region3: #{tpu_custom_call.1} parent=1 // loop_header
      %s26 = sphi 0, %s30
      %p27 = scmp.ge.s32.totalorder %s26, 4
      %s36 = sphi 0, %s38
      %s39 = sphi 0, %s36
      %s40 = sphi 0, %s39
      %s56 = sphi 0, %s40
      %s60 = sphi 0, %s60
      %s62 = sphi 0, %s60
      %s63 = sphi 0, %s62
      %s77 = sphi 0, %s63
      %s81 = sphi 0, %s81
      %s83 = sphi 0, %s81
      %s84 = sphi 0, %s83
      %s98 = sphi 0, %s84
      %s102 = sphi 0, %s102
      %s104 = sphi 0, %s102
      %s105 = sphi 0, %s104
      %s119 = sphi 0, %s105
      %s123 = sphi 0, %s123
      %s125 = sphi 0, %s123
      %s126 = sphi 0, %s125
      %s140 = sphi 0, %s126
      %s144 = sphi 0, %s144
      %s146 = sphi 0, %s144
      %s147 = sphi 0, %s146
      %s161 = sphi 0, %s147
      %s165 = sphi 0, %s165
      %s167 = sphi 0, %s165
      %s168 = sphi 0, %s167
      %s182 = sphi 0, %s168
      %s186 = sphi 0, %s186
      %s188 = sphi 0, %s186
      %s189 = sphi 0, %s188
      %s203 = sphi 0, %s189
      %s207 = sphi 0, %s207
      %s209 = sphi 0, %s207
      %s210 = sphi 0, %s209
      %s224 = sphi 0, %s210
      %s230 = sphi 0, %s232
      %s233 = sphi 0, %s230
      %s234 = sphi 0, %s233
      %s250 = sphi 0, %s234
      %s256 = sphi 0, %s258
      %s259 = sphi 0, %s256
      %s260 = sphi 0, %s259
      %s276 = sphi 0, %s260
    $region4: #{tpu_custom_call.1} parent=1 // loop_header_branch
      %29 = sbr.rel (%p27) target = $region8
    $region5: #{tpu_custom_call.1} parent=1 // loop_body
      %s31 = ssub.s32 %s26, 1
      %s32 = ssub.s32 %s26, 2
      %s33 = sadd.s32 %s26, 1
      %s34 = ssub.s32 %s26, %s33
      %p35 = scmp.eq.s32.totalorder %s34, 0
      %s37 = sadd.s32 %s36, 1
      %s38 = scalar_select %p35, %s36, %s37
      %p41 = pneg %p35
      %p42 = scmp.eq.s32.totalorder %s26, 1
      %p43 = por %p41, %p42
      %p44 = scmp.ne.s32.totalorder %s36, %s39
      %p45 = scmp.eq.s32.totalorder %s26, 0
      %p46 = por %p44, %p45
      %p47 = scmp.ne.s32.totalorder %s36, %s39
      %p48 = scmp.eq.s32.totalorder %s31, 1
      %p49 = por %p47, %p48
      %p50 = scmp.ne.s32.totalorder %s39, %s40
      %p51 = scmp.eq.s32.totalorder %s31, 0
      %p52 = por %p50, %p51
      %p53 = scmp.ne.s32.totalorder %s39, %s40
      %p54 = scmp.eq.s32.totalorder %s32, 1
      %p55 = por %p53, %p54
      %p57 = scmp.ne.s32.totalorder %s40, %s56
      %p58 = scmp.eq.s32.totalorder %s32, 0
      %p59 = por %p57, %p58
      %s61 = sadd.s32 %s60, 1
      %p64 = scmp.eq.s32.totalorder %s26, 1
      %p65 = scmp.ne.s32.totalorder %s60, %s62
      %p66 = scmp.eq.s32.totalorder %s26, 0
      %p67 = por %p65, %p66
      %p68 = scmp.ne.s32.totalorder %s60, %s62
      %p69 = scmp.eq.s32.totalorder %s31, 1
      %p70 = por %p68, %p69
      %p71 = scmp.ne.s32.totalorder %s62, %s63
      %p72 = scmp.eq.s32.totalorder %s31, 0
      %p73 = por %p71, %p72
      %p74 = scmp.ne.s32.totalorder %s62, %s63
      %p75 = scmp.eq.s32.totalorder %s32, 1
      %p76 = por %p74, %p75
      %p78 = scmp.ne.s32.totalorder %s63, %s77
      %p79 = scmp.eq.s32.totalorder %s32, 0
      %p80 = por %p78, %p79
      %s82 = sadd.s32 %s81, 1
      %p85 = scmp.eq.s32.totalorder %s26, 1
      %p86 = scmp.ne.s32.totalorder %s81, %s83
      %p87 = scmp.eq.s32.totalorder %s26, 0
      %p88 = por %p86, %p87
      %p89 = scmp.ne.s32.totalorder %s81, %s83
      %p90 = scmp.eq.s32.totalorder %s31, 1
      %p91 = por %p89, %p90
      %p92 = scmp.ne.s32.totalorder %s83, %s84
      %p93 = scmp.eq.s32.totalorder %s31, 0
      %p94 = por %p92, %p93
      %p95 = scmp.ne.s32.totalorder %s83, %s84
      %p96 = scmp.eq.s32.totalorder %s32, 1
      %p97 = por %p95, %p96
      %p99 = scmp.ne.s32.totalorder %s84, %s98
      %p100 = scmp.eq.s32.totalorder %s32, 0
      %p101 = por %p99, %p100
      %s103 = sadd.s32 %s102, 1
      %p106 = scmp.eq.s32.totalorder %s26, 1
      %p107 = scmp.ne.s32.totalorder %s102, %s104
      %p108 = scmp.eq.s32.totalorder %s26, 0
      %p109 = por %p107, %p108
      %p110 = scmp.ne.s32.totalorder %s102, %s104
      %p111 = scmp.eq.s32.totalorder %s31, 1
      %p112 = por %p110, %p111
      %p113 = scmp.ne.s32.totalorder %s104, %s105
      %p114 = scmp.eq.s32.totalorder %s31, 0
      %p115 = por %p113, %p114
      %p116 = scmp.ne.s32.totalorder %s104, %s105
      %p117 = scmp.eq.s32.totalorder %s32, 1
      %p118 = por %p116, %p117
      %p120 = scmp.ne.s32.totalorder %s105, %s119
      %p121 = scmp.eq.s32.totalorder %s32, 0
      %p122 = por %p120, %p121
      %s124 = sadd.s32 %s123, 1
      %p127 = scmp.eq.s32.totalorder %s26, 1
      %p128 = scmp.ne.s32.totalorder %s123, %s125
      %p129 = scmp.eq.s32.totalorder %s26, 0
      %p130 = por %p128, %p129
      %p131 = scmp.ne.s32.totalorder %s123, %s125
      %p132 = scmp.eq.s32.totalorder %s31, 1
      %p133 = por %p131, %p132
      %p134 = scmp.ne.s32.totalorder %s125, %s126
      %p135 = scmp.eq.s32.totalorder %s31, 0
      %p136 = por %p134, %p135
      %p137 = scmp.ne.s32.totalorder %s125, %s126
      %p138 = scmp.eq.s32.totalorder %s32, 1
      %p139 = por %p137, %p138
      %p141 = scmp.ne.s32.totalorder %s126, %s140
      %p142 = scmp.eq.s32.totalorder %s32, 0
      %p143 = por %p141, %p142
      %s145 = sadd.s32 %s144, 1
      %p148 = scmp.eq.s32.totalorder %s26, 1
      %p149 = scmp.ne.s32.totalorder %s144, %s146
      %p150 = scmp.eq.s32.totalorder %s26, 0
      %p151 = por %p149, %p150
      %p152 = scmp.ne.s32.totalorder %s144, %s146
      %p153 = scmp.eq.s32.totalorder %s31, 1
      %p154 = por %p152, %p153
      %p155 = scmp.ne.s32.totalorder %s146, %s147
      %p156 = scmp.eq.s32.totalorder %s31, 0
      %p157 = por %p155, %p156
      %p158 = scmp.ne.s32.totalorder %s146, %s147
      %p159 = scmp.eq.s32.totalorder %s32, 1
      %p160 = por %p158, %p159
      %p162 = scmp.ne.s32.totalorder %s147, %s161
      %p163 = scmp.eq.s32.totalorder %s32, 0
      %p164 = por %p162, %p163
      %s166 = sadd.s32 %s165, 1
      %p169 = scmp.eq.s32.totalorder %s26, 1
      %p170 = scmp.ne.s32.totalorder %s165, %s167
      %p171 = scmp.eq.s32.totalorder %s26, 0
      %p172 = por %p170, %p171
      %p173 = scmp.ne.s32.totalorder %s165, %s167
      %p174 = scmp.eq.s32.totalorder %s31, 1
      %p175 = por %p173, %p174
      %p176 = scmp.ne.s32.totalorder %s167, %s168
      %p177 = scmp.eq.s32.totalorder %s31, 0
      %p178 = por %p176, %p177
      %p179 = scmp.ne.s32.totalorder %s167, %s168
      %p180 = scmp.eq.s32.totalorder %s32, 1
      %p181 = por %p179, %p180
      %p183 = scmp.ne.s32.totalorder %s168, %s182
      %p184 = scmp.eq.s32.totalorder %s32, 0
      %p185 = por %p183, %p184
      %s187 = sadd.s32 %s186, 1
      %p190 = scmp.eq.s32.totalorder %s26, 1
      %p191 = scmp.ne.s32.totalorder %s186, %s188
      %p192 = scmp.eq.s32.totalorder %s26, 0
      %p193 = por %p191, %p192
      %p194 = scmp.ne.s32.totalorder %s186, %s188
      %p195 = scmp.eq.s32.totalorder %s31, 1
      %p196 = por %p194, %p195
      %p197 = scmp.ne.s32.totalorder %s188, %s189
      %p198 = scmp.eq.s32.totalorder %s31, 0
      %p199 = por %p197, %p198
      %p200 = scmp.ne.s32.totalorder %s188, %s189
      %p201 = scmp.eq.s32.totalorder %s32, 1
      %p202 = por %p200, %p201
      %p204 = scmp.ne.s32.totalorder %s189, %s203
      %p205 = scmp.eq.s32.totalorder %s32, 0
      %p206 = por %p204, %p205
      %s208 = sadd.s32 %s207, 1
      %p211 = scmp.eq.s32.totalorder %s26, 1
      %p212 = scmp.ne.s32.totalorder %s207, %s209
      %p213 = scmp.eq.s32.totalorder %s26, 0
      %p214 = por %p212, %p213
      %p215 = scmp.ne.s32.totalorder %s207, %s209
      %p216 = scmp.eq.s32.totalorder %s31, 1
      %p217 = por %p215, %p216
      %p218 = scmp.ne.s32.totalorder %s209, %s210
      %p219 = scmp.eq.s32.totalorder %s31, 0
      %p220 = por %p218, %p219
      %p221 = scmp.ne.s32.totalorder %s209, %s210
      %p222 = scmp.eq.s32.totalorder %s32, 1
      %p223 = por %p221, %p222
      %p225 = scmp.ne.s32.totalorder %s210, %s224
      %p226 = scmp.eq.s32.totalorder %s32, 0
      %p227 = por %p225, %p226
      %s228 = ssub.s32 %s26, %s33
      %p229 = scmp.eq.s32.totalorder %s228, 0
      %s231 = sadd.s32 %s230, 1
      %s232 = scalar_select %p229, %s230, %s231
      %p235 = pneg %p229
      %p236 = scmp.eq.s32.totalorder %s26, 1
      %p237 = por %p235, %p236
      %p238 = scmp.ne.s32.totalorder %s230, %s233
      %p239 = scmp.eq.s32.totalorder %s26, 0
      %p240 = por %p238, %p239
      %p241 = scmp.ne.s32.totalorder %s230, %s233
      %p242 = scmp.eq.s32.totalorder %s31, 1
      %p243 = por %p241, %p242
      %p244 = scmp.ne.s32.totalorder %s233, %s234
      %p245 = scmp.eq.s32.totalorder %s31, 0
      %p246 = por %p244, %p245
      %p247 = scmp.ne.s32.totalorder %s233, %s234
      %p248 = scmp.eq.s32.totalorder %s32, 1
      %p249 = por %p247, %p248
      %p251 = scmp.ne.s32.totalorder %s234, %s250
      %p252 = scmp.eq.s32.totalorder %s32, 0
      %p253 = por %p251, %p252
      %s254 = ssub.s32 %s26, %s33
      %p255 = scmp.eq.s32.totalorder %s254, 0
      %s257 = sadd.s32 %s256, 1
      %s258 = scalar_select %p255, %s256, %s257
      %p261 = pneg %p255
      %p262 = scmp.eq.s32.totalorder %s26, 1
      %p263 = por %p261, %p262
      %p264 = scmp.ne.s32.totalorder %s256, %s259
      %p265 = scmp.eq.s32.totalorder %s26, 0
      %p266 = por %p264, %p265
      %p267 = scmp.ne.s32.totalorder %s256, %s259
      %p268 = scmp.eq.s32.totalorder %s31, 1
      %p269 = por %p267, %p268
      %p270 = scmp.ne.s32.totalorder %s259, %s260
      %p271 = scmp.eq.s32.totalorder %s31, 0
      %p272 = por %p270, %p271
      %p273 = scmp.ne.s32.totalorder %s259, %s260
      %p274 = scmp.eq.s32.totalorder %s32, 1
      %p275 = por %p273, %p274
      %p277 = scmp.ne.s32.totalorder %s260, %s276
      %p278 = scmp.eq.s32.totalorder %s32, 0
      %p279 = por %p277, %p278
      %p280 = scmp.le.s32.totalorder 1, %s26
      %p281 = scmp.lt.s32.totalorder %s26, 3
      %p282 = pnand %p280, %p281
      %p283 = pneg %p282
      // Predicated region
      $region9: #{tpu_custom_call.1} parent=5 // pred_check
        _
      $region10: #{tpu_custom_call.1} parent=5 // pred_check_branch
        %285 = sbr.rel (%p282) target = $region12
      $region11: #{tpu_custom_call.1} parent=5 // pred_region
        %s286 = ssub.s32 %s26, 1
        // Predicated region
        $region13: #{tpu_custom_call.1} parent=11 // pred_check
          %p287 = pneg %p73
        $region14: #{tpu_custom_call.1} parent=11 // pred_check_branch
          %289 = sbr.rel (%p287) target = $region16
        $region15: #{tpu_custom_call.1} parent=11 // pred_region
          %s291 = ssub.s32 32768, 32768
          %292 = vsyncadd [#allocation7], %s291
          %s293 = sshll.u32 [#allocation6], 4
          %s294 = int_to_ptr.vmem [resolvable:$true] %s293
          %299 = dma.hbm_to_vmem [thread:$0]  %s1, 32768, %s294, [#allocation7], 256, 256, 16
        $region16: #{tpu_custom_call.1} parent=11 // pred_fallthru
          _
        // Predicated region
        $region17: #{tpu_custom_call.1} parent=11 // pred_check
          %p300 = pneg %p94
        $region18: #{tpu_custom_call.1} parent=11 // pred_check_branch
          %302 = sbr.rel (%p300) target = $region20
        $region19: #{tpu_custom_call.1} parent=11 // pred_region
          _
        $region20: #{tpu_custom_call.1} parent=11 // pred_fallthru
          _
        // Predicated region
        $region21: #{tpu_custom_call.1} parent=11 // pred_check
          %p303 = pneg %p115
        $region22: #{tpu_custom_call.1} parent=11 // pred_check_branch
          %305 = sbr.rel (%p303) target = $region24
        $region23: #{tpu_custom_call.1} parent=11 // pred_region
          %s307 = ssub.s32 16384, 16384
          %308 = vsyncadd [#allocation7], %s307
          %s309 = sshll.u32 [#allocation8], 4
          %s310 = int_to_ptr.vmem [resolvable:$true] %s309
          %315 = dma.hbm_to_vmem [thread:$0]  %s3, 16384, %s310, [#allocation7], 256, 256, 16
        $region24: #{tpu_custom_call.1} parent=11 // pred_fallthru
          _
        // Predicated region
        $region25: #{tpu_custom_call.1} parent=11 // pred_check
          %p316 = pneg %p136
        $region26: #{tpu_custom_call.1} parent=11 // pred_check_branch
          %318 = sbr.rel (%p316) target = $region28
        $region27: #{tpu_custom_call.1} parent=11 // pred_region
          _
        $region28: #{tpu_custom_call.1} parent=11 // pred_fallthru
          _
        // Predicated region
        $region29: #{tpu_custom_call.1} parent=11 // pred_check
          %p319 = pneg %p157
        $region30: #{tpu_custom_call.1} parent=11 // pred_check_branch
          %321 = sbr.rel (%p319) target = $region32
        $region31: #{tpu_custom_call.1} parent=11 // pred_region
          %s323 = ssub.s32 32, 32
          %324 = vsyncadd [#allocation10], %s323
          %s326 = sshll.u32 [#allocation9], 4
          %s327 = int_to_ptr.vmem [resolvable:$true] %s326
          %329 = dma.hbm_to_vmem [thread:$0]  %s5, 32, %s327, [#allocation10]
        $region32: #{tpu_custom_call.1} parent=11 // pred_fallthru
          _
        // Predicated region
        $region33: #{tpu_custom_call.1} parent=11 // pred_check
          %p330 = pneg %p178
        $region34: #{tpu_custom_call.1} parent=11 // pred_check_branch
          %332 = sbr.rel (%p330) target = $region36
        $region35: #{tpu_custom_call.1} parent=11 // pred_region
          _
        $region36: #{tpu_custom_call.1} parent=11 // pred_fallthru
          _
        // Predicated region
        $region37: #{tpu_custom_call.1} parent=11 // pred_check
          %p333 = pneg %p199
        $region38: #{tpu_custom_call.1} parent=11 // pred_check_branch
          %335 = sbr.rel (%p333) target = $region40
        $region39: #{tpu_custom_call.1} parent=11 // pred_region
          _
        $region40: #{tpu_custom_call.1} parent=11 // pred_fallthru
          _
        // Predicated region
        $region41: #{tpu_custom_call.1} parent=11 // pred_check
          %p336 = pneg %p220
        $region42: #{tpu_custom_call.1} parent=11 // pred_check_branch
          %338 = sbr.rel (%p336) target = $region44
        $region43: #{tpu_custom_call.1} parent=11 // pred_region
          _
        $region44: #{tpu_custom_call.1} parent=11 // pred_fallthru
          _
      $region12: #{tpu_custom_call.1} parent=5 // pred_fallthru
        _
      %p339 = scmp.lt.s32.totalorder %s26, 2
      // Predicated region
      $region45: #{tpu_custom_call.1} parent=5 // pred_check
        %p340 = pneg %p339
      $region46: #{tpu_custom_call.1} parent=5 // pred_check_branch
        %342 = sbr.rel (%p340) target = $region48
      $region47: #{tpu_custom_call.1} parent=5 // pred_region
        // Predicated region
        $region49: #{tpu_custom_call.1} parent=47 // pred_check
          %p343 = pneg %p46
        $region50: #{tpu_custom_call.1} parent=47 // pred_check_branch
          %345 = sbr.rel (%p343) target = $region52
        $region51: #{tpu_custom_call.1} parent=47 // pred_region
          %s346 = sand.u32 %s36, 1
          %s347 = scalar_lea.sflag [#allocation5], %s346
          %s348 = sand.u32 %s36, 1
          %s349 = smul.addr %s348, 256
          %s350 = scalar_lea.vmem [#allocation4], %s349
          %s351 = smul.u32 8, %s26
          %s353 = ssub.s32 4096, 4096
          %354 = vsyncadd %s347, %s353
          %s355 = smul.addr %s351, 8
          %s356 = smul.addr %s355, 64
          %s357 = scalar_lea.hbm %s0, %s356
          %s358 = sshll.u32 %s350, 4
          %s359 = int_to_ptr.vmem [resolvable:$true] %s358
          %364 = dma.hbm_to_vmem [thread:$0]  %s357, 4096, %s359, %s347, 512, 512, 32
        $region52: #{tpu_custom_call.1} parent=47 // pred_fallthru
          _
      $region48: #{tpu_custom_call.1} parent=5 // pred_fallthru
        _
      %p365 = scmp.le.s32.totalorder 1, %s26
      %p366 = scmp.lt.s32.totalorder %s26, 3
      %p367 = pnand %p365, %p366
      %p368 = pneg %p367
      // Predicated region
      $region53: #{tpu_custom_call.1} parent=5 // pred_check
        _
      $region54: #{tpu_custom_call.1} parent=5 // pred_check_branch
        %370 = sbr.rel (%p367) target = $region56
      $region55: #{tpu_custom_call.1} parent=5 // pred_region
        %s371 = ssub.s32 %s26, 1
        %s372 = sand.u32 %s39, 1
        %s373 = scalar_lea.sflag [#allocation5], %s372
        %s374 = sand.u32 %s39, 1
        %s375 = smul.addr %s374, 256
        %s376 = scalar_lea.vmem [#allocation4], %s375
        // Predicated region
        $region57: #{tpu_custom_call.1} parent=55 // pred_check
          %p377 = pneg %p52
        $region58: #{tpu_custom_call.1} parent=55 // pred_check_branch
          %379 = sbr.rel (%p377) target = $region60
        $region59: #{tpu_custom_call.1} parent=55 // pred_region
          %380 = dma.done %s373, 4096
        $region60: #{tpu_custom_call.1} parent=55 // pred_fallthru
          _
        // Predicated region
        $region61: #{tpu_custom_call.1} parent=55 // pred_check
          %p381 = pneg %p73
        $region62: #{tpu_custom_call.1} parent=55 // pred_check_branch
          %383 = sbr.rel (%p381) target = $region64
        $region63: #{tpu_custom_call.1} parent=55 // pred_region
          %384 = dma.done [#allocation7], 32768
        $region64: #{tpu_custom_call.1} parent=55 // pred_fallthru
          _
        // Predicated region
        $region65: #{tpu_custom_call.1} parent=55 // pred_check
          %p385 = pneg %p115
        $region66: #{tpu_custom_call.1} parent=55 // pred_check_branch
          %387 = sbr.rel (%p385) target = $region68
        $region67: #{tpu_custom_call.1} parent=55 // pred_region
          %388 = dma.done [#allocation7], 16384
        $region68: #{tpu_custom_call.1} parent=55 // pred_fallthru
          _
        // Predicated region
        $region69: #{tpu_custom_call.1} parent=55 // pred_check
          %p389 = pneg %p157
        $region70: #{tpu_custom_call.1} parent=55 // pred_check_branch
          %391 = sbr.rel (%p389) target = $region72
        $region71: #{tpu_custom_call.1} parent=55 // pred_region
          %392 = dma.done [#allocation10], 32
        $region72: #{tpu_custom_call.1} parent=55 // pred_fallthru
          _
        %s393 = sand.u32 %s39, 1
        %s394 = scalar_lea.sflag [#allocation5], %s393
        %s395 = sand.u32 %s39, 1
        %s396 = smul.addr %s395, 256
        %s397 = scalar_lea.vmem [#allocation4], %s396
        %p398 = pneg %p52
        %p399 = pneg %p49
        %p400 = pneg %p73
        %p401 = pneg %p70
        %p402 = pneg %p94
        %p403 = pneg %p91
        %p404 = pneg %p115
        %p405 = pneg %p112
        %p406 = pneg %p136
        %p407 = pneg %p133
        %p408 = pneg %p157
        %p409 = pneg %p154
        %p410 = pneg %p178
        %p411 = pneg %p175
        %p412 = pneg %p199
        %p413 = pneg %p196
        %p414 = pneg %p220
        %p415 = pneg %p217
        %p416 = pneg %p246
        %p417 = pneg %p243
        %p418 = scmp.lt.s32.totalorder %s31, 1
        %s419 = scalar_select %p418, %s31, 1
        %s420 = smul.addr %s419, 8
        %s421 = scalar_lea.vmem %s9, %s420
        %p422 = pneg %p272
        %p423 = pneg %p269
        %p424 = scmp.lt.s32.totalorder %s31, 1
        %s425 = scalar_select %p424, %s31, 1
        %s426 = smul.addr %s425, 8
        %s427 = scalar_lea.vmem %s10, %s426
        %s428 = smul.u32 8, %s31
        %p429 = scmp.lt.s32.totalorder %s31, 1
        %s430 = scalar_select %p429, %s31, 1
        %s431 = smul.addr %s430, 8
        %s432 = scalar_lea.vmem %s9, %s431
        %p433 = scmp.lt.s32.totalorder %s31, 1
        %s434 = scalar_select %p433, %s31, 1
        %s435 = smul.addr %s434, 8
        %s436 = scalar_lea.vmem %s10, %s435
        %v437 = vld [vmem:[%s376] sm:$0xff]
        %v438 = vld [vmem:[%s376 + $0x8] sm:$0xff]
        %v439 = vld [vmem:[%s376 + $0x10] sm:$0xff]
        %v440 = vld [vmem:[%s376 + $0x18] sm:$0xff]
        %v441 = vld [vmem:[%s376 + $0x20] sm:$0xff]
        %v442 = vld [vmem:[%s376 + $0x28] sm:$0xff]
        %v443 = vld [vmem:[%s376 + $0x30] sm:$0xff]
        %v444 = vld [vmem:[%s376 + $0x38] sm:$0xff]
        %v445 = vld [vmem:[%s376 + $0x40] sm:$0xff]
        %v446 = vld [vmem:[%s376 + $0x48] sm:$0xff]
        %v447 = vld [vmem:[%s376 + $0x50] sm:$0xff]
        %v448 = vld [vmem:[%s376 + $0x58] sm:$0xff]
        %v449 = vld [vmem:[%s376 + $0x60] sm:$0xff]
        %v450 = vld [vmem:[%s376 + $0x68] sm:$0xff]
        %v451 = vld [vmem:[%s376 + $0x70] sm:$0xff]
        %v452 = vld [vmem:[%s376 + $0x78] sm:$0xff]
        %v453 = vld [vmem:[%s376 + $0x80] sm:$0xff]
        %v454 = vld [vmem:[%s376 + $0x88] sm:$0xff]
        %v455 = vld [vmem:[%s376 + $0x90] sm:$0xff]
        %v456 = vld [vmem:[%s376 + $0x98] sm:$0xff]
        %v457 = vld [vmem:[%s376 + $0xa0] sm:$0xff]
        %v458 = vld [vmem:[%s376 + $0xa8] sm:$0xff]
        %v459 = vld [vmem:[%s376 + $0xb0] sm:$0xff]
        %v460 = vld [vmem:[%s376 + $0xb8] sm:$0xff]
        %v461 = vld [vmem:[%s376 + $0xc0] sm:$0xff]
        %v462 = vld [vmem:[%s376 + $0xc8] sm:$0xff]
        %v463 = vld [vmem:[%s376 + $0xd0] sm:$0xff]
        %v464 = vld [vmem:[%s376 + $0xd8] sm:$0xff]
        %v465 = vld [vmem:[%s376 + $0xe0] sm:$0xff]
        %v466 = vld [vmem:[%s376 + $0xe8] sm:$0xff]
        %v467 = vld [vmem:[%s376 + $0xf0] sm:$0xff]
        %v468 = vld [vmem:[%s376 + $0xf8] sm:$0xff]
        %v469 = vld [vmem:[#allocation6] sm:$0xff]
        %v470 = vld [vmem:[#allocation6 + $0x8] sm:$0xff]
        %v471 = vld [vmem:[#allocation6 + $0x10] sm:$0xff]
        %v472 = vld [vmem:[#allocation6 + $0x18] sm:$0xff]
        %v473 = vld [vmem:[#allocation6 + $0x20] sm:$0xff]
        %v474 = vld [vmem:[#allocation6 + $0x28] sm:$0xff]
        %v475 = vld [vmem:[#allocation6 + $0x30] sm:$0xff]
        %v476 = vld [vmem:[#allocation6 + $0x38] sm:$0xff]
        %v477 = vld [vmem:[#allocation6 + $0x40] sm:$0xff]
        %v478 = vld [vmem:[#allocation6 + $0x48] sm:$0xff]
        %v479 = vld [vmem:[#allocation6 + $0x50] sm:$0xff]
        %v480 = vld [vmem:[#allocation6 + $0x58] sm:$0xff]
        %v481 = vld [vmem:[#allocation6 + $0x60] sm:$0xff]
        %v482 = vld [vmem:[#allocation6 + $0x68] sm:$0xff]
        %v483 = vld [vmem:[#allocation6 + $0x70] sm:$0xff]
        %v484 = vld [vmem:[#allocation6 + $0x78] sm:$0xff]
        %v485 = vld [vmem:[#allocation6 + $0x80] sm:$0xff]
        %v486 = vld [vmem:[#allocation6 + $0x88] sm:$0xff]
        %v487 = vld [vmem:[#allocation6 + $0x90] sm:$0xff]
        %v488 = vld [vmem:[#allocation6 + $0x98] sm:$0xff]
        %v489 = vld [vmem:[#allocation6 + $0xa0] sm:$0xff]
        %v490 = vld [vmem:[#allocation6 + $0xa8] sm:$0xff]
        %v491 = vld [vmem:[#allocation6 + $0xb0] sm:$0xff]
        %v492 = vld [vmem:[#allocation6 + $0xb8] sm:$0xff]
        %v493 = vld [vmem:[#allocation6 + $0xc0] sm:$0xff]
        %v494 = vld [vmem:[#allocation6 + $0xc8] sm:$0xff]
        %v495 = vld [vmem:[#allocation6 + $0xd0] sm:$0xff]
        %v496 = vld [vmem:[#allocation6 + $0xd8] sm:$0xff]
        %v497 = vld [vmem:[#allocation6 + $0xe0] sm:$0xff]
        %v498 = vld [vmem:[#allocation6 + $0xe8] sm:$0xff]
        %v499 = vld [vmem:[#allocation6 + $0xf0] sm:$0xff]
        %v500 = vld [vmem:[#allocation6 + $0xf8] sm:$0xff]
        %v501 = vld [vmem:[#allocation6 + $0x100] sm:$0xff]
        %v502 = vld [vmem:[#allocation6 + $0x108] sm:$0xff]
        %v503 = vld [vmem:[#allocation6 + $0x110] sm:$0xff]
        %v504 = vld [vmem:[#allocation6 + $0x118] sm:$0xff]
        %v505 = vld [vmem:[#allocation6 + $0x120] sm:$0xff]
        %v506 = vld [vmem:[#allocation6 + $0x128] sm:$0xff]
        %v507 = vld [vmem:[#allocation6 + $0x130] sm:$0xff]
        %v508 = vld [vmem:[#allocation6 + $0x138] sm:$0xff]
        %v509 = vld [vmem:[#allocation6 + $0x140] sm:$0xff]
        %v510 = vld [vmem:[#allocation6 + $0x148] sm:$0xff]
        %v511 = vld [vmem:[#allocation6 + $0x150] sm:$0xff]
        %v512 = vld [vmem:[#allocation6 + $0x158] sm:$0xff]
        %v513 = vld [vmem:[#allocation6 + $0x160] sm:$0xff]
        %v514 = vld [vmem:[#allocation6 + $0x168] sm:$0xff]
        %v515 = vld [vmem:[#allocation6 + $0x170] sm:$0xff]
        %v516 = vld [vmem:[#allocation6 + $0x178] sm:$0xff]
        %v517 = vld [vmem:[#allocation6 + $0x180] sm:$0xff]
        %v518 = vld [vmem:[#allocation6 + $0x188] sm:$0xff]
        %v519 = vld [vmem:[#allocation6 + $0x190] sm:$0xff]
        %v520 = vld [vmem:[#allocation6 + $0x198] sm:$0xff]
        %v521 = vld [vmem:[#allocation6 + $0x1a0] sm:$0xff]
        %v522 = vld [vmem:[#allocation6 + $0x1a8] sm:$0xff]
        %v523 = vld [vmem:[#allocation6 + $0x1b0] sm:$0xff]
        %v524 = vld [vmem:[#allocation6 + $0x1b8] sm:$0xff]
        %v525 = vld [vmem:[#allocation6 + $0x1c0] sm:$0xff]
        %v526 = vld [vmem:[#allocation6 + $0x1c8] sm:$0xff]
        %v527 = vld [vmem:[#allocation6 + $0x1d0] sm:$0xff]
        %v528 = vld [vmem:[#allocation6 + $0x1d8] sm:$0xff]
        %v529 = vld [vmem:[#allocation6 + $0x1e0] sm:$0xff]
        %v530 = vld [vmem:[#allocation6 + $0x1e8] sm:$0xff]
        %v531 = vld [vmem:[#allocation6 + $0x1f0] sm:$0xff]
        %v532 = vld [vmem:[#allocation6 + $0x1f8] sm:$0xff]
        %v533 = vld [vmem:[#allocation6 + $0x200] sm:$0xff]
        %v534 = vld [vmem:[#allocation6 + $0x208] sm:$0xff]
        %v535 = vld [vmem:[#allocation6 + $0x210] sm:$0xff]
        %v536 = vld [vmem:[#allocation6 + $0x218] sm:$0xff]
        %v537 = vld [vmem:[#allocation6 + $0x220] sm:$0xff]
        %v538 = vld [vmem:[#allocation6 + $0x228] sm:$0xff]
        %v539 = vld [vmem:[#allocation6 + $0x230] sm:$0xff]
        %v540 = vld [vmem:[#allocation6 + $0x238] sm:$0xff]
        %v541 = vld [vmem:[#allocation6 + $0x240] sm:$0xff]
        %v542 = vld [vmem:[#allocation6 + $0x248] sm:$0xff]
        %v543 = vld [vmem:[#allocation6 + $0x250] sm:$0xff]
        %v544 = vld [vmem:[#allocation6 + $0x258] sm:$0xff]
        %v545 = vld [vmem:[#allocation6 + $0x260] sm:$0xff]
        %v546 = vld [vmem:[#allocation6 + $0x268] sm:$0xff]
        %v547 = vld [vmem:[#allocation6 + $0x270] sm:$0xff]
        %v548 = vld [vmem:[#allocation6 + $0x278] sm:$0xff]
        %v549 = vld [vmem:[#allocation6 + $0x280] sm:$0xff]
        %v550 = vld [vmem:[#allocation6 + $0x288] sm:$0xff]
        %v551 = vld [vmem:[#allocation6 + $0x290] sm:$0xff]
        %v552 = vld [vmem:[#allocation6 + $0x298] sm:$0xff]
        %v553 = vld [vmem:[#allocation6 + $0x2a0] sm:$0xff]
        %v554 = vld [vmem:[#allocation6 + $0x2a8] sm:$0xff]
        %v555 = vld [vmem:[#allocation6 + $0x2b0] sm:$0xff]
        %v556 = vld [vmem:[#allocation6 + $0x2b8] sm:$0xff]
        %v557 = vld [vmem:[#allocation6 + $0x2c0] sm:$0xff]
        %v558 = vld [vmem:[#allocation6 + $0x2c8] sm:$0xff]
        %v559 = vld [vmem:[#allocation6 + $0x2d0] sm:$0xff]
        %v560 = vld [vmem:[#allocation6 + $0x2d8] sm:$0xff]
        %v561 = vld [vmem:[#allocation6 + $0x2e0] sm:$0xff]
        %v562 = vld [vmem:[#allocation6 + $0x2e8] sm:$0xff]
        %v563 = vld [vmem:[#allocation6 + $0x2f0] sm:$0xff]
        %v564 = vld [vmem:[#allocation6 + $0x2f8] sm:$0xff]
        %v565 = vld [vmem:[#allocation6 + $0x300] sm:$0xff]
        %v566 = vld [vmem:[#allocation6 + $0x308] sm:$0xff]
        %v567 = vld [vmem:[#allocation6 + $0x310] sm:$0xff]
        %v568 = vld [vmem:[#allocation6 + $0x318] sm:$0xff]
        %v569 = vld [vmem:[#allocation6 + $0x320] sm:$0xff]
        %v570 = vld [vmem:[#allocation6 + $0x328] sm:$0xff]
        %v571 = vld [vmem:[#allocation6 + $0x330] sm:$0xff]
        %v572 = vld [vmem:[#allocation6 + $0x338] sm:$0xff]
        %v573 = vld [vmem:[#allocation6 + $0x340] sm:$0xff]
        %v574 = vld [vmem:[#allocation6 + $0x348] sm:$0xff]
        %v575 = vld [vmem:[#allocation6 + $0x350] sm:$0xff]
        %v576 = vld [vmem:[#allocation6 + $0x358] sm:$0xff]
        %v577 = vld [vmem:[#allocation6 + $0x360] sm:$0xff]
        %v578 = vld [vmem:[#allocation6 + $0x368] sm:$0xff]
        %v579 = vld [vmem:[#allocation6 + $0x370] sm:$0xff]
        %v580 = vld [vmem:[#allocation6 + $0x378] sm:$0xff]
        %v581 = vld [vmem:[#allocation6 + $0x380] sm:$0xff]
        %v582 = vld [vmem:[#allocation6 + $0x388] sm:$0xff]
        %v583 = vld [vmem:[#allocation6 + $0x390] sm:$0xff]
        %v584 = vld [vmem:[#allocation6 + $0x398] sm:$0xff]
        %v585 = vld [vmem:[#allocation6 + $0x3a0] sm:$0xff]
        %v586 = vld [vmem:[#allocation6 + $0x3a8] sm:$0xff]
        %v587 = vld [vmem:[#allocation6 + $0x3b0] sm:$0xff]
        %v588 = vld [vmem:[#allocation6 + $0x3b8] sm:$0xff]
        %v589 = vld [vmem:[#allocation6 + $0x3c0] sm:$0xff]
        %v590 = vld [vmem:[#allocation6 + $0x3c8] sm:$0xff]
        %v591 = vld [vmem:[#allocation6 + $0x3d0] sm:$0xff]
        %v592 = vld [vmem:[#allocation6 + $0x3d8] sm:$0xff]
        %v593 = vld [vmem:[#allocation6 + $0x3e0] sm:$0xff]
        %v594 = vld [vmem:[#allocation6 + $0x3e8] sm:$0xff]
        %v595 = vld [vmem:[#allocation6 + $0x3f0] sm:$0xff]
        %v596 = vld [vmem:[#allocation6 + $0x3f8] sm:$0xff]
        %v597 = vld [vmem:[#allocation6 + $0x400] sm:$0xff]
        %v598 = vld [vmem:[#allocation6 + $0x408] sm:$0xff]
        %v599 = vld [vmem:[#allocation6 + $0x410] sm:$0xff]
        %v600 = vld [vmem:[#allocation6 + $0x418] sm:$0xff]
        %v601 = vld [vmem:[#allocation6 + $0x420] sm:$0xff]
        %v602 = vld [vmem:[#allocation6 + $0x428] sm:$0xff]
        %v603 = vld [vmem:[#allocation6 + $0x430] sm:$0xff]
        %v604 = vld [vmem:[#allocation6 + $0x438] sm:$0xff]
        %v605 = vld [vmem:[#allocation6 + $0x440] sm:$0xff]
        %v606 = vld [vmem:[#allocation6 + $0x448] sm:$0xff]
        %v607 = vld [vmem:[#allocation6 + $0x450] sm:$0xff]
        %v608 = vld [vmem:[#allocation6 + $0x458] sm:$0xff]
        %v609 = vld [vmem:[#allocation6 + $0x460] sm:$0xff]
        %v610 = vld [vmem:[#allocation6 + $0x468] sm:$0xff]
        %v611 = vld [vmem:[#allocation6 + $0x470] sm:$0xff]
        %v612 = vld [vmem:[#allocation6 + $0x478] sm:$0xff]
        %v613 = vld [vmem:[#allocation6 + $0x480] sm:$0xff]
        %v614 = vld [vmem:[#allocation6 + $0x488] sm:$0xff]
        %v615 = vld [vmem:[#allocation6 + $0x490] sm:$0xff]
        %v616 = vld [vmem:[#allocation6 + $0x498] sm:$0xff]
        %v617 = vld [vmem:[#allocation6 + $0x4a0] sm:$0xff]
        %v618 = vld [vmem:[#allocation6 + $0x4a8] sm:$0xff]
        %v619 = vld [vmem:[#allocation6 + $0x4b0] sm:$0xff]
        %v620 = vld [vmem:[#allocation6 + $0x4b8] sm:$0xff]
        %v621 = vld [vmem:[#allocation6 + $0x4c0] sm:$0xff]
        %v622 = vld [vmem:[#allocation6 + $0x4c8] sm:$0xff]
        %v623 = vld [vmem:[#allocation6 + $0x4d0] sm:$0xff]
        %v624 = vld [vmem:[#allocation6 + $0x4d8] sm:$0xff]
        %v625 = vld [vmem:[#allocation6 + $0x4e0] sm:$0xff]
        %v626 = vld [vmem:[#allocation6 + $0x4e8] sm:$0xff]
        %v627 = vld [vmem:[#allocation6 + $0x4f0] sm:$0xff]
        %v628 = vld [vmem:[#allocation6 + $0x4f8] sm:$0xff]
        %v629 = vld [vmem:[#allocation6 + $0x500] sm:$0xff]
        %v630 = vld [vmem:[#allocation6 + $0x508] sm:$0xff]
        %v631 = vld [vmem:[#allocation6 + $0x510] sm:$0xff]
        %v632 = vld [vmem:[#allocation6 + $0x518] sm:$0xff]
        %v633 = vld [vmem:[#allocation6 + $0x520] sm:$0xff]
        %v634 = vld [vmem:[#allocation6 + $0x528] sm:$0xff]
        %v635 = vld [vmem:[#allocation6 + $0x530] sm:$0xff]
        %v636 = vld [vmem:[#allocation6 + $0x538] sm:$0xff]
        %v637 = vld [vmem:[#allocation6 + $0x540] sm:$0xff]
        %v638 = vld [vmem:[#allocation6 + $0x548] sm:$0xff]
        %v639 = vld [vmem:[#allocation6 + $0x550] sm:$0xff]
        %v640 = vld [vmem:[#allocation6 + $0x558] sm:$0xff]
        %v641 = vld [vmem:[#allocation6 + $0x560] sm:$0xff]
        %v642 = vld [vmem:[#allocation6 + $0x568] sm:$0xff]
        %v643 = vld [vmem:[#allocation6 + $0x570] sm:$0xff]
        %v644 = vld [vmem:[#allocation6 + $0x578] sm:$0xff]
        %v645 = vld [vmem:[#allocation6 + $0x580] sm:$0xff]
        %v646 = vld [vmem:[#allocation6 + $0x588] sm:$0xff]
        %v647 = vld [vmem:[#allocation6 + $0x590] sm:$0xff]
        %v648 = vld [vmem:[#allocation6 + $0x598] sm:$0xff]
        %v649 = vld [vmem:[#allocation6 + $0x5a0] sm:$0xff]
        %v650 = vld [vmem:[#allocation6 + $0x5a8] sm:$0xff]
        %v651 = vld [vmem:[#allocation6 + $0x5b0] sm:$0xff]
        %v652 = vld [vmem:[#allocation6 + $0x5b8] sm:$0xff]
        %v653 = vld [vmem:[#allocation6 + $0x5c0] sm:$0xff]
        %v654 = vld [vmem:[#allocation6 + $0x5c8] sm:$0xff]
        %v655 = vld [vmem:[#allocation6 + $0x5d0] sm:$0xff]
        %v656 = vld [vmem:[#allocation6 + $0x5d8] sm:$0xff]
        %v657 = vld [vmem:[#allocation6 + $0x5e0] sm:$0xff]
        %v658 = vld [vmem:[#allocation6 + $0x5e8] sm:$0xff]
        %v659 = vld [vmem:[#allocation6 + $0x5f0] sm:$0xff]
        %v660 = vld [vmem:[#allocation6 + $0x5f8] sm:$0xff]
        %v661 = vld [vmem:[#allocation6 + $0x600] sm:$0xff]
        %v662 = vld [vmem:[#allocation6 + $0x608] sm:$0xff]
        %v663 = vld [vmem:[#allocation6 + $0x610] sm:$0xff]
        %v664 = vld [vmem:[#allocation6 + $0x618] sm:$0xff]
        %v665 = vld [vmem:[#allocation6 + $0x620] sm:$0xff]
        %v666 = vld [vmem:[#allocation6 + $0x628] sm:$0xff]
        %v667 = vld [vmem:[#allocation6 + $0x630] sm:$0xff]
        %v668 = vld [vmem:[#allocation6 + $0x638] sm:$0xff]
        %v669 = vld [vmem:[#allocation6 + $0x640] sm:$0xff]
        %v670 = vld [vmem:[#allocation6 + $0x648] sm:$0xff]
        %v671 = vld [vmem:[#allocation6 + $0x650] sm:$0xff]
        %v672 = vld [vmem:[#allocation6 + $0x658] sm:$0xff]
        %v673 = vld [vmem:[#allocation6 + $0x660] sm:$0xff]
        %v674 = vld [vmem:[#allocation6 + $0x668] sm:$0xff]
        %v675 = vld [vmem:[#allocation6 + $0x670] sm:$0xff]
        %v676 = vld [vmem:[#allocation6 + $0x678] sm:$0xff]
        %v677 = vld [vmem:[#allocation6 + $0x680] sm:$0xff]
        %v678 = vld [vmem:[#allocation6 + $0x688] sm:$0xff]
        %v679 = vld [vmem:[#allocation6 + $0x690] sm:$0xff]
        %v680 = vld [vmem:[#allocation6 + $0x698] sm:$0xff]
        %v681 = vld [vmem:[#allocation6 + $0x6a0] sm:$0xff]
        %v682 = vld [vmem:[#allocation6 + $0x6a8] sm:$0xff]
        %v683 = vld [vmem:[#allocation6 + $0x6b0] sm:$0xff]
        %v684 = vld [vmem:[#allocation6 + $0x6b8] sm:$0xff]
        %v685 = vld [vmem:[#allocation6 + $0x6c0] sm:$0xff]
        %v686 = vld [vmem:[#allocation6 + $0x6c8] sm:$0xff]
        %v687 = vld [vmem:[#allocation6 + $0x6d0] sm:$0xff]
        %v688 = vld [vmem:[#allocation6 + $0x6d8] sm:$0xff]
        %v689 = vld [vmem:[#allocation6 + $0x6e0] sm:$0xff]
        %v690 = vld [vmem:[#allocation6 + $0x6e8] sm:$0xff]
        %v691 = vld [vmem:[#allocation6 + $0x6f0] sm:$0xff]
        %v692 = vld [vmem:[#allocation6 + $0x6f8] sm:$0xff]
        %v693 = vld [vmem:[#allocation6 + $0x700] sm:$0xff]
        %v694 = vld [vmem:[#allocation6 + $0x708] sm:$0xff]
        %v695 = vld [vmem:[#allocation6 + $0x710] sm:$0xff]
        %v696 = vld [vmem:[#allocation6 + $0x718] sm:$0xff]
        %v697 = vld [vmem:[#allocation6 + $0x720] sm:$0xff]
        %v698 = vld [vmem:[#allocation6 + $0x728] sm:$0xff]
        %v699 = vld [vmem:[#allocation6 + $0x730] sm:$0xff]
        %v700 = vld [vmem:[#allocation6 + $0x738] sm:$0xff]
        %v701 = vld [vmem:[#allocation6 + $0x740] sm:$0xff]
        %v702 = vld [vmem:[#allocation6 + $0x748] sm:$0xff]
        %v703 = vld [vmem:[#allocation6 + $0x750] sm:$0xff]
        %v704 = vld [vmem:[#allocation6 + $0x758] sm:$0xff]
        %v705 = vld [vmem:[#allocation6 + $0x760] sm:$0xff]
        %v706 = vld [vmem:[#allocation6 + $0x768] sm:$0xff]
        %v707 = vld [vmem:[#allocation6 + $0x770] sm:$0xff]
        %v708 = vld [vmem:[#allocation6 + $0x778] sm:$0xff]
        %v709 = vld [vmem:[#allocation6 + $0x780] sm:$0xff]
        %v710 = vld [vmem:[#allocation6 + $0x788] sm:$0xff]
        %v711 = vld [vmem:[#allocation6 + $0x790] sm:$0xff]
        %v712 = vld [vmem:[#allocation6 + $0x798] sm:$0xff]
        %v713 = vld [vmem:[#allocation6 + $0x7a0] sm:$0xff]
        %v714 = vld [vmem:[#allocation6 + $0x7a8] sm:$0xff]
        %v715 = vld [vmem:[#allocation6 + $0x7b0] sm:$0xff]
        %v716 = vld [vmem:[#allocation6 + $0x7b8] sm:$0xff]
        %v717 = vld [vmem:[#allocation6 + $0x7c0] sm:$0xff]
        %v718 = vld [vmem:[#allocation6 + $0x7c8] sm:$0xff]
        %v719 = vld [vmem:[#allocation6 + $0x7d0] sm:$0xff]
        %v720 = vld [vmem:[#allocation6 + $0x7d8] sm:$0xff]
        %v721 = vld [vmem:[#allocation6 + $0x7e0] sm:$0xff]
        %v722 = vld [vmem:[#allocation6 + $0x7e8] sm:$0xff]
        %v723 = vld [vmem:[#allocation6 + $0x7f0] sm:$0xff]
        %v724 = vld [vmem:[#allocation6 + $0x7f8] sm:$0xff]
        %v725 = vld [vmem:[%s2] sm:$0xf]
        %v727 = vlaneseq
        %v728 = vshrl.u32 %v727, 7
        %v729 = vsub.s32 0, %v728
        %v730 = vrot.slane %v725, %v729
        %v731 = vlaneseq
        %v732 = vshrl.u32 %v731, 7
        %v733 = vsub.s32 1, %v732
        %v734 = vrot.slane %v725, %v733
        %v735 = vlaneseq
        %v736 = vshrl.u32 %v735, 7
        %v737 = vsub.s32 2, %v736
        %v738 = vrot.slane %v725, %v737
        %v739 = vlaneseq
        %v740 = vshrl.u32 %v739, 7
        %v741 = vsub.s32 3, %v740
        %v742 = vrot.slane %v725, %v741
        %v779 = vunpack.c.l.b16 %v437
        %v780 = vunpack.c.h.b16 %v437
        %v781 = vunpack.c.l.b16 %v438
        %v782 = vunpack.c.h.b16 %v438
        %v783 = vunpack.c.l.b16 %v439
        %v784 = vunpack.c.h.b16 %v439
        %v785 = vunpack.c.l.b16 %v440
        %v786 = vunpack.c.h.b16 %v440
        %v787 = vunpack.c.l.b16 %v441
        %v788 = vunpack.c.h.b16 %v441
        %v789 = vunpack.c.l.b16 %v442
        %v790 = vunpack.c.h.b16 %v442
        %v791 = vunpack.c.l.b16 %v443
        %v792 = vunpack.c.h.b16 %v443
        %v793 = vunpack.c.l.b16 %v444
        %v794 = vunpack.c.h.b16 %v444
        %v795 = vunpack.c.l.b16 %v445
        %v796 = vunpack.c.h.b16 %v445
        %v797 = vunpack.c.l.b16 %v446
        %v798 = vunpack.c.h.b16 %v446
        %v799 = vunpack.c.l.b16 %v447
        %v800 = vunpack.c.h.b16 %v447
        %v801 = vunpack.c.l.b16 %v448
        %v802 = vunpack.c.h.b16 %v448
        %v803 = vunpack.c.l.b16 %v449
        %v804 = vunpack.c.h.b16 %v449
        %v805 = vunpack.c.l.b16 %v450
        %v806 = vunpack.c.h.b16 %v450
        %v807 = vunpack.c.l.b16 %v451
        %v808 = vunpack.c.h.b16 %v451
        %v809 = vunpack.c.l.b16 %v452
        %v810 = vunpack.c.h.b16 %v452
        %v811 = vunpack.c.l.b16 %v453
        %v812 = vunpack.c.h.b16 %v453
        %v813 = vunpack.c.l.b16 %v454
        %v814 = vunpack.c.h.b16 %v454
        %v815 = vunpack.c.l.b16 %v455
        %v816 = vunpack.c.h.b16 %v455
        %v817 = vunpack.c.l.b16 %v456
        %v818 = vunpack.c.h.b16 %v456
        %v819 = vunpack.c.l.b16 %v457
        %v820 = vunpack.c.h.b16 %v457
        %v821 = vunpack.c.l.b16 %v458
        %v822 = vunpack.c.h.b16 %v458
        %v823 = vunpack.c.l.b16 %v459
        %v824 = vunpack.c.h.b16 %v459
        %v825 = vunpack.c.l.b16 %v460
        %v826 = vunpack.c.h.b16 %v460
        %v827 = vunpack.c.l.b16 %v461
        %v828 = vunpack.c.h.b16 %v461
        %v829 = vunpack.c.l.b16 %v462
        %v830 = vunpack.c.h.b16 %v462
        %v831 = vunpack.c.l.b16 %v463
        %v832 = vunpack.c.h.b16 %v463
        %v833 = vunpack.c.l.b16 %v464
        %v834 = vunpack.c.h.b16 %v464
        %v835 = vunpack.c.l.b16 %v465
        %v836 = vunpack.c.h.b16 %v465
        %v837 = vunpack.c.l.b16 %v466
        %v838 = vunpack.c.h.b16 %v466
        %v839 = vunpack.c.l.b16 %v467
        %v840 = vunpack.c.h.b16 %v467
        %v841 = vunpack.c.l.b16 %v468
        %v842 = vunpack.c.h.b16 %v468
        %v843 = vpack.c.b16 %v787, %v779
        %v844 = vpack.c.b16 %v788, %v780
        %v845 = vpack.c.b16 %v789, %v781
        %v846 = vpack.c.b16 %v790, %v782
        %v847 = vpack.c.b16 %v791, %v783
        %v848 = vpack.c.b16 %v792, %v784
        %v849 = vpack.c.b16 %v793, %v785
        %v850 = vpack.c.b16 %v794, %v786
        %v851 = vpack.c.b16 %v803, %v795
        %v852 = vpack.c.b16 %v804, %v796
        %v853 = vpack.c.b16 %v805, %v797
        %v854 = vpack.c.b16 %v806, %v798
        %v855 = vpack.c.b16 %v807, %v799
        %v856 = vpack.c.b16 %v808, %v800
        %v857 = vpack.c.b16 %v809, %v801
        %v858 = vpack.c.b16 %v810, %v802
        %v859 = vpack.c.b16 %v819, %v811
        %v860 = vpack.c.b16 %v820, %v812
        %v861 = vpack.c.b16 %v821, %v813
        %v862 = vpack.c.b16 %v822, %v814
        %v863 = vpack.c.b16 %v823, %v815
        %v864 = vpack.c.b16 %v824, %v816
        %v865 = vpack.c.b16 %v825, %v817
        %v866 = vpack.c.b16 %v826, %v818
        %v867 = vpack.c.b16 %v835, %v827
        %v868 = vpack.c.b16 %v836, %v828
        %v869 = vpack.c.b16 %v837, %v829
        %v870 = vpack.c.b16 %v838, %v830
        %v871 = vpack.c.b16 %v839, %v831
        %v872 = vpack.c.b16 %v840, %v832
        %v873 = vpack.c.b16 %v841, %v833
        %v874 = vpack.c.b16 %v842, %v834
        %v1163 = vunpack.c.l.b16 %v469
        %v1164 = vunpack.c.h.b16 %v469
        %v1165 = vunpack.c.l.b16 %v470
        %v1166 = vunpack.c.h.b16 %v470
        %v1167 = vunpack.c.l.b16 %v471
        %v1168 = vunpack.c.h.b16 %v471
        %v1169 = vunpack.c.l.b16 %v472
        %v1170 = vunpack.c.h.b16 %v472
        %v1171 = vunpack.c.l.b16 %v473
        %v1172 = vunpack.c.h.b16 %v473
        %v1173 = vunpack.c.l.b16 %v474
        %v1174 = vunpack.c.h.b16 %v474
        %v1175 = vunpack.c.l.b16 %v475
        %v1176 = vunpack.c.h.b16 %v475
        %v1177 = vunpack.c.l.b16 %v476
        %v1178 = vunpack.c.h.b16 %v476
        %v1179 = vunpack.c.l.b16 %v477
        %v1180 = vunpack.c.h.b16 %v477
        %v1181 = vunpack.c.l.b16 %v478
        %v1182 = vunpack.c.h.b16 %v478
        %v1183 = vunpack.c.l.b16 %v479
        %v1184 = vunpack.c.h.b16 %v479
        %v1185 = vunpack.c.l.b16 %v480
        %v1186 = vunpack.c.h.b16 %v480
        %v1187 = vunpack.c.l.b16 %v481
        %v1188 = vunpack.c.h.b16 %v481
        %v1189 = vunpack.c.l.b16 %v482
        %v1190 = vunpack.c.h.b16 %v482
        %v1191 = vunpack.c.l.b16 %v483
        %v1192 = vunpack.c.h.b16 %v483
        %v1193 = vunpack.c.l.b16 %v484
        %v1194 = vunpack.c.h.b16 %v484
        %v1195 = vunpack.c.l.b16 %v485
        %v1196 = vunpack.c.h.b16 %v485
        %v1197 = vunpack.c.l.b16 %v486
        %v1198 = vunpack.c.h.b16 %v486
        %v1199 = vunpack.c.l.b16 %v487
        %v1200 = vunpack.c.h.b16 %v487
        %v1201 = vunpack.c.l.b16 %v488
        %v1202 = vunpack.c.h.b16 %v488
        %v1203 = vunpack.c.l.b16 %v489
        %v1204 = vunpack.c.h.b16 %v489
        %v1205 = vunpack.c.l.b16 %v490
        %v1206 = vunpack.c.h.b16 %v490
        %v1207 = vunpack.c.l.b16 %v491
        %v1208 = vunpack.c.h.b16 %v491
        %v1209 = vunpack.c.l.b16 %v492
        %v1210 = vunpack.c.h.b16 %v492
        %v1211 = vunpack.c.l.b16 %v493
        %v1212 = vunpack.c.h.b16 %v493
        %v1213 = vunpack.c.l.b16 %v494
        %v1214 = vunpack.c.h.b16 %v494
        %v1215 = vunpack.c.l.b16 %v495
        %v1216 = vunpack.c.h.b16 %v495
        %v1217 = vunpack.c.l.b16 %v496
        %v1218 = vunpack.c.h.b16 %v496
        %v1219 = vunpack.c.l.b16 %v497
        %v1220 = vunpack.c.h.b16 %v497
        %v1221 = vunpack.c.l.b16 %v498
        %v1222 = vunpack.c.h.b16 %v498
        %v1223 = vunpack.c.l.b16 %v499
        %v1224 = vunpack.c.h.b16 %v499
        %v1225 = vunpack.c.l.b16 %v500
        %v1226 = vunpack.c.h.b16 %v500
        %v1227 = vunpack.c.l.b16 %v501
        %v1228 = vunpack.c.h.b16 %v501
        %v1229 = vunpack.c.l.b16 %v502
        %v1230 = vunpack.c.h.b16 %v502
        %v1231 = vunpack.c.l.b16 %v503
        %v1232 = vunpack.c.h.b16 %v503
        %v1233 = vunpack.c.l.b16 %v504
        %v1234 = vunpack.c.h.b16 %v504
        %v1235 = vunpack.c.l.b16 %v505
        %v1236 = vunpack.c.h.b16 %v505
        %v1237 = vunpack.c.l.b16 %v506
        %v1238 = vunpack.c.h.b16 %v506
        %v1239 = vunpack.c.l.b16 %v507
        %v1240 = vunpack.c.h.b16 %v507
        %v1241 = vunpack.c.l.b16 %v508
        %v1242 = vunpack.c.h.b16 %v508
        %v1243 = vunpack.c.l.b16 %v509
        %v1244 = vunpack.c.h.b16 %v509
        %v1245 = vunpack.c.l.b16 %v510
        %v1246 = vunpack.c.h.b16 %v510
        %v1247 = vunpack.c.l.b16 %v511
        %v1248 = vunpack.c.h.b16 %v511
        %v1249 = vunpack.c.l.b16 %v512
        %v1250 = vunpack.c.h.b16 %v512
        %v1251 = vunpack.c.l.b16 %v513
        %v1252 = vunpack.c.h.b16 %v513
        %v1253 = vunpack.c.l.b16 %v514
        %v1254 = vunpack.c.h.b16 %v514
        %v1255 = vunpack.c.l.b16 %v515
        %v1256 = vunpack.c.h.b16 %v515
        %v1257 = vunpack.c.l.b16 %v516
        %v1258 = vunpack.c.h.b16 %v516
        %v1259 = vunpack.c.l.b16 %v517
        %v1260 = vunpack.c.h.b16 %v517
        %v1261 = vunpack.c.l.b16 %v518
        %v1262 = vunpack.c.h.b16 %v518
        %v1263 = vunpack.c.l.b16 %v519
        %v1264 = vunpack.c.h.b16 %v519
        %v1265 = vunpack.c.l.b16 %v520
        %v1266 = vunpack.c.h.b16 %v520
        %v1267 = vunpack.c.l.b16 %v521
        %v1268 = vunpack.c.h.b16 %v521
        %v1269 = vunpack.c.l.b16 %v522
        %v1270 = vunpack.c.h.b16 %v522
        %v1271 = vunpack.c.l.b16 %v523
        %v1272 = vunpack.c.h.b16 %v523
        %v1273 = vunpack.c.l.b16 %v524
        %v1274 = vunpack.c.h.b16 %v524
        %v1275 = vunpack.c.l.b16 %v525
        %v1276 = vunpack.c.h.b16 %v525
        %v1277 = vunpack.c.l.b16 %v526
        %v1278 = vunpack.c.h.b16 %v526
        %v1279 = vunpack.c.l.b16 %v527
        %v1280 = vunpack.c.h.b16 %v527
        %v1281 = vunpack.c.l.b16 %v528
        %v1282 = vunpack.c.h.b16 %v528
        %v1283 = vunpack.c.l.b16 %v529
        %v1284 = vunpack.c.h.b16 %v529
        %v1285 = vunpack.c.l.b16 %v530
        %v1286 = vunpack.c.h.b16 %v530
        %v1287 = vunpack.c.l.b16 %v531
        %v1288 = vunpack.c.h.b16 %v531
        %v1289 = vunpack.c.l.b16 %v532
        %v1290 = vunpack.c.h.b16 %v532
        %v1291 = vunpack.c.l.b16 %v533
        %v1292 = vunpack.c.h.b16 %v533
        %v1293 = vunpack.c.l.b16 %v534
        %v1294 = vunpack.c.h.b16 %v534
        %v1295 = vunpack.c.l.b16 %v535
        %v1296 = vunpack.c.h.b16 %v535
        %v1297 = vunpack.c.l.b16 %v536
        %v1298 = vunpack.c.h.b16 %v536
        %v1299 = vunpack.c.l.b16 %v537
        %v1300 = vunpack.c.h.b16 %v537
        %v1301 = vunpack.c.l.b16 %v538
        %v1302 = vunpack.c.h.b16 %v538
        %v1303 = vunpack.c.l.b16 %v539
        %v1304 = vunpack.c.h.b16 %v539
        %v1305 = vunpack.c.l.b16 %v540
        %v1306 = vunpack.c.h.b16 %v540
        %v1307 = vunpack.c.l.b16 %v541
        %v1308 = vunpack.c.h.b16 %v541
        %v1309 = vunpack.c.l.b16 %v542
        %v1310 = vunpack.c.h.b16 %v542
        %v1311 = vunpack.c.l.b16 %v543
        %v1312 = vunpack.c.h.b16 %v543
        %v1313 = vunpack.c.l.b16 %v544
        %v1314 = vunpack.c.h.b16 %v544
        %v1315 = vunpack.c.l.b16 %v545
        %v1316 = vunpack.c.h.b16 %v545
        %v1317 = vunpack.c.l.b16 %v546
        %v1318 = vunpack.c.h.b16 %v546
        %v1319 = vunpack.c.l.b16 %v547
        %v1320 = vunpack.c.h.b16 %v547
        %v1321 = vunpack.c.l.b16 %v548
        %v1322 = vunpack.c.h.b16 %v548
        %v1323 = vunpack.c.l.b16 %v549
        %v1324 = vunpack.c.h.b16 %v549
        %v1325 = vunpack.c.l.b16 %v550
        %v1326 = vunpack.c.h.b16 %v550
        %v1327 = vunpack.c.l.b16 %v551
        %v1328 = vunpack.c.h.b16 %v551
        %v1329 = vunpack.c.l.b16 %v552
        %v1330 = vunpack.c.h.b16 %v552
        %v1331 = vunpack.c.l.b16 %v553
        %v1332 = vunpack.c.h.b16 %v553
        %v1333 = vunpack.c.l.b16 %v554
        %v1334 = vunpack.c.h.b16 %v554
        %v1335 = vunpack.c.l.b16 %v555
        %v1336 = vunpack.c.h.b16 %v555
        %v1337 = vunpack.c.l.b16 %v556
        %v1338 = vunpack.c.h.b16 %v556
        %v1339 = vunpack.c.l.b16 %v557
        %v1340 = vunpack.c.h.b16 %v557
        %v1341 = vunpack.c.l.b16 %v558
        %v1342 = vunpack.c.h.b16 %v558
        %v1343 = vunpack.c.l.b16 %v559
        %v1344 = vunpack.c.h.b16 %v559
        %v1345 = vunpack.c.l.b16 %v560
        %v1346 = vunpack.c.h.b16 %v560
        %v1347 = vunpack.c.l.b16 %v561
        %v1348 = vunpack.c.h.b16 %v561
        %v1349 = vunpack.c.l.b16 %v562
        %v1350 = vunpack.c.h.b16 %v562
        %v1351 = vunpack.c.l.b16 %v563
        %v1352 = vunpack.c.h.b16 %v563
        %v1353 = vunpack.c.l.b16 %v564
        %v1354 = vunpack.c.h.b16 %v564
        %v1355 = vunpack.c.l.b16 %v565
        %v1356 = vunpack.c.h.b16 %v565
        %v1357 = vunpack.c.l.b16 %v566
        %v1358 = vunpack.c.h.b16 %v566
        %v1359 = vunpack.c.l.b16 %v567
        %v1360 = vunpack.c.h.b16 %v567
        %v1361 = vunpack.c.l.b16 %v568
        %v1362 = vunpack.c.h.b16 %v568
        %v1363 = vunpack.c.l.b16 %v569
        %v1364 = vunpack.c.h.b16 %v569
        %v1365 = vunpack.c.l.b16 %v570
        %v1366 = vunpack.c.h.b16 %v570
        %v1367 = vunpack.c.l.b16 %v571
        %v1368 = vunpack.c.h.b16 %v571
        %v1369 = vunpack.c.l.b16 %v572
        %v1370 = vunpack.c.h.b16 %v572
        %v1371 = vunpack.c.l.b16 %v573
        %v1372 = vunpack.c.h.b16 %v573
        %v1373 = vunpack.c.l.b16 %v574
        %v1374 = vunpack.c.h.b16 %v574
        %v1375 = vunpack.c.l.b16 %v575
        %v1376 = vunpack.c.h.b16 %v575
        %v1377 = vunpack.c.l.b16 %v576
        %v1378 = vunpack.c.h.b16 %v576
        %v1379 = vunpack.c.l.b16 %v577
        %v1380 = vunpack.c.h.b16 %v577
        %v1381 = vunpack.c.l.b16 %v578
        %v1382 = vunpack.c.h.b16 %v578
        %v1383 = vunpack.c.l.b16 %v579
        %v1384 = vunpack.c.h.b16 %v579
        %v1385 = vunpack.c.l.b16 %v580
        %v1386 = vunpack.c.h.b16 %v580
        %v1387 = vunpack.c.l.b16 %v581
        %v1388 = vunpack.c.h.b16 %v581
        %v1389 = vunpack.c.l.b16 %v582
        %v1390 = vunpack.c.h.b16 %v582
        %v1391 = vunpack.c.l.b16 %v583
        %v1392 = vunpack.c.h.b16 %v583
        %v1393 = vunpack.c.l.b16 %v584
        %v1394 = vunpack.c.h.b16 %v584
        %v1395 = vunpack.c.l.b16 %v585
        %v1396 = vunpack.c.h.b16 %v585
        %v1397 = vunpack.c.l.b16 %v586
        %v1398 = vunpack.c.h.b16 %v586
        %v1399 = vunpack.c.l.b16 %v587
        %v1400 = vunpack.c.h.b16 %v587
        %v1401 = vunpack.c.l.b16 %v588
        %v1402 = vunpack.c.h.b16 %v588
        %v1403 = vunpack.c.l.b16 %v589
        %v1404 = vunpack.c.h.b16 %v589
        %v1405 = vunpack.c.l.b16 %v590
        %v1406 = vunpack.c.h.b16 %v590
        %v1407 = vunpack.c.l.b16 %v591
        %v1408 = vunpack.c.h.b16 %v591
        %v1409 = vunpack.c.l.b16 %v592
        %v1410 = vunpack.c.h.b16 %v592
        %v1411 = vunpack.c.l.b16 %v593
        %v1412 = vunpack.c.h.b16 %v593
        %v1413 = vunpack.c.l.b16 %v594
        %v1414 = vunpack.c.h.b16 %v594
        %v1415 = vunpack.c.l.b16 %v595
        %v1416 = vunpack.c.h.b16 %v595
        %v1417 = vunpack.c.l.b16 %v596
        %v1418 = vunpack.c.h.b16 %v596
        %v1419 = vunpack.c.l.b16 %v597
        %v1420 = vunpack.c.h.b16 %v597
        %v1421 = vunpack.c.l.b16 %v598
        %v1422 = vunpack.c.h.b16 %v598
        %v1423 = vunpack.c.l.b16 %v599
        %v1424 = vunpack.c.h.b16 %v599
        %v1425 = vunpack.c.l.b16 %v600
        %v1426 = vunpack.c.h.b16 %v600
        %v1427 = vunpack.c.l.b16 %v601
        %v1428 = vunpack.c.h.b16 %v601
        %v1429 = vunpack.c.l.b16 %v602
        %v1430 = vunpack.c.h.b16 %v602
        %v1431 = vunpack.c.l.b16 %v603
        %v1432 = vunpack.c.h.b16 %v603
        %v1433 = vunpack.c.l.b16 %v604
        %v1434 = vunpack.c.h.b16 %v604
        %v1435 = vunpack.c.l.b16 %v605
        %v1436 = vunpack.c.h.b16 %v605
        %v1437 = vunpack.c.l.b16 %v606
        %v1438 = vunpack.c.h.b16 %v606
        %v1439 = vunpack.c.l.b16 %v607
        %v1440 = vunpack.c.h.b16 %v607
        %v1441 = vunpack.c.l.b16 %v608
        %v1442 = vunpack.c.h.b16 %v608
        %v1443 = vunpack.c.l.b16 %v609
        %v1444 = vunpack.c.h.b16 %v609
        %v1445 = vunpack.c.l.b16 %v610
        %v1446 = vunpack.c.h.b16 %v610
        %v1447 = vunpack.c.l.b16 %v611
        %v1448 = vunpack.c.h.b16 %v611
        %v1449 = vunpack.c.l.b16 %v612
        %v1450 = vunpack.c.h.b16 %v612
        %v1451 = vunpack.c.l.b16 %v613
        %v1452 = vunpack.c.h.b16 %v613
        %v1453 = vunpack.c.l.b16 %v614
        %v1454 = vunpack.c.h.b16 %v614
        %v1455 = vunpack.c.l.b16 %v615
        %v1456 = vunpack.c.h.b16 %v615
        %v1457 = vunpack.c.l.b16 %v616
        %v1458 = vunpack.c.h.b16 %v616
        %v1459 = vunpack.c.l.b16 %v617
        %v1460 = vunpack.c.h.b16 %v617
        %v1461 = vunpack.c.l.b16 %v618
        %v1462 = vunpack.c.h.b16 %v618
        %v1463 = vunpack.c.l.b16 %v619
        %v1464 = vunpack.c.h.b16 %v619
        %v1465 = vunpack.c.l.b16 %v620
        %v1466 = vunpack.c.h.b16 %v620
        %v1467 = vunpack.c.l.b16 %v621
        %v1468 = vunpack.c.h.b16 %v621
        %v1469 = vunpack.c.l.b16 %v622
        %v1470 = vunpack.c.h.b16 %v622
        %v1471 = vunpack.c.l.b16 %v623
        %v1472 = vunpack.c.h.b16 %v623
        %v1473 = vunpack.c.l.b16 %v624
        %v1474 = vunpack.c.h.b16 %v624
        %v1475 = vunpack.c.l.b16 %v625
        %v1476 = vunpack.c.h.b16 %v625
        %v1477 = vunpack.c.l.b16 %v626
        %v1478 = vunpack.c.h.b16 %v626
        %v1479 = vunpack.c.l.b16 %v627
        %v1480 = vunpack.c.h.b16 %v627
        %v1481 = vunpack.c.l.b16 %v628
        %v1482 = vunpack.c.h.b16 %v628
        %v1483 = vunpack.c.l.b16 %v629
        %v1484 = vunpack.c.h.b16 %v629
        %v1485 = vunpack.c.l.b16 %v630
        %v1486 = vunpack.c.h.b16 %v630
        %v1487 = vunpack.c.l.b16 %v631
        %v1488 = vunpack.c.h.b16 %v631
        %v1489 = vunpack.c.l.b16 %v632
        %v1490 = vunpack.c.h.b16 %v632
        %v1491 = vunpack.c.l.b16 %v633
        %v1492 = vunpack.c.h.b16 %v633
        %v1493 = vunpack.c.l.b16 %v634
        %v1494 = vunpack.c.h.b16 %v634
        %v1495 = vunpack.c.l.b16 %v635
        %v1496 = vunpack.c.h.b16 %v635
        %v1497 = vunpack.c.l.b16 %v636
        %v1498 = vunpack.c.h.b16 %v636
        %v1499 = vunpack.c.l.b16 %v637
        %v1500 = vunpack.c.h.b16 %v637
        %v1501 = vunpack.c.l.b16 %v638
        %v1502 = vunpack.c.h.b16 %v638
        %v1503 = vunpack.c.l.b16 %v639
        %v1504 = vunpack.c.h.b16 %v639
        %v1505 = vunpack.c.l.b16 %v640
        %v1506 = vunpack.c.h.b16 %v640
        %v1507 = vunpack.c.l.b16 %v641
        %v1508 = vunpack.c.h.b16 %v641
        %v1509 = vunpack.c.l.b16 %v642
        %v1510 = vunpack.c.h.b16 %v642
        %v1511 = vunpack.c.l.b16 %v643
        %v1512 = vunpack.c.h.b16 %v643
        %v1513 = vunpack.c.l.b16 %v644
        %v1514 = vunpack.c.h.b16 %v644
        %v1515 = vunpack.c.l.b16 %v645
        %v1516 = vunpack.c.h.b16 %v645
        %v1517 = vunpack.c.l.b16 %v646
        %v1518 = vunpack.c.h.b16 %v646
        %v1519 = vunpack.c.l.b16 %v647
        %v1520 = vunpack.c.h.b16 %v647
        %v1521 = vunpack.c.l.b16 %v648
        %v1522 = vunpack.c.h.b16 %v648
        %v1523 = vunpack.c.l.b16 %v649
        %v1524 = vunpack.c.h.b16 %v649
        %v1525 = vunpack.c.l.b16 %v650
        %v1526 = vunpack.c.h.b16 %v650
        %v1527 = vunpack.c.l.b16 %v651
        %v1528 = vunpack.c.h.b16 %v651
        %v1529 = vunpack.c.l.b16 %v652
        %v1530 = vunpack.c.h.b16 %v652
        %v1531 = vunpack.c.l.b16 %v653
        %v1532 = vunpack.c.h.b16 %v653
        %v1533 = vunpack.c.l.b16 %v654
        %v1534 = vunpack.c.h.b16 %v654
        %v1535 = vunpack.c.l.b16 %v655
        %v1536 = vunpack.c.h.b16 %v655
        %v1537 = vunpack.c.l.b16 %v656
        %v1538 = vunpack.c.h.b16 %v656
        %v1539 = vunpack.c.l.b16 %v657
        %v1540 = vunpack.c.h.b16 %v657
        %v1541 = vunpack.c.l.b16 %v658
        %v1542 = vunpack.c.h.b16 %v658
        %v1543 = vunpack.c.l.b16 %v659
        %v1544 = vunpack.c.h.b16 %v659
        %v1545 = vunpack.c.l.b16 %v660
        %v1546 = vunpack.c.h.b16 %v660
        %v1547 = vunpack.c.l.b16 %v661
        %v1548 = vunpack.c.h.b16 %v661
        %v1549 = vunpack.c.l.b16 %v662
        %v1550 = vunpack.c.h.b16 %v662
        %v1551 = vunpack.c.l.b16 %v663
        %v1552 = vunpack.c.h.b16 %v663
        %v1553 = vunpack.c.l.b16 %v664
        %v1554 = vunpack.c.h.b16 %v664
        %v1555 = vunpack.c.l.b16 %v665
        %v1556 = vunpack.c.h.b16 %v665
        %v1557 = vunpack.c.l.b16 %v666
        %v1558 = vunpack.c.h.b16 %v666
        %v1559 = vunpack.c.l.b16 %v667
        %v1560 = vunpack.c.h.b16 %v667
        %v1561 = vunpack.c.l.b16 %v668
        %v1562 = vunpack.c.h.b16 %v668
        %v1563 = vunpack.c.l.b16 %v669
        %v1564 = vunpack.c.h.b16 %v669
        %v1565 = vunpack.c.l.b16 %v670
        %v1566 = vunpack.c.h.b16 %v670
        %v1567 = vunpack.c.l.b16 %v671
        %v1568 = vunpack.c.h.b16 %v671
        %v1569 = vunpack.c.l.b16 %v672
        %v1570 = vunpack.c.h.b16 %v672
        %v1571 = vunpack.c.l.b16 %v673
        %v1572 = vunpack.c.h.b16 %v673
        %v1573 = vunpack.c.l.b16 %v674
        %v1574 = vunpack.c.h.b16 %v674
        %v1575 = vunpack.c.l.b16 %v675
        %v1576 = vunpack.c.h.b16 %v675
        %v1577 = vunpack.c.l.b16 %v676
        %v1578 = vunpack.c.h.b16 %v676
        %v1579 = vunpack.c.l.b16 %v677
        %v1580 = vunpack.c.h.b16 %v677
        %v1581 = vunpack.c.l.b16 %v678
        %v1582 = vunpack.c.h.b16 %v678
        %v1583 = vunpack.c.l.b16 %v679
        %v1584 = vunpack.c.h.b16 %v679
        %v1585 = vunpack.c.l.b16 %v680
        %v1586 = vunpack.c.h.b16 %v680
        %v1587 = vunpack.c.l.b16 %v681
        %v1588 = vunpack.c.h.b16 %v681
        %v1589 = vunpack.c.l.b16 %v682
        %v1590 = vunpack.c.h.b16 %v682
        %v1591 = vunpack.c.l.b16 %v683
        %v1592 = vunpack.c.h.b16 %v683
        %v1593 = vunpack.c.l.b16 %v684
        %v1594 = vunpack.c.h.b16 %v684
        %v1595 = vunpack.c.l.b16 %v685
        %v1596 = vunpack.c.h.b16 %v685
        %v1597 = vunpack.c.l.b16 %v686
        %v1598 = vunpack.c.h.b16 %v686
        %v1599 = vunpack.c.l.b16 %v687
        %v1600 = vunpack.c.h.b16 %v687
        %v1601 = vunpack.c.l.b16 %v688
        %v1602 = vunpack.c.h.b16 %v688
        %v1603 = vunpack.c.l.b16 %v689
        %v1604 = vunpack.c.h.b16 %v689
        %v1605 = vunpack.c.l.b16 %v690
        %v1606 = vunpack.c.h.b16 %v690
        %v1607 = vunpack.c.l.b16 %v691
        %v1608 = vunpack.c.h.b16 %v691
        %v1609 = vunpack.c.l.b16 %v692
        %v1610 = vunpack.c.h.b16 %v692
        %v1611 = vunpack.c.l.b16 %v693
        %v1612 = vunpack.c.h.b16 %v693
        %v1613 = vunpack.c.l.b16 %v694
        %v1614 = vunpack.c.h.b16 %v694
        %v1615 = vunpack.c.l.b16 %v695
        %v1616 = vunpack.c.h.b16 %v695
        %v1617 = vunpack.c.l.b16 %v696
        %v1618 = vunpack.c.h.b16 %v696
        %v1619 = vunpack.c.l.b16 %v697
        %v1620 = vunpack.c.h.b16 %v697
        %v1621 = vunpack.c.l.b16 %v698
        %v1622 = vunpack.c.h.b16 %v698
        %v1623 = vunpack.c.l.b16 %v699
        %v1624 = vunpack.c.h.b16 %v699
        %v1625 = vunpack.c.l.b16 %v700
        %v1626 = vunpack.c.h.b16 %v700
        %v1627 = vunpack.c.l.b16 %v701
        %v1628 = vunpack.c.h.b16 %v701
        %v1629 = vunpack.c.l.b16 %v702
        %v1630 = vunpack.c.h.b16 %v702
        %v1631 = vunpack.c.l.b16 %v703
        %v1632 = vunpack.c.h.b16 %v703
        %v1633 = vunpack.c.l.b16 %v704
        %v1634 = vunpack.c.h.b16 %v704
        %v1635 = vunpack.c.l.b16 %v705
        %v1636 = vunpack.c.h.b16 %v705
        %v1637 = vunpack.c.l.b16 %v706
        %v1638 = vunpack.c.h.b16 %v706
        %v1639 = vunpack.c.l.b16 %v707
        %v1640 = vunpack.c.h.b16 %v707
        %v1641 = vunpack.c.l.b16 %v708
        %v1642 = vunpack.c.h.b16 %v708
        %v1643 = vunpack.c.l.b16 %v709
        %v1644 = vunpack.c.h.b16 %v709
        %v1645 = vunpack.c.l.b16 %v710
        %v1646 = vunpack.c.h.b16 %v710
        %v1647 = vunpack.c.l.b16 %v711
        %v1648 = vunpack.c.h.b16 %v711
        %v1649 = vunpack.c.l.b16 %v712
        %v1650 = vunpack.c.h.b16 %v712
        %v1651 = vunpack.c.l.b16 %v713
        %v1652 = vunpack.c.h.b16 %v713
        %v1653 = vunpack.c.l.b16 %v714
        %v1654 = vunpack.c.h.b16 %v714
        %v1655 = vunpack.c.l.b16 %v715
        %v1656 = vunpack.c.h.b16 %v715
        %v1657 = vunpack.c.l.b16 %v716
        %v1658 = vunpack.c.h.b16 %v716
        %v1659 = vunpack.c.l.b16 %v717
        %v1660 = vunpack.c.h.b16 %v717
        %v1661 = vunpack.c.l.b16 %v718
        %v1662 = vunpack.c.h.b16 %v718
        %v1663 = vunpack.c.l.b16 %v719
        %v1664 = vunpack.c.h.b16 %v719
        %v1665 = vunpack.c.l.b16 %v720
        %v1666 = vunpack.c.h.b16 %v720
        %v1667 = vunpack.c.l.b16 %v721
        %v1668 = vunpack.c.h.b16 %v721
        %v1669 = vunpack.c.l.b16 %v722
        %v1670 = vunpack.c.h.b16 %v722
        %v1671 = vunpack.c.l.b16 %v723
        %v1672 = vunpack.c.h.b16 %v723
        %v1673 = vunpack.c.l.b16 %v724
        %v1674 = vunpack.c.h.b16 %v724
        %v1675 = vpack.c.b16 %v1167, %v1163
        %v1676 = vpack.c.b16 %v1168, %v1164
        %v1677 = vpack.c.b16 %v1169, %v1165
        %v1678 = vpack.c.b16 %v1170, %v1166
        %v1679 = vpack.c.b16 %v1175, %v1171
        %v1680 = vpack.c.b16 %v1176, %v1172
        %v1681 = vpack.c.b16 %v1177, %v1173
        %v1682 = vpack.c.b16 %v1178, %v1174
        %v1683 = vpack.c.b16 %v1183, %v1179
        %v1684 = vpack.c.b16 %v1184, %v1180
        %v1685 = vpack.c.b16 %v1185, %v1181
        %v1686 = vpack.c.b16 %v1186, %v1182
        %v1687 = vpack.c.b16 %v1191, %v1187
        %v1688 = vpack.c.b16 %v1192, %v1188
        %v1689 = vpack.c.b16 %v1193, %v1189
        %v1690 = vpack.c.b16 %v1194, %v1190
        %v1691 = vpack.c.b16 %v1199, %v1195
        %v1692 = vpack.c.b16 %v1200, %v1196
        %v1693 = vpack.c.b16 %v1201, %v1197
        %v1694 = vpack.c.b16 %v1202, %v1198
        %v1695 = vpack.c.b16 %v1207, %v1203
        %v1696 = vpack.c.b16 %v1208, %v1204
        %v1697 = vpack.c.b16 %v1209, %v1205
        %v1698 = vpack.c.b16 %v1210, %v1206
        %v1699 = vpack.c.b16 %v1215, %v1211
        %v1700 = vpack.c.b16 %v1216, %v1212
        %v1701 = vpack.c.b16 %v1217, %v1213
        %v1702 = vpack.c.b16 %v1218, %v1214
        %v1703 = vpack.c.b16 %v1223, %v1219
        %v1704 = vpack.c.b16 %v1224, %v1220
        %v1705 = vpack.c.b16 %v1225, %v1221
        %v1706 = vpack.c.b16 %v1226, %v1222
        %v1707 = vpack.c.b16 %v1231, %v1227
        %v1708 = vpack.c.b16 %v1232, %v1228
        %v1709 = vpack.c.b16 %v1233, %v1229
        %v1710 = vpack.c.b16 %v1234, %v1230
        %v1711 = vpack.c.b16 %v1239, %v1235
        %v1712 = vpack.c.b16 %v1240, %v1236
        %v1713 = vpack.c.b16 %v1241, %v1237
        %v1714 = vpack.c.b16 %v1242, %v1238
        %v1715 = vpack.c.b16 %v1247, %v1243
        %v1716 = vpack.c.b16 %v1248, %v1244
        %v1717 = vpack.c.b16 %v1249, %v1245
        %v1718 = vpack.c.b16 %v1250, %v1246
        %v1719 = vpack.c.b16 %v1255, %v1251
        %v1720 = vpack.c.b16 %v1256, %v1252
        %v1721 = vpack.c.b16 %v1257, %v1253
        %v1722 = vpack.c.b16 %v1258, %v1254
        %v1723 = vpack.c.b16 %v1263, %v1259
        %v1724 = vpack.c.b16 %v1264, %v1260
        %v1725 = vpack.c.b16 %v1265, %v1261
        %v1726 = vpack.c.b16 %v1266, %v1262
        %v1727 = vpack.c.b16 %v1271, %v1267
        %v1728 = vpack.c.b16 %v1272, %v1268
        %v1729 = vpack.c.b16 %v1273, %v1269
        %v1730 = vpack.c.b16 %v1274, %v1270
        %v1731 = vpack.c.b16 %v1279, %v1275
        %v1732 = vpack.c.b16 %v1280, %v1276
        %v1733 = vpack.c.b16 %v1281, %v1277
        %v1734 = vpack.c.b16 %v1282, %v1278
        %v1735 = vpack.c.b16 %v1287, %v1283
        %v1736 = vpack.c.b16 %v1288, %v1284
        %v1737 = vpack.c.b16 %v1289, %v1285
        %v1738 = vpack.c.b16 %v1290, %v1286
        %v1739 = vpack.c.b16 %v1295, %v1291
        %v1740 = vpack.c.b16 %v1296, %v1292
        %v1741 = vpack.c.b16 %v1297, %v1293
        %v1742 = vpack.c.b16 %v1298, %v1294
        %v1743 = vpack.c.b16 %v1303, %v1299
        %v1744 = vpack.c.b16 %v1304, %v1300
        %v1745 = vpack.c.b16 %v1305, %v1301
        %v1746 = vpack.c.b16 %v1306, %v1302
        %v1747 = vpack.c.b16 %v1311, %v1307
        %v1748 = vpack.c.b16 %v1312, %v1308
        %v1749 = vpack.c.b16 %v1313, %v1309
        %v1750 = vpack.c.b16 %v1314, %v1310
        %v1751 = vpack.c.b16 %v1319, %v1315
        %v1752 = vpack.c.b16 %v1320, %v1316
        %v1753 = vpack.c.b16 %v1321, %v1317
        %v1754 = vpack.c.b16 %v1322, %v1318
        %v1755 = vpack.c.b16 %v1327, %v1323
        %v1756 = vpack.c.b16 %v1328, %v1324
        %v1757 = vpack.c.b16 %v1329, %v1325
        %v1758 = vpack.c.b16 %v1330, %v1326
        %v1759 = vpack.c.b16 %v1335, %v1331
        %v1760 = vpack.c.b16 %v1336, %v1332
        %v1761 = vpack.c.b16 %v1337, %v1333
        %v1762 = vpack.c.b16 %v1338, %v1334
        %v1763 = vpack.c.b16 %v1343, %v1339
        %v1764 = vpack.c.b16 %v1344, %v1340
        %v1765 = vpack.c.b16 %v1345, %v1341
        %v1766 = vpack.c.b16 %v1346, %v1342
        %v1767 = vpack.c.b16 %v1351, %v1347
        %v1768 = vpack.c.b16 %v1352, %v1348
        %v1769 = vpack.c.b16 %v1353, %v1349
        %v1770 = vpack.c.b16 %v1354, %v1350
        %v1771 = vpack.c.b16 %v1359, %v1355
        %v1772 = vpack.c.b16 %v1360, %v1356
        %v1773 = vpack.c.b16 %v1361, %v1357
        %v1774 = vpack.c.b16 %v1362, %v1358
        %v1775 = vpack.c.b16 %v1367, %v1363
        %v1776 = vpack.c.b16 %v1368, %v1364
        %v1777 = vpack.c.b16 %v1369, %v1365
        %v1778 = vpack.c.b16 %v1370, %v1366
        %v1779 = vpack.c.b16 %v1375, %v1371
        %v1780 = vpack.c.b16 %v1376, %v1372
        %v1781 = vpack.c.b16 %v1377, %v1373
        %v1782 = vpack.c.b16 %v1378, %v1374
        %v1783 = vpack.c.b16 %v1383, %v1379
        %v1784 = vpack.c.b16 %v1384, %v1380
        %v1785 = vpack.c.b16 %v1385, %v1381
        %v1786 = vpack.c.b16 %v1386, %v1382
        %v1787 = vpack.c.b16 %v1391, %v1387
        %v1788 = vpack.c.b16 %v1392, %v1388
        %v1789 = vpack.c.b16 %v1393, %v1389
        %v1790 = vpack.c.b16 %v1394, %v1390
        %v1791 = vpack.c.b16 %v1399, %v1395
        %v1792 = vpack.c.b16 %v1400, %v1396
        %v1793 = vpack.c.b16 %v1401, %v1397
        %v1794 = vpack.c.b16 %v1402, %v1398
        %v1795 = vpack.c.b16 %v1407, %v1403
        %v1796 = vpack.c.b16 %v1408, %v1404
        %v1797 = vpack.c.b16 %v1409, %v1405
        %v1798 = vpack.c.b16 %v1410, %v1406
        %v1799 = vpack.c.b16 %v1415, %v1411
        %v1800 = vpack.c.b16 %v1416, %v1412
        %v1801 = vpack.c.b16 %v1417, %v1413
        %v1802 = vpack.c.b16 %v1418, %v1414
        %v1803 = vpack.c.b16 %v1423, %v1419
        %v1804 = vpack.c.b16 %v1424, %v1420
        %v1805 = vpack.c.b16 %v1425, %v1421
        %v1806 = vpack.c.b16 %v1426, %v1422
        %v1807 = vpack.c.b16 %v1431, %v1427
        %v1808 = vpack.c.b16 %v1432, %v1428
        %v1809 = vpack.c.b16 %v1433, %v1429
        %v1810 = vpack.c.b16 %v1434, %v1430
        %v1811 = vpack.c.b16 %v1439, %v1435
        %v1812 = vpack.c.b16 %v1440, %v1436
        %v1813 = vpack.c.b16 %v1441, %v1437
        %v1814 = vpack.c.b16 %v1442, %v1438
        %v1815 = vpack.c.b16 %v1447, %v1443
        %v1816 = vpack.c.b16 %v1448, %v1444
        %v1817 = vpack.c.b16 %v1449, %v1445
        %v1818 = vpack.c.b16 %v1450, %v1446
        %v1819 = vpack.c.b16 %v1455, %v1451
        %v1820 = vpack.c.b16 %v1456, %v1452
        %v1821 = vpack.c.b16 %v1457, %v1453
        %v1822 = vpack.c.b16 %v1458, %v1454
        %v1823 = vpack.c.b16 %v1463, %v1459
        %v1824 = vpack.c.b16 %v1464, %v1460
        %v1825 = vpack.c.b16 %v1465, %v1461
        %v1826 = vpack.c.b16 %v1466, %v1462
        %v1827 = vpack.c.b16 %v1471, %v1467
        %v1828 = vpack.c.b16 %v1472, %v1468
        %v1829 = vpack.c.b16 %v1473, %v1469
        %v1830 = vpack.c.b16 %v1474, %v1470
        %v1831 = vpack.c.b16 %v1479, %v1475
        %v1832 = vpack.c.b16 %v1480, %v1476
        %v1833 = vpack.c.b16 %v1481, %v1477
        %v1834 = vpack.c.b16 %v1482, %v1478
        %v1835 = vpack.c.b16 %v1487, %v1483
        %v1836 = vpack.c.b16 %v1488, %v1484
        %v1837 = vpack.c.b16 %v1489, %v1485
        %v1838 = vpack.c.b16 %v1490, %v1486
        %v1839 = vpack.c.b16 %v1495, %v1491
        %v1840 = vpack.c.b16 %v1496, %v1492
        %v1841 = vpack.c.b16 %v1497, %v1493
        %v1842 = vpack.c.b16 %v1498, %v1494
        %v1843 = vpack.c.b16 %v1503, %v1499
        %v1844 = vpack.c.b16 %v1504, %v1500
        %v1845 = vpack.c.b16 %v1505, %v1501
        %v1846 = vpack.c.b16 %v1506, %v1502
        %v1847 = vpack.c.b16 %v1511, %v1507
        %v1848 = vpack.c.b16 %v1512, %v1508
        %v1849 = vpack.c.b16 %v1513, %v1509
        %v1850 = vpack.c.b16 %v1514, %v1510
        %v1851 = vpack.c.b16 %v1519, %v1515
        %v1852 = vpack.c.b16 %v1520, %v1516
        %v1853 = vpack.c.b16 %v1521, %v1517
        %v1854 = vpack.c.b16 %v1522, %v1518
        %v1855 = vpack.c.b16 %v1527, %v1523
        %v1856 = vpack.c.b16 %v1528, %v1524
        %v1857 = vpack.c.b16 %v1529, %v1525
        %v1858 = vpack.c.b16 %v1530, %v1526
        %v1859 = vpack.c.b16 %v1535, %v1531
        %v1860 = vpack.c.b16 %v1536, %v1532
        %v1861 = vpack.c.b16 %v1537, %v1533
        %v1862 = vpack.c.b16 %v1538, %v1534
        %v1863 = vpack.c.b16 %v1543, %v1539
        %v1864 = vpack.c.b16 %v1544, %v1540
        %v1865 = vpack.c.b16 %v1545, %v1541
        %v1866 = vpack.c.b16 %v1546, %v1542
        %v1867 = vpack.c.b16 %v1551, %v1547
        %v1868 = vpack.c.b16 %v1552, %v1548
        %v1869 = vpack.c.b16 %v1553, %v1549
        %v1870 = vpack.c.b16 %v1554, %v1550
        %v1871 = vpack.c.b16 %v1559, %v1555
        %v1872 = vpack.c.b16 %v1560, %v1556
        %v1873 = vpack.c.b16 %v1561, %v1557
        %v1874 = vpack.c.b16 %v1562, %v1558
        %v1875 = vpack.c.b16 %v1567, %v1563
        %v1876 = vpack.c.b16 %v1568, %v1564
        %v1877 = vpack.c.b16 %v1569, %v1565
        %v1878 = vpack.c.b16 %v1570, %v1566
        %v1879 = vpack.c.b16 %v1575, %v1571
        %v1880 = vpack.c.b16 %v1576, %v1572
        %v1881 = vpack.c.b16 %v1577, %v1573
        %v1882 = vpack.c.b16 %v1578, %v1574
        %v1883 = vpack.c.b16 %v1583, %v1579
        %v1884 = vpack.c.b16 %v1584, %v1580
        %v1885 = vpack.c.b16 %v1585, %v1581
        %v1886 = vpack.c.b16 %v1586, %v1582
        %v1887 = vpack.c.b16 %v1591, %v1587
        %v1888 = vpack.c.b16 %v1592, %v1588
        %v1889 = vpack.c.b16 %v1593, %v1589
        %v1890 = vpack.c.b16 %v1594, %v1590
        %v1891 = vpack.c.b16 %v1599, %v1595
        %v1892 = vpack.c.b16 %v1600, %v1596
        %v1893 = vpack.c.b16 %v1601, %v1597
        %v1894 = vpack.c.b16 %v1602, %v1598
        %v1895 = vpack.c.b16 %v1607, %v1603
        %v1896 = vpack.c.b16 %v1608, %v1604
        %v1897 = vpack.c.b16 %v1609, %v1605
        %v1898 = vpack.c.b16 %v1610, %v1606
        %v1899 = vpack.c.b16 %v1615, %v1611
        %v1900 = vpack.c.b16 %v1616, %v1612
        %v1901 = vpack.c.b16 %v1617, %v1613
        %v1902 = vpack.c.b16 %v1618, %v1614
        %v1903 = vpack.c.b16 %v1623, %v1619
        %v1904 = vpack.c.b16 %v1624, %v1620
        %v1905 = vpack.c.b16 %v1625, %v1621
        %v1906 = vpack.c.b16 %v1626, %v1622
        %v1907 = vpack.c.b16 %v1631, %v1627
        %v1908 = vpack.c.b16 %v1632, %v1628
        %v1909 = vpack.c.b16 %v1633, %v1629
        %v1910 = vpack.c.b16 %v1634, %v1630
        %v1911 = vpack.c.b16 %v1639, %v1635
        %v1912 = vpack.c.b16 %v1640, %v1636
        %v1913 = vpack.c.b16 %v1641, %v1637
        %v1914 = vpack.c.b16 %v1642, %v1638
        %v1915 = vpack.c.b16 %v1647, %v1643
        %v1916 = vpack.c.b16 %v1648, %v1644
        %v1917 = vpack.c.b16 %v1649, %v1645
        %v1918 = vpack.c.b16 %v1650, %v1646
        %v1919 = vpack.c.b16 %v1655, %v1651
        %v1920 = vpack.c.b16 %v1656, %v1652
        %v1921 = vpack.c.b16 %v1657, %v1653
        %v1922 = vpack.c.b16 %v1658, %v1654
        %v1923 = vpack.c.b16 %v1663, %v1659
        %v1924 = vpack.c.b16 %v1664, %v1660
        %v1925 = vpack.c.b16 %v1665, %v1661
        %v1926 = vpack.c.b16 %v1666, %v1662
        %v1927 = vpack.c.b16 %v1671, %v1667
        %v1928 = vpack.c.b16 %v1672, %v1668
        %v1929 = vpack.c.b16 %v1673, %v1669
        %v1930 = vpack.c.b16 %v1674, %v1670
        %2187 = vmatprep.subr.bf16.mxu0 %v1704
        %2188 = vmatpush1.bf16.msra.mxu0 %v1703
        %2189 = vmatprep.subr.bf16.mxu0 %v1700
        %2190 = vmatpush1.bf16.msra.mxu0 %v1699
        %2191 = vmatprep.subr.bf16.mxu0 %v1696
        %2192 = vmatpush1.bf16.msra.mxu0 %v1695
        %2193 = vmatprep.subr.bf16.mxu0 %v1692
        %2194 = vmatpush1.bf16.msra.mxu0 %v1691
        %2195 = vmatprep.subr.bf16.mxu0 %v1688
        %2196 = vmatpush1.bf16.msra.mxu0 %v1687
        %2197 = vmatprep.subr.bf16.mxu0 %v1684
        %2198 = vmatpush1.bf16.msra.mxu0 %v1683
        %2199 = vmatprep.subr.bf16.mxu0 %v1680
        %2200 = vmatpush1.bf16.msra.mxu0 %v1679
        %2201 = vmatprep.subr.bf16.mxu0 %v1676
        %2202 = vmatpush1.bf16.msra.mxu0 %v1675
        %2203 = vmatprep.subr.bf16.mxu0 %v1736
        %2204 = vmatpush2.bf16.msra.mxu0 %v1735
        %2205 = vmatprep.subr.bf16.mxu0 %v1732
        %2206 = vmatpush2.bf16.msra.mxu0 %v1731
        %2207 = vmatprep.subr.bf16.mxu0 %v1728
        %2208 = vmatpush2.bf16.msra.mxu0 %v1727
        %2209 = vmatprep.subr.bf16.mxu0 %v1724
        %2210 = vmatpush2.bf16.msra.mxu0 %v1723
        %2211 = vmatprep.subr.bf16.mxu0 %v1720
        %2212 = vmatpush2.bf16.msra.mxu0 %v1719
        %2213 = vmatprep.subr.bf16.mxu0 %v1716
        %2214 = vmatpush2.bf16.msra.mxu0 %v1715
        %2215 = vmatprep.subr.bf16.mxu0 %v1712
        %2216 = vmatpush2.bf16.msra.mxu0 %v1711
        %2217 = vmatprep.subr.bf16.mxu0 %v1708
        %2218 = vmatpush2.bf16.msra.mxu0 %v1707
        %2219 = vmatprep.mubr.bf16.mxu0 %v844
        %2220 = vmatmul.mubr.bf16.gmra.mxu0 %v843
        %v2221 = vpop.f32.mrf.mxu0
        %v2222 = vadd.f32 %v730, %v2221
        %v2223 = vpop.f32.mrf.mxu0
        %v2224 = vadd.f32 %v734, %v2223
        %v2225 = vpop.f32.mrf.mxu0
        %v2226 = vadd.f32 %v730, %v2225
        %v2227 = vpop.f32.mrf.mxu0
        %v2228 = vadd.f32 %v734, %v2227
        %2229 = vmatprep.mubr.bf16.mxu0 %v852
        %2230 = vmatmul.mubr.bf16.gmra.mxu0 %v851
        %v2231 = vpop.f32.mrf.mxu0
        %v2232 = vadd.f32 %v730, %v2231
        %v2233 = vpop.f32.mrf.mxu0
        %v2234 = vadd.f32 %v734, %v2233
        %v2235 = vpop.f32.mrf.mxu0
        %v2236 = vadd.f32 %v730, %v2235
        %v2237 = vpop.f32.mrf.mxu0
        %v2238 = vadd.f32 %v734, %v2237
        %2239 = vmatprep.mubr.bf16.mxu0 %v860
        %2240 = vmatmul.mubr.bf16.gmra.mxu0 %v859
        %v2241 = vpop.f32.mrf.mxu0
        %v2242 = vadd.f32 %v730, %v2241
        %v2243 = vpop.f32.mrf.mxu0
        %v2244 = vadd.f32 %v734, %v2243
        %v2245 = vpop.f32.mrf.mxu0
        %v2246 = vadd.f32 %v730, %v2245
        %v2247 = vpop.f32.mrf.mxu0
        %v2248 = vadd.f32 %v734, %v2247
        %2249 = vmatprep.mubr.bf16.mxu0 %v868
        %2250 = vmatmul.mubr.bf16.gmra.mxu0 %v867
        %v2251 = vpop.f32.mrf.mxu0
        %v2252 = vadd.f32 %v730, %v2251
        %v2253 = vpop.f32.mrf.mxu0
        %v2254 = vadd.f32 %v734, %v2253
        %v2255 = vpop.f32.mrf.mxu0
        %v2256 = vadd.f32 %v730, %v2255
        %v2257 = vpop.f32.mrf.mxu0
        %v2258 = vadd.f32 %v734, %v2257
        %2259 = vdwg.mxu0
        %2260 = vmatprep.subr.bf16.mxu0 %v1768
        %2261 = vmatpush1.bf16.msra.mxu0 %v1767
        %2262 = vmatprep.subr.bf16.mxu0 %v1764
        %2263 = vmatpush1.bf16.msra.mxu0 %v1763
        %2264 = vmatprep.subr.bf16.mxu0 %v1760
        %2265 = vmatpush1.bf16.msra.mxu0 %v1759
        %2266 = vmatprep.subr.bf16.mxu0 %v1756
        %2267 = vmatpush1.bf16.msra.mxu0 %v1755
        %2268 = vmatprep.subr.bf16.mxu0 %v1752
        %2269 = vmatpush1.bf16.msra.mxu0 %v1751
        %2270 = vmatprep.subr.bf16.mxu0 %v1748
        %2271 = vmatpush1.bf16.msra.mxu0 %v1747
        %2272 = vmatprep.subr.bf16.mxu0 %v1744
        %2273 = vmatpush1.bf16.msra.mxu0 %v1743
        %2274 = vmatprep.subr.bf16.mxu0 %v1740
        %2275 = vmatpush1.bf16.msra.mxu0 %v1739
        %2276 = vmatprep.subr.bf16.mxu0 %v1800
        %2277 = vmatpush2.bf16.msra.mxu0 %v1799
        %2278 = vmatprep.subr.bf16.mxu0 %v1796
        %2279 = vmatpush2.bf16.msra.mxu0 %v1795
        %2280 = vmatprep.subr.bf16.mxu0 %v1792
        %2281 = vmatpush2.bf16.msra.mxu0 %v1791
        %2282 = vmatprep.subr.bf16.mxu0 %v1788
        %2283 = vmatpush2.bf16.msra.mxu0 %v1787
        %2284 = vmatprep.subr.bf16.mxu0 %v1784
        %2285 = vmatpush2.bf16.msra.mxu0 %v1783
        %2286 = vmatprep.subr.bf16.mxu0 %v1780
        %2287 = vmatpush2.bf16.msra.mxu0 %v1779
        %2288 = vmatprep.subr.bf16.mxu0 %v1776
        %2289 = vmatpush2.bf16.msra.mxu0 %v1775
        %2290 = vmatprep.subr.bf16.mxu0 %v1772
        %2291 = vmatpush2.bf16.msra.mxu0 %v1771
        %2292 = vmatprep.mubr.bf16.mxu0 %v846
        %2293 = vmatmul.mubr.bf16.gmra.mxu0 %v845
        %v2294 = vpop.f32.mrf.mxu0
        %v2295 = vadd.f32 %v2222, %v2294
        %v2296 = vpop.f32.mrf.mxu0
        %v2297 = vadd.f32 %v2224, %v2296
        %v2298 = vpop.f32.mrf.mxu0
        %v2299 = vadd.f32 %v2226, %v2298
        %v2300 = vpop.f32.mrf.mxu0
        %v2301 = vadd.f32 %v2228, %v2300
        %2302 = vmatprep.mubr.bf16.mxu0 %v854
        %2303 = vmatmul.mubr.bf16.gmra.mxu0 %v853
        %v2304 = vpop.f32.mrf.mxu0
        %v2305 = vadd.f32 %v2232, %v2304
        %v2306 = vpop.f32.mrf.mxu0
        %v2307 = vadd.f32 %v2234, %v2306
        %v2308 = vpop.f32.mrf.mxu0
        %v2309 = vadd.f32 %v2236, %v2308
        %v2310 = vpop.f32.mrf.mxu0
        %v2311 = vadd.f32 %v2238, %v2310
        %2312 = vmatprep.mubr.bf16.mxu0 %v862
        %2313 = vmatmul.mubr.bf16.gmra.mxu0 %v861
        %v2314 = vpop.f32.mrf.mxu0
        %v2315 = vadd.f32 %v2242, %v2314
        %v2316 = vpop.f32.mrf.mxu0
        %v2317 = vadd.f32 %v2244, %v2316
        %v2318 = vpop.f32.mrf.mxu0
        %v2319 = vadd.f32 %v2246, %v2318
        %v2320 = vpop.f32.mrf.mxu0
        %v2321 = vadd.f32 %v2248, %v2320
        %2322 = vmatprep.mubr.bf16.mxu0 %v870
        %2323 = vmatmul.mubr.bf16.gmra.mxu0 %v869
        %v2324 = vpop.f32.mrf.mxu0
        %v2325 = vadd.f32 %v2252, %v2324
        %v2326 = vpop.f32.mrf.mxu0
        %v2327 = vadd.f32 %v2254, %v2326
        %v2328 = vpop.f32.mrf.mxu0
        %v2329 = vadd.f32 %v2256, %v2328
        %v2330 = vpop.f32.mrf.mxu0
        %v2331 = vadd.f32 %v2258, %v2330
        %2332 = vdwg.mxu0
        %2333 = vmatprep.subr.bf16.mxu0 %v1832
        %2334 = vmatpush1.bf16.msra.mxu0 %v1831
        %2335 = vmatprep.subr.bf16.mxu0 %v1828
        %2336 = vmatpush1.bf16.msra.mxu0 %v1827
        %2337 = vmatprep.subr.bf16.mxu0 %v1824
        %2338 = vmatpush1.bf16.msra.mxu0 %v1823
        %2339 = vmatprep.subr.bf16.mxu0 %v1820
        %2340 = vmatpush1.bf16.msra.mxu0 %v1819
        %2341 = vmatprep.subr.bf16.mxu0 %v1816
        %2342 = vmatpush1.bf16.msra.mxu0 %v1815
        %2343 = vmatprep.subr.bf16.mxu0 %v1812
        %2344 = vmatpush1.bf16.msra.mxu0 %v1811
        %2345 = vmatprep.subr.bf16.mxu0 %v1808
        %2346 = vmatpush1.bf16.msra.mxu0 %v1807
        %2347 = vmatprep.subr.bf16.mxu0 %v1804
        %2348 = vmatpush1.bf16.msra.mxu0 %v1803
        %2349 = vmatprep.subr.bf16.mxu0 %v1864
        %2350 = vmatpush2.bf16.msra.mxu0 %v1863
        %2351 = vmatprep.subr.bf16.mxu0 %v1860
        %2352 = vmatpush2.bf16.msra.mxu0 %v1859
        %2353 = vmatprep.subr.bf16.mxu0 %v1856
        %2354 = vmatpush2.bf16.msra.mxu0 %v1855
        %2355 = vmatprep.subr.bf16.mxu0 %v1852
        %2356 = vmatpush2.bf16.msra.mxu0 %v1851
        %2357 = vmatprep.subr.bf16.mxu0 %v1848
        %2358 = vmatpush2.bf16.msra.mxu0 %v1847
        %2359 = vmatprep.subr.bf16.mxu0 %v1844
        %2360 = vmatpush2.bf16.msra.mxu0 %v1843
        %2361 = vmatprep.subr.bf16.mxu0 %v1840
        %2362 = vmatpush2.bf16.msra.mxu0 %v1839
        %2363 = vmatprep.subr.bf16.mxu0 %v1836
        %2364 = vmatpush2.bf16.msra.mxu0 %v1835
        %2365 = vmatprep.mubr.bf16.mxu0 %v848
        %2366 = vmatmul.mubr.bf16.gmra.mxu0 %v847
        %v2367 = vpop.f32.mrf.mxu0
        %v2368 = vadd.f32 %v2295, %v2367
        %v2369 = vpop.f32.mrf.mxu0
        %v2370 = vadd.f32 %v2297, %v2369
        %v2371 = vpop.f32.mrf.mxu0
        %v2372 = vadd.f32 %v2299, %v2371
        %v2373 = vpop.f32.mrf.mxu0
        %v2374 = vadd.f32 %v2301, %v2373
        %2375 = vmatprep.mubr.bf16.mxu0 %v856
        %2376 = vmatmul.mubr.bf16.gmra.mxu0 %v855
        %v2377 = vpop.f32.mrf.mxu0
        %v2378 = vadd.f32 %v2305, %v2377
        %v2379 = vpop.f32.mrf.mxu0
        %v2380 = vadd.f32 %v2307, %v2379
        %v2381 = vpop.f32.mrf.mxu0
        %v2382 = vadd.f32 %v2309, %v2381
        %v2383 = vpop.f32.mrf.mxu0
        %v2384 = vadd.f32 %v2311, %v2383
        %2385 = vmatprep.mubr.bf16.mxu0 %v864
        %2386 = vmatmul.mubr.bf16.gmra.mxu0 %v863
        %v2387 = vpop.f32.mrf.mxu0
        %v2388 = vadd.f32 %v2315, %v2387
        %v2389 = vpop.f32.mrf.mxu0
        %v2390 = vadd.f32 %v2317, %v2389
        %v2391 = vpop.f32.mrf.mxu0
        %v2392 = vadd.f32 %v2319, %v2391
        %v2393 = vpop.f32.mrf.mxu0
        %v2394 = vadd.f32 %v2321, %v2393
        %2395 = vmatprep.mubr.bf16.mxu0 %v872
        %2396 = vmatmul.mubr.bf16.gmra.mxu0 %v871
        %v2397 = vpop.f32.mrf.mxu0
        %v2398 = vadd.f32 %v2325, %v2397
        %v2399 = vpop.f32.mrf.mxu0
        %v2400 = vadd.f32 %v2327, %v2399
        %v2401 = vpop.f32.mrf.mxu0
        %v2402 = vadd.f32 %v2329, %v2401
        %v2403 = vpop.f32.mrf.mxu0
        %v2404 = vadd.f32 %v2331, %v2403
        %2405 = vdwg.mxu0
        %2406 = vmatprep.subr.bf16.mxu0 %v1896
        %2407 = vmatpush1.bf16.msra.mxu0 %v1895
        %2408 = vmatprep.subr.bf16.mxu0 %v1892
        %2409 = vmatpush1.bf16.msra.mxu0 %v1891
        %2410 = vmatprep.subr.bf16.mxu0 %v1888
        %2411 = vmatpush1.bf16.msra.mxu0 %v1887
        %2412 = vmatprep.subr.bf16.mxu0 %v1884
        %2413 = vmatpush1.bf16.msra.mxu0 %v1883
        %2414 = vmatprep.subr.bf16.mxu0 %v1880
        %2415 = vmatpush1.bf16.msra.mxu0 %v1879
        %2416 = vmatprep.subr.bf16.mxu0 %v1876
        %2417 = vmatpush1.bf16.msra.mxu0 %v1875
        %2418 = vmatprep.subr.bf16.mxu0 %v1872
        %2419 = vmatpush1.bf16.msra.mxu0 %v1871
        %2420 = vmatprep.subr.bf16.mxu0 %v1868
        %2421 = vmatpush1.bf16.msra.mxu0 %v1867
        %2422 = vmatprep.subr.bf16.mxu0 %v1928
        %2423 = vmatpush2.bf16.msra.mxu0 %v1927
        %2424 = vmatprep.subr.bf16.mxu0 %v1924
        %2425 = vmatpush2.bf16.msra.mxu0 %v1923
        %2426 = vmatprep.subr.bf16.mxu0 %v1920
        %2427 = vmatpush2.bf16.msra.mxu0 %v1919
        %2428 = vmatprep.subr.bf16.mxu0 %v1916
        %2429 = vmatpush2.bf16.msra.mxu0 %v1915
        %2430 = vmatprep.subr.bf16.mxu0 %v1912
        %2431 = vmatpush2.bf16.msra.mxu0 %v1911
        %2432 = vmatprep.subr.bf16.mxu0 %v1908
        %2433 = vmatpush2.bf16.msra.mxu0 %v1907
        %2434 = vmatprep.subr.bf16.mxu0 %v1904
        %2435 = vmatpush2.bf16.msra.mxu0 %v1903
        %2436 = vmatprep.subr.bf16.mxu0 %v1900
        %2437 = vmatpush2.bf16.msra.mxu0 %v1899
        %2438 = vmatprep.mubr.bf16.mxu0 %v850
        %2439 = vmatmul.mubr.bf16.gmra.mxu0 %v849
        %v2440 = vpop.f32.mrf.mxu0
        %v2441 = vadd.f32 %v2368, %v2440
        %v2442 = vpop.f32.mrf.mxu0
        %v2443 = vadd.f32 %v2370, %v2442
        %v2444 = vpop.f32.mrf.mxu0
        %v2445 = vadd.f32 %v2372, %v2444
        %v2446 = vpop.f32.mrf.mxu0
        %v2447 = vadd.f32 %v2374, %v2446
        %2448 = vmatprep.mubr.bf16.mxu0 %v858
        %2449 = vmatmul.mubr.bf16.gmra.mxu0 %v857
        %v2450 = vpop.f32.mrf.mxu0
        %v2451 = vadd.f32 %v2378, %v2450
        %v2452 = vpop.f32.mrf.mxu0
        %v2453 = vadd.f32 %v2380, %v2452
        %v2454 = vpop.f32.mrf.mxu0
        %v2455 = vadd.f32 %v2382, %v2454
        %v2456 = vpop.f32.mrf.mxu0
        %v2457 = vadd.f32 %v2384, %v2456
        %2458 = vmatprep.mubr.bf16.mxu0 %v866
        %2459 = vmatmul.mubr.bf16.gmra.mxu0 %v865
        %v2460 = vpop.f32.mrf.mxu0
        %v2461 = vadd.f32 %v2388, %v2460
        %v2462 = vpop.f32.mrf.mxu0
        %v2463 = vadd.f32 %v2390, %v2462
        %v2464 = vpop.f32.mrf.mxu0
        %v2465 = vadd.f32 %v2392, %v2464
        %v2466 = vpop.f32.mrf.mxu0
        %v2467 = vadd.f32 %v2394, %v2466
        %2468 = vmatprep.mubr.bf16.mxu0 %v874
        %2469 = vmatmul.mubr.bf16.gmra.mxu0 %v873
        %v2470 = vpop.f32.mrf.mxu0
        %v2471 = vadd.f32 %v2398, %v2470
        %v2472 = vpop.f32.mrf.mxu0
        %v2473 = vadd.f32 %v2400, %v2472
        %v2474 = vpop.f32.mrf.mxu0
        %v2475 = vadd.f32 %v2402, %v2474
        %v2476 = vpop.f32.mrf.mxu0
        %v2477 = vadd.f32 %v2404, %v2476
        %2478 = vdwg.mxu0
        %2479 = vmatprep.subr.bf16.mxu0 %v1706
        %2480 = vmatpush1.bf16.msra.mxu0 %v1705
        %2481 = vmatprep.subr.bf16.mxu0 %v1702
        %2482 = vmatpush1.bf16.msra.mxu0 %v1701
        %2483 = vmatprep.subr.bf16.mxu0 %v1698
        %2484 = vmatpush1.bf16.msra.mxu0 %v1697
        %2485 = vmatprep.subr.bf16.mxu0 %v1694
        %2486 = vmatpush1.bf16.msra.mxu0 %v1693
        %2487 = vmatprep.subr.bf16.mxu0 %v1690
        %2488 = vmatpush1.bf16.msra.mxu0 %v1689
        %2489 = vmatprep.subr.bf16.mxu0 %v1686
        %2490 = vmatpush1.bf16.msra.mxu0 %v1685
        %2491 = vmatprep.subr.bf16.mxu0 %v1682
        %2492 = vmatpush1.bf16.msra.mxu0 %v1681
        %2493 = vmatprep.subr.bf16.mxu0 %v1678
        %2494 = vmatpush1.bf16.msra.mxu0 %v1677
        %2495 = vmatprep.subr.bf16.mxu0 %v1738
        %2496 = vmatpush2.bf16.msra.mxu0 %v1737
        %2497 = vmatprep.subr.bf16.mxu0 %v1734
        %2498 = vmatpush2.bf16.msra.mxu0 %v1733
        %2499 = vmatprep.subr.bf16.mxu0 %v1730
        %2500 = vmatpush2.bf16.msra.mxu0 %v1729
        %2501 = vmatprep.subr.bf16.mxu0 %v1726
        %2502 = vmatpush2.bf16.msra.mxu0 %v1725
        %2503 = vmatprep.subr.bf16.mxu0 %v1722
        %2504 = vmatpush2.bf16.msra.mxu0 %v1721
        %2505 = vmatprep.subr.bf16.mxu0 %v1718
        %2506 = vmatpush2.bf16.msra.mxu0 %v1717
        %2507 = vmatprep.subr.bf16.mxu0 %v1714
        %2508 = vmatpush2.bf16.msra.mxu0 %v1713
        %2509 = vmatprep.subr.bf16.mxu0 %v1710
        %2510 = vmatpush2.bf16.msra.mxu0 %v1709
        %2511 = vmatprep.mubr.bf16.mxu0 %v844
        %2512 = vmatmul.mubr.bf16.gmra.mxu0 %v843
        %v2513 = vpop.f32.mrf.mxu0
        %v2514 = vadd.f32 %v738, %v2513
        %v2515 = vpop.f32.mrf.mxu0
        %v2516 = vadd.f32 %v742, %v2515
        %v2517 = vpop.f32.mrf.mxu0
        %v2518 = vadd.f32 %v738, %v2517
        %v2519 = vpop.f32.mrf.mxu0
        %v2520 = vadd.f32 %v742, %v2519
        %2521 = vmatprep.mubr.bf16.mxu0 %v852
        %2522 = vmatmul.mubr.bf16.gmra.mxu0 %v851
        %v2523 = vpop.f32.mrf.mxu0
        %v2524 = vadd.f32 %v738, %v2523
        %v2525 = vpop.f32.mrf.mxu0
        %v2526 = vadd.f32 %v742, %v2525
        %v2527 = vpop.f32.mrf.mxu0
        %v2528 = vadd.f32 %v738, %v2527
        %v2529 = vpop.f32.mrf.mxu0
        %v2530 = vadd.f32 %v742, %v2529
        %2531 = vmatprep.mubr.bf16.mxu0 %v860
        %2532 = vmatmul.mubr.bf16.gmra.mxu0 %v859
        %v2533 = vpop.f32.mrf.mxu0
        %v2534 = vadd.f32 %v738, %v2533
        %v2535 = vpop.f32.mrf.mxu0
        %v2536 = vadd.f32 %v742, %v2535
        %v2537 = vpop.f32.mrf.mxu0
        %v2538 = vadd.f32 %v738, %v2537
        %v2539 = vpop.f32.mrf.mxu0
        %v2540 = vadd.f32 %v742, %v2539
        %2541 = vmatprep.mubr.bf16.mxu0 %v868
        %2542 = vmatmul.mubr.bf16.gmra.mxu0 %v867
        %v2543 = vpop.f32.mrf.mxu0
        %v2544 = vadd.f32 %v738, %v2543
        %v2545 = vpop.f32.mrf.mxu0
        %v2546 = vadd.f32 %v742, %v2545
        %v2547 = vpop.f32.mrf.mxu0
        %v2548 = vadd.f32 %v738, %v2547
        %v2549 = vpop.f32.mrf.mxu0
        %v2550 = vadd.f32 %v742, %v2549
        %2551 = vdwg.mxu0
        %2552 = vmatprep.subr.bf16.mxu0 %v1770
        %2553 = vmatpush1.bf16.msra.mxu0 %v1769
        %2554 = vmatprep.subr.bf16.mxu0 %v1766
        %2555 = vmatpush1.bf16.msra.mxu0 %v1765
        %2556 = vmatprep.subr.bf16.mxu0 %v1762
        %2557 = vmatpush1.bf16.msra.mxu0 %v1761
        %2558 = vmatprep.subr.bf16.mxu0 %v1758
        %2559 = vmatpush1.bf16.msra.mxu0 %v1757
        %2560 = vmatprep.subr.bf16.mxu0 %v1754
        %2561 = vmatpush1.bf16.msra.mxu0 %v1753
        %2562 = vmatprep.subr.bf16.mxu0 %v1750
        %2563 = vmatpush1.bf16.msra.mxu0 %v1749
        %2564 = vmatprep.subr.bf16.mxu0 %v1746
        %2565 = vmatpush1.bf16.msra.mxu0 %v1745
        %2566 = vmatprep.subr.bf16.mxu0 %v1742
        %2567 = vmatpush1.bf16.msra.mxu0 %v1741
        %2568 = vmatprep.subr.bf16.mxu0 %v1802
        %2569 = vmatpush2.bf16.msra.mxu0 %v1801
        %2570 = vmatprep.subr.bf16.mxu0 %v1798
        %2571 = vmatpush2.bf16.msra.mxu0 %v1797
        %2572 = vmatprep.subr.bf16.mxu0 %v1794
        %2573 = vmatpush2.bf16.msra.mxu0 %v1793
        %2574 = vmatprep.subr.bf16.mxu0 %v1790
        %2575 = vmatpush2.bf16.msra.mxu0 %v1789
        %2576 = vmatprep.subr.bf16.mxu0 %v1786
        %2577 = vmatpush2.bf16.msra.mxu0 %v1785
        %2578 = vmatprep.subr.bf16.mxu0 %v1782
        %2579 = vmatpush2.bf16.msra.mxu0 %v1781
        %2580 = vmatprep.subr.bf16.mxu0 %v1778
        %2581 = vmatpush2.bf16.msra.mxu0 %v1777
        %2582 = vmatprep.subr.bf16.mxu0 %v1774
        %2583 = vmatpush2.bf16.msra.mxu0 %v1773
        %2584 = vmatprep.mubr.bf16.mxu0 %v846
        %2585 = vmatmul.mubr.bf16.gmra.mxu0 %v845
        %v2586 = vpop.f32.mrf.mxu0
        %v2587 = vadd.f32 %v2514, %v2586
        %v2588 = vpop.f32.mrf.mxu0
        %v2589 = vadd.f32 %v2516, %v2588
        %v2590 = vpop.f32.mrf.mxu0
        %v2591 = vadd.f32 %v2518, %v2590
        %v2592 = vpop.f32.mrf.mxu0
        %v2593 = vadd.f32 %v2520, %v2592
        %2594 = vmatprep.mubr.bf16.mxu0 %v854
        %2595 = vmatmul.mubr.bf16.gmra.mxu0 %v853
        %v2596 = vpop.f32.mrf.mxu0
        %v2597 = vadd.f32 %v2524, %v2596
        %v2598 = vpop.f32.mrf.mxu0
        %v2599 = vadd.f32 %v2526, %v2598
        %v2600 = vpop.f32.mrf.mxu0
        %v2601 = vadd.f32 %v2528, %v2600
        %v2602 = vpop.f32.mrf.mxu0
        %v2603 = vadd.f32 %v2530, %v2602
        %2604 = vmatprep.mubr.bf16.mxu0 %v862
        %2605 = vmatmul.mubr.bf16.gmra.mxu0 %v861
        %v2606 = vpop.f32.mrf.mxu0
        %v2607 = vadd.f32 %v2534, %v2606
        %v2608 = vpop.f32.mrf.mxu0
        %v2609 = vadd.f32 %v2536, %v2608
        %v2610 = vpop.f32.mrf.mxu0
        %v2611 = vadd.f32 %v2538, %v2610
        %v2612 = vpop.f32.mrf.mxu0
        %v2613 = vadd.f32 %v2540, %v2612
        %2614 = vmatprep.mubr.bf16.mxu0 %v870
        %2615 = vmatmul.mubr.bf16.gmra.mxu0 %v869
        %v2616 = vpop.f32.mrf.mxu0
        %v2617 = vadd.f32 %v2544, %v2616
        %v2618 = vpop.f32.mrf.mxu0
        %v2619 = vadd.f32 %v2546, %v2618
        %v2620 = vpop.f32.mrf.mxu0
        %v2621 = vadd.f32 %v2548, %v2620
        %v2622 = vpop.f32.mrf.mxu0
        %v2623 = vadd.f32 %v2550, %v2622
        %2624 = vdwg.mxu0
        %2625 = vmatprep.subr.bf16.mxu0 %v1834
        %2626 = vmatpush1.bf16.msra.mxu0 %v1833
        %2627 = vmatprep.subr.bf16.mxu0 %v1830
        %2628 = vmatpush1.bf16.msra.mxu0 %v1829
        %2629 = vmatprep.subr.bf16.mxu0 %v1826
        %2630 = vmatpush1.bf16.msra.mxu0 %v1825
        %2631 = vmatprep.subr.bf16.mxu0 %v1822
        %2632 = vmatpush1.bf16.msra.mxu0 %v1821
        %2633 = vmatprep.subr.bf16.mxu0 %v1818
        %2634 = vmatpush1.bf16.msra.mxu0 %v1817
        %2635 = vmatprep.subr.bf16.mxu0 %v1814
        %2636 = vmatpush1.bf16.msra.mxu0 %v1813
        %2637 = vmatprep.subr.bf16.mxu0 %v1810
        %2638 = vmatpush1.bf16.msra.mxu0 %v1809
        %2639 = vmatprep.subr.bf16.mxu0 %v1806
        %2640 = vmatpush1.bf16.msra.mxu0 %v1805
        %2641 = vmatprep.subr.bf16.mxu0 %v1866
        %2642 = vmatpush2.bf16.msra.mxu0 %v1865
        %2643 = vmatprep.subr.bf16.mxu0 %v1862
        %2644 = vmatpush2.bf16.msra.mxu0 %v1861
        %2645 = vmatprep.subr.bf16.mxu0 %v1858
        %2646 = vmatpush2.bf16.msra.mxu0 %v1857
        %2647 = vmatprep.subr.bf16.mxu0 %v1854
        %2648 = vmatpush2.bf16.msra.mxu0 %v1853
        %2649 = vmatprep.subr.bf16.mxu0 %v1850
        %2650 = vmatpush2.bf16.msra.mxu0 %v1849
        %2651 = vmatprep.subr.bf16.mxu0 %v1846
        %2652 = vmatpush2.bf16.msra.mxu0 %v1845
        %2653 = vmatprep.subr.bf16.mxu0 %v1842
        %2654 = vmatpush2.bf16.msra.mxu0 %v1841
        %2655 = vmatprep.subr.bf16.mxu0 %v1838
        %2656 = vmatpush2.bf16.msra.mxu0 %v1837
        %2657 = vmatprep.mubr.bf16.mxu0 %v848
        %2658 = vmatmul.mubr.bf16.gmra.mxu0 %v847
        %v2659 = vpop.f32.mrf.mxu0
        %v2660 = vadd.f32 %v2587, %v2659
        %v2661 = vpop.f32.mrf.mxu0
        %v2662 = vadd.f32 %v2589, %v2661
        %v2663 = vpop.f32.mrf.mxu0
        %v2664 = vadd.f32 %v2591, %v2663
        %v2665 = vpop.f32.mrf.mxu0
        %v2666 = vadd.f32 %v2593, %v2665
        %2667 = vmatprep.mubr.bf16.mxu0 %v856
        %2668 = vmatmul.mubr.bf16.gmra.mxu0 %v855
        %v2669 = vpop.f32.mrf.mxu0
        %v2670 = vadd.f32 %v2597, %v2669
        %v2671 = vpop.f32.mrf.mxu0
        %v2672 = vadd.f32 %v2599, %v2671
        %v2673 = vpop.f32.mrf.mxu0
        %v2674 = vadd.f32 %v2601, %v2673
        %v2675 = vpop.f32.mrf.mxu0
        %v2676 = vadd.f32 %v2603, %v2675
        %2677 = vmatprep.mubr.bf16.mxu0 %v864
        %2678 = vmatmul.mubr.bf16.gmra.mxu0 %v863
        %v2679 = vpop.f32.mrf.mxu0
        %v2680 = vadd.f32 %v2607, %v2679
        %v2681 = vpop.f32.mrf.mxu0
        %v2682 = vadd.f32 %v2609, %v2681
        %v2683 = vpop.f32.mrf.mxu0
        %v2684 = vadd.f32 %v2611, %v2683
        %v2685 = vpop.f32.mrf.mxu0
        %v2686 = vadd.f32 %v2613, %v2685
        %2687 = vmatprep.mubr.bf16.mxu0 %v872
        %2688 = vmatmul.mubr.bf16.gmra.mxu0 %v871
        %v2689 = vpop.f32.mrf.mxu0
        %v2690 = vadd.f32 %v2617, %v2689
        %v2691 = vpop.f32.mrf.mxu0
        %v2692 = vadd.f32 %v2619, %v2691
        %v2693 = vpop.f32.mrf.mxu0
        %v2694 = vadd.f32 %v2621, %v2693
        %v2695 = vpop.f32.mrf.mxu0
        %v2696 = vadd.f32 %v2623, %v2695
        %2697 = vdwg.mxu0
        %2698 = vmatprep.subr.bf16.mxu0 %v1898
        %2699 = vmatpush1.bf16.msra.mxu0 %v1897
        %2700 = vmatprep.subr.bf16.mxu0 %v1894
        %2701 = vmatpush1.bf16.msra.mxu0 %v1893
        %2702 = vmatprep.subr.bf16.mxu0 %v1890
        %2703 = vmatpush1.bf16.msra.mxu0 %v1889
        %2704 = vmatprep.subr.bf16.mxu0 %v1886
        %2705 = vmatpush1.bf16.msra.mxu0 %v1885
        %2706 = vmatprep.subr.bf16.mxu0 %v1882
        %2707 = vmatpush1.bf16.msra.mxu0 %v1881
        %2708 = vmatprep.subr.bf16.mxu0 %v1878
        %2709 = vmatpush1.bf16.msra.mxu0 %v1877
        %2710 = vmatprep.subr.bf16.mxu0 %v1874
        %2711 = vmatpush1.bf16.msra.mxu0 %v1873
        %2712 = vmatprep.subr.bf16.mxu0 %v1870
        %2713 = vmatpush1.bf16.msra.mxu0 %v1869
        %2714 = vmatprep.subr.bf16.mxu0 %v1930
        %2715 = vmatpush2.bf16.msra.mxu0 %v1929
        %2716 = vmatprep.subr.bf16.mxu0 %v1926
        %2717 = vmatpush2.bf16.msra.mxu0 %v1925
        %2718 = vmatprep.subr.bf16.mxu0 %v1922
        %2719 = vmatpush2.bf16.msra.mxu0 %v1921
        %2720 = vmatprep.subr.bf16.mxu0 %v1918
        %2721 = vmatpush2.bf16.msra.mxu0 %v1917
        %2722 = vmatprep.subr.bf16.mxu0 %v1914
        %2723 = vmatpush2.bf16.msra.mxu0 %v1913
        %2724 = vmatprep.subr.bf16.mxu0 %v1910
        %2725 = vmatpush2.bf16.msra.mxu0 %v1909
        %2726 = vmatprep.subr.bf16.mxu0 %v1906
        %2727 = vmatpush2.bf16.msra.mxu0 %v1905
        %2728 = vmatprep.subr.bf16.mxu0 %v1902
        %2729 = vmatpush2.bf16.msra.mxu0 %v1901
        %2730 = vmatprep.mubr.bf16.mxu0 %v850
        %2731 = vmatmul.mubr.bf16.gmra.mxu0 %v849
        %v2732 = vpop.f32.mrf.mxu0
        %v2733 = vadd.f32 %v2660, %v2732
        %v2734 = vpop.f32.mrf.mxu0
        %v2735 = vadd.f32 %v2662, %v2734
        %v2736 = vpop.f32.mrf.mxu0
        %v2737 = vadd.f32 %v2664, %v2736
        %v2738 = vpop.f32.mrf.mxu0
        %v2739 = vadd.f32 %v2666, %v2738
        %2740 = vmatprep.mubr.bf16.mxu0 %v858
        %2741 = vmatmul.mubr.bf16.gmra.mxu0 %v857
        %v2742 = vpop.f32.mrf.mxu0
        %v2743 = vadd.f32 %v2670, %v2742
        %v2744 = vpop.f32.mrf.mxu0
        %v2745 = vadd.f32 %v2672, %v2744
        %v2746 = vpop.f32.mrf.mxu0
        %v2747 = vadd.f32 %v2674, %v2746
        %v2748 = vpop.f32.mrf.mxu0
        %v2749 = vadd.f32 %v2676, %v2748
        %2750 = vmatprep.mubr.bf16.mxu0 %v866
        %2751 = vmatmul.mubr.bf16.gmra.mxu0 %v865
        %v2752 = vpop.f32.mrf.mxu0
        %v2753 = vadd.f32 %v2680, %v2752
        %v2754 = vpop.f32.mrf.mxu0
        %v2755 = vadd.f32 %v2682, %v2754
        %v2756 = vpop.f32.mrf.mxu0
        %v2757 = vadd.f32 %v2684, %v2756
        %v2758 = vpop.f32.mrf.mxu0
        %v2759 = vadd.f32 %v2686, %v2758
        %2760 = vmatprep.mubr.bf16.mxu0 %v874
        %2761 = vmatmul.mubr.bf16.gmra.mxu0 %v873
        %v2762 = vpop.f32.mrf.mxu0
        %v2763 = vadd.f32 %v2690, %v2762
        %v2764 = vpop.f32.mrf.mxu0
        %v2765 = vadd.f32 %v2692, %v2764
        %v2766 = vpop.f32.mrf.mxu0
        %v2767 = vadd.f32 %v2694, %v2766
        %v2768 = vpop.f32.mrf.mxu0
        %v2769 = vadd.f32 %v2696, %v2768
        %2770 = vdwg.mxu0
        %v2771 = vmax.f32 %v2441, 0.0
        %v2772 = vmax.f32 %v2443, 0.0
        %v2773 = vmax.f32 %v2733, 0.0
        %v2774 = vmax.f32 %v2735, 0.0
        %v2775 = vmax.f32 %v2445, 0.0
        %v2776 = vmax.f32 %v2447, 0.0
        %v2777 = vmax.f32 %v2737, 0.0
        %v2778 = vmax.f32 %v2739, 0.0
        %v2779 = vmax.f32 %v2451, 0.0
        %v2780 = vmax.f32 %v2453, 0.0
        %v2781 = vmax.f32 %v2743, 0.0
        %v2782 = vmax.f32 %v2745, 0.0
        %v2783 = vmax.f32 %v2455, 0.0
        %v2784 = vmax.f32 %v2457, 0.0
        %v2785 = vmax.f32 %v2747, 0.0
        %v2786 = vmax.f32 %v2749, 0.0
        %v2787 = vmax.f32 %v2461, 0.0
        %v2788 = vmax.f32 %v2463, 0.0
        %v2789 = vmax.f32 %v2753, 0.0
        %v2790 = vmax.f32 %v2755, 0.0
        %v2791 = vmax.f32 %v2465, 0.0
        %v2792 = vmax.f32 %v2467, 0.0
        %v2793 = vmax.f32 %v2757, 0.0
        %v2794 = vmax.f32 %v2759, 0.0
        %v2795 = vmax.f32 %v2471, 0.0
        %v2796 = vmax.f32 %v2473, 0.0
        %v2797 = vmax.f32 %v2763, 0.0
        %v2798 = vmax.f32 %v2765, 0.0
        %v2799 = vmax.f32 %v2475, 0.0
        %v2800 = vmax.f32 %v2477, 0.0
        %v2801 = vmax.f32 %v2767, 0.0
        %v2802 = vmax.f32 %v2769, 0.0
        %v2803 = vpack.c.bf16 %v2775, %v2771
        %v2804 = vpack.c.bf16 %v2776, %v2772
        %v2805 = vpack.c.bf16 %v2777, %v2773
        %v2806 = vpack.c.bf16 %v2778, %v2774
        %v2807 = vpack.c.bf16 %v2783, %v2779
        %v2808 = vpack.c.bf16 %v2784, %v2780
        %v2809 = vpack.c.bf16 %v2785, %v2781
        %v2810 = vpack.c.bf16 %v2786, %v2782
        %v2811 = vpack.c.bf16 %v2791, %v2787
        %v2812 = vpack.c.bf16 %v2792, %v2788
        %v2813 = vpack.c.bf16 %v2793, %v2789
        %v2814 = vpack.c.bf16 %v2794, %v2790
        %v2815 = vpack.c.bf16 %v2799, %v2795
        %v2816 = vpack.c.bf16 %v2800, %v2796
        %v2817 = vpack.c.bf16 %v2801, %v2797
        %v2818 = vpack.c.bf16 %v2802, %v2798
        %v2819 = vld [vmem:[#allocation8] sm:$0xff]
        %v2820 = vld [vmem:[#allocation8 + $0x8] sm:$0xff]
        %v2821 = vld [vmem:[#allocation8 + $0x10] sm:$0xff]
        %v2822 = vld [vmem:[#allocation8 + $0x18] sm:$0xff]
        %v2823 = vld [vmem:[#allocation8 + $0x20] sm:$0xff]
        %v2824 = vld [vmem:[#allocation8 + $0x28] sm:$0xff]
        %v2825 = vld [vmem:[#allocation8 + $0x30] sm:$0xff]
        %v2826 = vld [vmem:[#allocation8 + $0x38] sm:$0xff]
        %v2827 = vld [vmem:[#allocation8 + $0x40] sm:$0xff]
        %v2828 = vld [vmem:[#allocation8 + $0x48] sm:$0xff]
        %v2829 = vld [vmem:[#allocation8 + $0x50] sm:$0xff]
        %v2830 = vld [vmem:[#allocation8 + $0x58] sm:$0xff]
        %v2831 = vld [vmem:[#allocation8 + $0x60] sm:$0xff]
        %v2832 = vld [vmem:[#allocation8 + $0x68] sm:$0xff]
        %v2833 = vld [vmem:[#allocation8 + $0x70] sm:$0xff]
        %v2834 = vld [vmem:[#allocation8 + $0x78] sm:$0xff]
        %v2835 = vld [vmem:[#allocation8 + $0x80] sm:$0xff]
        %v2836 = vld [vmem:[#allocation8 + $0x88] sm:$0xff]
        %v2837 = vld [vmem:[#allocation8 + $0x90] sm:$0xff]
        %v2838 = vld [vmem:[#allocation8 + $0x98] sm:$0xff]
        %v2839 = vld [vmem:[#allocation8 + $0xa0] sm:$0xff]
        %v2840 = vld [vmem:[#allocation8 + $0xa8] sm:$0xff]
        %v2841 = vld [vmem:[#allocation8 + $0xb0] sm:$0xff]
        %v2842 = vld [vmem:[#allocation8 + $0xb8] sm:$0xff]
        %v2843 = vld [vmem:[#allocation8 + $0xc0] sm:$0xff]
        %v2844 = vld [vmem:[#allocation8 + $0xc8] sm:$0xff]
        %v2845 = vld [vmem:[#allocation8 + $0xd0] sm:$0xff]
        %v2846 = vld [vmem:[#allocation8 + $0xd8] sm:$0xff]
        %v2847 = vld [vmem:[#allocation8 + $0xe0] sm:$0xff]
        %v2848 = vld [vmem:[#allocation8 + $0xe8] sm:$0xff]
        %v2849 = vld [vmem:[#allocation8 + $0xf0] sm:$0xff]
        %v2850 = vld [vmem:[#allocation8 + $0xf8] sm:$0xff]
        %v2851 = vld [vmem:[#allocation8 + $0x100] sm:$0xff]
        %v2852 = vld [vmem:[#allocation8 + $0x108] sm:$0xff]
        %v2853 = vld [vmem:[#allocation8 + $0x110] sm:$0xff]
        %v2854 = vld [vmem:[#allocation8 + $0x118] sm:$0xff]
        %v2855 = vld [vmem:[#allocation8 + $0x120] sm:$0xff]
        %v2856 = vld [vmem:[#allocation8 + $0x128] sm:$0xff]
        %v2857 = vld [vmem:[#allocation8 + $0x130] sm:$0xff]
        %v2858 = vld [vmem:[#allocation8 + $0x138] sm:$0xff]
        %v2859 = vld [vmem:[#allocation8 + $0x140] sm:$0xff]
        %v2860 = vld [vmem:[#allocation8 + $0x148] sm:$0xff]
        %v2861 = vld [vmem:[#allocation8 + $0x150] sm:$0xff]
        %v2862 = vld [vmem:[#allocation8 + $0x158] sm:$0xff]
        %v2863 = vld [vmem:[#allocation8 + $0x160] sm:$0xff]
        %v2864 = vld [vmem:[#allocation8 + $0x168] sm:$0xff]
        %v2865 = vld [vmem:[#allocation8 + $0x170] sm:$0xff]
        %v2866 = vld [vmem:[#allocation8 + $0x178] sm:$0xff]
        %v2867 = vld [vmem:[#allocation8 + $0x180] sm:$0xff]
        %v2868 = vld [vmem:[#allocation8 + $0x188] sm:$0xff]
        %v2869 = vld [vmem:[#allocation8 + $0x190] sm:$0xff]
        %v2870 = vld [vmem:[#allocation8 + $0x198] sm:$0xff]
        %v2871 = vld [vmem:[#allocation8 + $0x1a0] sm:$0xff]
        %v2872 = vld [vmem:[#allocation8 + $0x1a8] sm:$0xff]
        %v2873 = vld [vmem:[#allocation8 + $0x1b0] sm:$0xff]
        %v2874 = vld [vmem:[#allocation8 + $0x1b8] sm:$0xff]
        %v2875 = vld [vmem:[#allocation8 + $0x1c0] sm:$0xff]
        %v2876 = vld [vmem:[#allocation8 + $0x1c8] sm:$0xff]
        %v2877 = vld [vmem:[#allocation8 + $0x1d0] sm:$0xff]
        %v2878 = vld [vmem:[#allocation8 + $0x1d8] sm:$0xff]
        %v2879 = vld [vmem:[#allocation8 + $0x1e0] sm:$0xff]
        %v2880 = vld [vmem:[#allocation8 + $0x1e8] sm:$0xff]
        %v2881 = vld [vmem:[#allocation8 + $0x1f0] sm:$0xff]
        %v2882 = vld [vmem:[#allocation8 + $0x1f8] sm:$0xff]
        %v2883 = vld [vmem:[#allocation8 + $0x200] sm:$0xff]
        %v2884 = vld [vmem:[#allocation8 + $0x208] sm:$0xff]
        %v2885 = vld [vmem:[#allocation8 + $0x210] sm:$0xff]
        %v2886 = vld [vmem:[#allocation8 + $0x218] sm:$0xff]
        %v2887 = vld [vmem:[#allocation8 + $0x220] sm:$0xff]
        %v2888 = vld [vmem:[#allocation8 + $0x228] sm:$0xff]
        %v2889 = vld [vmem:[#allocation8 + $0x230] sm:$0xff]
        %v2890 = vld [vmem:[#allocation8 + $0x238] sm:$0xff]
        %v2891 = vld [vmem:[#allocation8 + $0x240] sm:$0xff]
        %v2892 = vld [vmem:[#allocation8 + $0x248] sm:$0xff]
        %v2893 = vld [vmem:[#allocation8 + $0x250] sm:$0xff]
        %v2894 = vld [vmem:[#allocation8 + $0x258] sm:$0xff]
        %v2895 = vld [vmem:[#allocation8 + $0x260] sm:$0xff]
        %v2896 = vld [vmem:[#allocation8 + $0x268] sm:$0xff]
        %v2897 = vld [vmem:[#allocation8 + $0x270] sm:$0xff]
        %v2898 = vld [vmem:[#allocation8 + $0x278] sm:$0xff]
        %v2899 = vld [vmem:[#allocation8 + $0x280] sm:$0xff]
        %v2900 = vld [vmem:[#allocation8 + $0x288] sm:$0xff]
        %v2901 = vld [vmem:[#allocation8 + $0x290] sm:$0xff]
        %v2902 = vld [vmem:[#allocation8 + $0x298] sm:$0xff]
        %v2903 = vld [vmem:[#allocation8 + $0x2a0] sm:$0xff]
        %v2904 = vld [vmem:[#allocation8 + $0x2a8] sm:$0xff]
        %v2905 = vld [vmem:[#allocation8 + $0x2b0] sm:$0xff]
        %v2906 = vld [vmem:[#allocation8 + $0x2b8] sm:$0xff]
        %v2907 = vld [vmem:[#allocation8 + $0x2c0] sm:$0xff]
        %v2908 = vld [vmem:[#allocation8 + $0x2c8] sm:$0xff]
        %v2909 = vld [vmem:[#allocation8 + $0x2d0] sm:$0xff]
        %v2910 = vld [vmem:[#allocation8 + $0x2d8] sm:$0xff]
        %v2911 = vld [vmem:[#allocation8 + $0x2e0] sm:$0xff]
        %v2912 = vld [vmem:[#allocation8 + $0x2e8] sm:$0xff]
        %v2913 = vld [vmem:[#allocation8 + $0x2f0] sm:$0xff]
        %v2914 = vld [vmem:[#allocation8 + $0x2f8] sm:$0xff]
        %v2915 = vld [vmem:[#allocation8 + $0x300] sm:$0xff]
        %v2916 = vld [vmem:[#allocation8 + $0x308] sm:$0xff]
        %v2917 = vld [vmem:[#allocation8 + $0x310] sm:$0xff]
        %v2918 = vld [vmem:[#allocation8 + $0x318] sm:$0xff]
        %v2919 = vld [vmem:[#allocation8 + $0x320] sm:$0xff]
        %v2920 = vld [vmem:[#allocation8 + $0x328] sm:$0xff]
        %v2921 = vld [vmem:[#allocation8 + $0x330] sm:$0xff]
        %v2922 = vld [vmem:[#allocation8 + $0x338] sm:$0xff]
        %v2923 = vld [vmem:[#allocation8 + $0x340] sm:$0xff]
        %v2924 = vld [vmem:[#allocation8 + $0x348] sm:$0xff]
        %v2925 = vld [vmem:[#allocation8 + $0x350] sm:$0xff]
        %v2926 = vld [vmem:[#allocation8 + $0x358] sm:$0xff]
        %v2927 = vld [vmem:[#allocation8 + $0x360] sm:$0xff]
        %v2928 = vld [vmem:[#allocation8 + $0x368] sm:$0xff]
        %v2929 = vld [vmem:[#allocation8 + $0x370] sm:$0xff]
        %v2930 = vld [vmem:[#allocation8 + $0x378] sm:$0xff]
        %v2931 = vld [vmem:[#allocation8 + $0x380] sm:$0xff]
        %v2932 = vld [vmem:[#allocation8 + $0x388] sm:$0xff]
        %v2933 = vld [vmem:[#allocation8 + $0x390] sm:$0xff]
        %v2934 = vld [vmem:[#allocation8 + $0x398] sm:$0xff]
        %v2935 = vld [vmem:[#allocation8 + $0x3a0] sm:$0xff]
        %v2936 = vld [vmem:[#allocation8 + $0x3a8] sm:$0xff]
        %v2937 = vld [vmem:[#allocation8 + $0x3b0] sm:$0xff]
        %v2938 = vld [vmem:[#allocation8 + $0x3b8] sm:$0xff]
        %v2939 = vld [vmem:[#allocation8 + $0x3c0] sm:$0xff]
        %v2940 = vld [vmem:[#allocation8 + $0x3c8] sm:$0xff]
        %v2941 = vld [vmem:[#allocation8 + $0x3d0] sm:$0xff]
        %v2942 = vld [vmem:[#allocation8 + $0x3d8] sm:$0xff]
        %v2943 = vld [vmem:[#allocation8 + $0x3e0] sm:$0xff]
        %v2944 = vld [vmem:[#allocation8 + $0x3e8] sm:$0xff]
        %v2945 = vld [vmem:[#allocation8 + $0x3f0] sm:$0xff]
        %v2946 = vld [vmem:[#allocation8 + $0x3f8] sm:$0xff]
        %v2947 = vld [vmem:[%s4] sm:$0xf]
        %v2949 = vlaneseq
        %v2950 = vshrl.u32 %v2949, 7
        %v2951 = vsub.s32 0, %v2950
        %v2952 = vrot.slane %v2947, %v2951
        %v2953 = vlaneseq
        %v2954 = vshrl.u32 %v2953, 7
        %v2955 = vsub.s32 1, %v2954
        %v2956 = vrot.slane %v2947, %v2955
        %v2957 = vlaneseq
        %v2958 = vshrl.u32 %v2957, 7
        %v2959 = vsub.s32 2, %v2958
        %v2960 = vrot.slane %v2947, %v2959
        %v2961 = vlaneseq
        %v2962 = vshrl.u32 %v2961, 7
        %v2963 = vsub.s32 3, %v2962
        %v2964 = vrot.slane %v2947, %v2963
        %v3097 = vunpack.c.l.b16 %v2819
        %v3098 = vunpack.c.h.b16 %v2819
        %v3099 = vunpack.c.l.b16 %v2820
        %v3100 = vunpack.c.h.b16 %v2820
        %v3101 = vunpack.c.l.b16 %v2821
        %v3102 = vunpack.c.h.b16 %v2821
        %v3103 = vunpack.c.l.b16 %v2822
        %v3104 = vunpack.c.h.b16 %v2822
        %v3105 = vunpack.c.l.b16 %v2823
        %v3106 = vunpack.c.h.b16 %v2823
        %v3107 = vunpack.c.l.b16 %v2824
        %v3108 = vunpack.c.h.b16 %v2824
        %v3109 = vunpack.c.l.b16 %v2825
        %v3110 = vunpack.c.h.b16 %v2825
        %v3111 = vunpack.c.l.b16 %v2826
        %v3112 = vunpack.c.h.b16 %v2826
        %v3113 = vunpack.c.l.b16 %v2827
        %v3114 = vunpack.c.h.b16 %v2827
        %v3115 = vunpack.c.l.b16 %v2828
        %v3116 = vunpack.c.h.b16 %v2828
        %v3117 = vunpack.c.l.b16 %v2829
        %v3118 = vunpack.c.h.b16 %v2829
        %v3119 = vunpack.c.l.b16 %v2830
        %v3120 = vunpack.c.h.b16 %v2830
        %v3121 = vunpack.c.l.b16 %v2831
        %v3122 = vunpack.c.h.b16 %v2831
        %v3123 = vunpack.c.l.b16 %v2832
        %v3124 = vunpack.c.h.b16 %v2832
        %v3125 = vunpack.c.l.b16 %v2833
        %v3126 = vunpack.c.h.b16 %v2833
        %v3127 = vunpack.c.l.b16 %v2834
        %v3128 = vunpack.c.h.b16 %v2834
        %v3129 = vunpack.c.l.b16 %v2835
        %v3130 = vunpack.c.h.b16 %v2835
        %v3131 = vunpack.c.l.b16 %v2836
        %v3132 = vunpack.c.h.b16 %v2836
        %v3133 = vunpack.c.l.b16 %v2837
        %v3134 = vunpack.c.h.b16 %v2837
        %v3135 = vunpack.c.l.b16 %v2838
        %v3136 = vunpack.c.h.b16 %v2838
        %v3137 = vunpack.c.l.b16 %v2839
        %v3138 = vunpack.c.h.b16 %v2839
        %v3139 = vunpack.c.l.b16 %v2840
        %v3140 = vunpack.c.h.b16 %v2840
        %v3141 = vunpack.c.l.b16 %v2841
        %v3142 = vunpack.c.h.b16 %v2841
        %v3143 = vunpack.c.l.b16 %v2842
        %v3144 = vunpack.c.h.b16 %v2842
        %v3145 = vunpack.c.l.b16 %v2843
        %v3146 = vunpack.c.h.b16 %v2843
        %v3147 = vunpack.c.l.b16 %v2844
        %v3148 = vunpack.c.h.b16 %v2844
        %v3149 = vunpack.c.l.b16 %v2845
        %v3150 = vunpack.c.h.b16 %v2845
        %v3151 = vunpack.c.l.b16 %v2846
        %v3152 = vunpack.c.h.b16 %v2846
        %v3153 = vunpack.c.l.b16 %v2847
        %v3154 = vunpack.c.h.b16 %v2847
        %v3155 = vunpack.c.l.b16 %v2848
        %v3156 = vunpack.c.h.b16 %v2848
        %v3157 = vunpack.c.l.b16 %v2849
        %v3158 = vunpack.c.h.b16 %v2849
        %v3159 = vunpack.c.l.b16 %v2850
        %v3160 = vunpack.c.h.b16 %v2850
        %v3161 = vunpack.c.l.b16 %v2851
        %v3162 = vunpack.c.h.b16 %v2851
        %v3163 = vunpack.c.l.b16 %v2852
        %v3164 = vunpack.c.h.b16 %v2852
        %v3165 = vunpack.c.l.b16 %v2853
        %v3166 = vunpack.c.h.b16 %v2853
        %v3167 = vunpack.c.l.b16 %v2854
        %v3168 = vunpack.c.h.b16 %v2854
        %v3169 = vunpack.c.l.b16 %v2855
        %v3170 = vunpack.c.h.b16 %v2855
        %v3171 = vunpack.c.l.b16 %v2856
        %v3172 = vunpack.c.h.b16 %v2856
        %v3173 = vunpack.c.l.b16 %v2857
        %v3174 = vunpack.c.h.b16 %v2857
        %v3175 = vunpack.c.l.b16 %v2858
        %v3176 = vunpack.c.h.b16 %v2858
        %v3177 = vunpack.c.l.b16 %v2859
        %v3178 = vunpack.c.h.b16 %v2859
        %v3179 = vunpack.c.l.b16 %v2860
        %v3180 = vunpack.c.h.b16 %v2860
        %v3181 = vunpack.c.l.b16 %v2861
        %v3182 = vunpack.c.h.b16 %v2861
        %v3183 = vunpack.c.l.b16 %v2862
        %v3184 = vunpack.c.h.b16 %v2862
        %v3185 = vunpack.c.l.b16 %v2863
        %v3186 = vunpack.c.h.b16 %v2863
        %v3187 = vunpack.c.l.b16 %v2864
        %v3188 = vunpack.c.h.b16 %v2864
        %v3189 = vunpack.c.l.b16 %v2865
        %v3190 = vunpack.c.h.b16 %v2865
        %v3191 = vunpack.c.l.b16 %v2866
        %v3192 = vunpack.c.h.b16 %v2866
        %v3193 = vunpack.c.l.b16 %v2867
        %v3194 = vunpack.c.h.b16 %v2867
        %v3195 = vunpack.c.l.b16 %v2868
        %v3196 = vunpack.c.h.b16 %v2868
        %v3197 = vunpack.c.l.b16 %v2869
        %v3198 = vunpack.c.h.b16 %v2869
        %v3199 = vunpack.c.l.b16 %v2870
        %v3200 = vunpack.c.h.b16 %v2870
        %v3201 = vunpack.c.l.b16 %v2871
        %v3202 = vunpack.c.h.b16 %v2871
        %v3203 = vunpack.c.l.b16 %v2872
        %v3204 = vunpack.c.h.b16 %v2872
        %v3205 = vunpack.c.l.b16 %v2873
        %v3206 = vunpack.c.h.b16 %v2873
        %v3207 = vunpack.c.l.b16 %v2874
        %v3208 = vunpack.c.h.b16 %v2874
        %v3209 = vunpack.c.l.b16 %v2875
        %v3210 = vunpack.c.h.b16 %v2875
        %v3211 = vunpack.c.l.b16 %v2876
        %v3212 = vunpack.c.h.b16 %v2876
        %v3213 = vunpack.c.l.b16 %v2877
        %v3214 = vunpack.c.h.b16 %v2877
        %v3215 = vunpack.c.l.b16 %v2878
        %v3216 = vunpack.c.h.b16 %v2878
        %v3217 = vunpack.c.l.b16 %v2879
        %v3218 = vunpack.c.h.b16 %v2879
        %v3219 = vunpack.c.l.b16 %v2880
        %v3220 = vunpack.c.h.b16 %v2880
        %v3221 = vunpack.c.l.b16 %v2881
        %v3222 = vunpack.c.h.b16 %v2881
        %v3223 = vunpack.c.l.b16 %v2882
        %v3224 = vunpack.c.h.b16 %v2882
        %v3225 = vunpack.c.l.b16 %v2883
        %v3226 = vunpack.c.h.b16 %v2883
        %v3227 = vunpack.c.l.b16 %v2884
        %v3228 = vunpack.c.h.b16 %v2884
        %v3229 = vunpack.c.l.b16 %v2885
        %v3230 = vunpack.c.h.b16 %v2885
        %v3231 = vunpack.c.l.b16 %v2886
        %v3232 = vunpack.c.h.b16 %v2886
        %v3233 = vunpack.c.l.b16 %v2887
        %v3234 = vunpack.c.h.b16 %v2887
        %v3235 = vunpack.c.l.b16 %v2888
        %v3236 = vunpack.c.h.b16 %v2888
        %v3237 = vunpack.c.l.b16 %v2889
        %v3238 = vunpack.c.h.b16 %v2889
        %v3239 = vunpack.c.l.b16 %v2890
        %v3240 = vunpack.c.h.b16 %v2890
        %v3241 = vunpack.c.l.b16 %v2891
        %v3242 = vunpack.c.h.b16 %v2891
        %v3243 = vunpack.c.l.b16 %v2892
        %v3244 = vunpack.c.h.b16 %v2892
        %v3245 = vunpack.c.l.b16 %v2893
        %v3246 = vunpack.c.h.b16 %v2893
        %v3247 = vunpack.c.l.b16 %v2894
        %v3248 = vunpack.c.h.b16 %v2894
        %v3249 = vunpack.c.l.b16 %v2895
        %v3250 = vunpack.c.h.b16 %v2895
        %v3251 = vunpack.c.l.b16 %v2896
        %v3252 = vunpack.c.h.b16 %v2896
        %v3253 = vunpack.c.l.b16 %v2897
        %v3254 = vunpack.c.h.b16 %v2897
        %v3255 = vunpack.c.l.b16 %v2898
        %v3256 = vunpack.c.h.b16 %v2898
        %v3257 = vunpack.c.l.b16 %v2899
        %v3258 = vunpack.c.h.b16 %v2899
        %v3259 = vunpack.c.l.b16 %v2900
        %v3260 = vunpack.c.h.b16 %v2900
        %v3261 = vunpack.c.l.b16 %v2901
        %v3262 = vunpack.c.h.b16 %v2901
        %v3263 = vunpack.c.l.b16 %v2902
        %v3264 = vunpack.c.h.b16 %v2902
        %v3265 = vunpack.c.l.b16 %v2903
        %v3266 = vunpack.c.h.b16 %v2903
        %v3267 = vunpack.c.l.b16 %v2904
        %v3268 = vunpack.c.h.b16 %v2904
        %v3269 = vunpack.c.l.b16 %v2905
        %v3270 = vunpack.c.h.b16 %v2905
        %v3271 = vunpack.c.l.b16 %v2906
        %v3272 = vunpack.c.h.b16 %v2906
        %v3273 = vunpack.c.l.b16 %v2907
        %v3274 = vunpack.c.h.b16 %v2907
        %v3275 = vunpack.c.l.b16 %v2908
        %v3276 = vunpack.c.h.b16 %v2908
        %v3277 = vunpack.c.l.b16 %v2909
        %v3278 = vunpack.c.h.b16 %v2909
        %v3279 = vunpack.c.l.b16 %v2910
        %v3280 = vunpack.c.h.b16 %v2910
        %v3281 = vunpack.c.l.b16 %v2911
        %v3282 = vunpack.c.h.b16 %v2911
        %v3283 = vunpack.c.l.b16 %v2912
        %v3284 = vunpack.c.h.b16 %v2912
        %v3285 = vunpack.c.l.b16 %v2913
        %v3286 = vunpack.c.h.b16 %v2913
        %v3287 = vunpack.c.l.b16 %v2914
        %v3288 = vunpack.c.h.b16 %v2914
        %v3289 = vunpack.c.l.b16 %v2915
        %v3290 = vunpack.c.h.b16 %v2915
        %v3291 = vunpack.c.l.b16 %v2916
        %v3292 = vunpack.c.h.b16 %v2916
        %v3293 = vunpack.c.l.b16 %v2917
        %v3294 = vunpack.c.h.b16 %v2917
        %v3295 = vunpack.c.l.b16 %v2918
        %v3296 = vunpack.c.h.b16 %v2918
        %v3297 = vunpack.c.l.b16 %v2919
        %v3298 = vunpack.c.h.b16 %v2919
        %v3299 = vunpack.c.l.b16 %v2920
        %v3300 = vunpack.c.h.b16 %v2920
        %v3301 = vunpack.c.l.b16 %v2921
        %v3302 = vunpack.c.h.b16 %v2921
        %v3303 = vunpack.c.l.b16 %v2922
        %v3304 = vunpack.c.h.b16 %v2922
        %v3305 = vunpack.c.l.b16 %v2923
        %v3306 = vunpack.c.h.b16 %v2923
        %v3307 = vunpack.c.l.b16 %v2924
        %v3308 = vunpack.c.h.b16 %v2924
        %v3309 = vunpack.c.l.b16 %v2925
        %v3310 = vunpack.c.h.b16 %v2925
        %v3311 = vunpack.c.l.b16 %v2926
        %v3312 = vunpack.c.h.b16 %v2926
        %v3313 = vunpack.c.l.b16 %v2927
        %v3314 = vunpack.c.h.b16 %v2927
        %v3315 = vunpack.c.l.b16 %v2928
        %v3316 = vunpack.c.h.b16 %v2928
        %v3317 = vunpack.c.l.b16 %v2929
        %v3318 = vunpack.c.h.b16 %v2929
        %v3319 = vunpack.c.l.b16 %v2930
        %v3320 = vunpack.c.h.b16 %v2930
        %v3321 = vunpack.c.l.b16 %v2931
        %v3322 = vunpack.c.h.b16 %v2931
        %v3323 = vunpack.c.l.b16 %v2932
        %v3324 = vunpack.c.h.b16 %v2932
        %v3325 = vunpack.c.l.b16 %v2933
        %v3326 = vunpack.c.h.b16 %v2933
        %v3327 = vunpack.c.l.b16 %v2934
        %v3328 = vunpack.c.h.b16 %v2934
        %v3329 = vunpack.c.l.b16 %v2935
        %v3330 = vunpack.c.h.b16 %v2935
        %v3331 = vunpack.c.l.b16 %v2936
        %v3332 = vunpack.c.h.b16 %v2936
        %v3333 = vunpack.c.l.b16 %v2937
        %v3334 = vunpack.c.h.b16 %v2937
        %v3335 = vunpack.c.l.b16 %v2938
        %v3336 = vunpack.c.h.b16 %v2938
        %v3337 = vunpack.c.l.b16 %v2939
        %v3338 = vunpack.c.h.b16 %v2939
        %v3339 = vunpack.c.l.b16 %v2940
        %v3340 = vunpack.c.h.b16 %v2940
        %v3341 = vunpack.c.l.b16 %v2941
        %v3342 = vunpack.c.h.b16 %v2941
        %v3343 = vunpack.c.l.b16 %v2942
        %v3344 = vunpack.c.h.b16 %v2942
        %v3345 = vunpack.c.l.b16 %v2943
        %v3346 = vunpack.c.h.b16 %v2943
        %v3347 = vunpack.c.l.b16 %v2944
        %v3348 = vunpack.c.h.b16 %v2944
        %v3349 = vunpack.c.l.b16 %v2945
        %v3350 = vunpack.c.h.b16 %v2945
        %v3351 = vunpack.c.l.b16 %v2946
        %v3352 = vunpack.c.h.b16 %v2946
        %v3353 = vpack.c.b16 %v3101, %v3097
        %v3354 = vpack.c.b16 %v3102, %v3098
        %v3355 = vpack.c.b16 %v3103, %v3099
        %v3356 = vpack.c.b16 %v3104, %v3100
        %v3357 = vpack.c.b16 %v3109, %v3105
        %v3358 = vpack.c.b16 %v3110, %v3106
        %v3359 = vpack.c.b16 %v3111, %v3107
        %v3360 = vpack.c.b16 %v3112, %v3108
        %v3361 = vpack.c.b16 %v3117, %v3113
        %v3362 = vpack.c.b16 %v3118, %v3114
        %v3363 = vpack.c.b16 %v3119, %v3115
        %v3364 = vpack.c.b16 %v3120, %v3116
        %v3365 = vpack.c.b16 %v3125, %v3121
        %v3366 = vpack.c.b16 %v3126, %v3122
        %v3367 = vpack.c.b16 %v3127, %v3123
        %v3368 = vpack.c.b16 %v3128, %v3124
        %v3369 = vpack.c.b16 %v3133, %v3129
        %v3370 = vpack.c.b16 %v3134, %v3130
        %v3371 = vpack.c.b16 %v3135, %v3131
        %v3372 = vpack.c.b16 %v3136, %v3132
        %v3373 = vpack.c.b16 %v3141, %v3137
        %v3374 = vpack.c.b16 %v3142, %v3138
        %v3375 = vpack.c.b16 %v3143, %v3139
        %v3376 = vpack.c.b16 %v3144, %v3140
        %v3377 = vpack.c.b16 %v3149, %v3145
        %v3378 = vpack.c.b16 %v3150, %v3146
        %v3379 = vpack.c.b16 %v3151, %v3147
        %v3380 = vpack.c.b16 %v3152, %v3148
        %v3381 = vpack.c.b16 %v3157, %v3153
        %v3382 = vpack.c.b16 %v3158, %v3154
        %v3383 = vpack.c.b16 %v3159, %v3155
        %v3384 = vpack.c.b16 %v3160, %v3156
        %v3385 = vpack.c.b16 %v3165, %v3161
        %v3386 = vpack.c.b16 %v3166, %v3162
        %v3387 = vpack.c.b16 %v3167, %v3163
        %v3388 = vpack.c.b16 %v3168, %v3164
        %v3389 = vpack.c.b16 %v3173, %v3169
        %v3390 = vpack.c.b16 %v3174, %v3170
        %v3391 = vpack.c.b16 %v3175, %v3171
        %v3392 = vpack.c.b16 %v3176, %v3172
        %v3393 = vpack.c.b16 %v3181, %v3177
        %v3394 = vpack.c.b16 %v3182, %v3178
        %v3395 = vpack.c.b16 %v3183, %v3179
        %v3396 = vpack.c.b16 %v3184, %v3180
        %v3397 = vpack.c.b16 %v3189, %v3185
        %v3398 = vpack.c.b16 %v3190, %v3186
        %v3399 = vpack.c.b16 %v3191, %v3187
        %v3400 = vpack.c.b16 %v3192, %v3188
        %v3401 = vpack.c.b16 %v3197, %v3193
        %v3402 = vpack.c.b16 %v3198, %v3194
        %v3403 = vpack.c.b16 %v3199, %v3195
        %v3404 = vpack.c.b16 %v3200, %v3196
        %v3405 = vpack.c.b16 %v3205, %v3201
        %v3406 = vpack.c.b16 %v3206, %v3202
        %v3407 = vpack.c.b16 %v3207, %v3203
        %v3408 = vpack.c.b16 %v3208, %v3204
        %v3409 = vpack.c.b16 %v3213, %v3209
        %v3410 = vpack.c.b16 %v3214, %v3210
        %v3411 = vpack.c.b16 %v3215, %v3211
        %v3412 = vpack.c.b16 %v3216, %v3212
        %v3413 = vpack.c.b16 %v3221, %v3217
        %v3414 = vpack.c.b16 %v3222, %v3218
        %v3415 = vpack.c.b16 %v3223, %v3219
        %v3416 = vpack.c.b16 %v3224, %v3220
        %v3417 = vpack.c.b16 %v3229, %v3225
        %v3418 = vpack.c.b16 %v3230, %v3226
        %v3419 = vpack.c.b16 %v3231, %v3227
        %v3420 = vpack.c.b16 %v3232, %v3228
        %v3421 = vpack.c.b16 %v3237, %v3233
        %v3422 = vpack.c.b16 %v3238, %v3234
        %v3423 = vpack.c.b16 %v3239, %v3235
        %v3424 = vpack.c.b16 %v3240, %v3236
        %v3425 = vpack.c.b16 %v3245, %v3241
        %v3426 = vpack.c.b16 %v3246, %v3242
        %v3427 = vpack.c.b16 %v3247, %v3243
        %v3428 = vpack.c.b16 %v3248, %v3244
        %v3429 = vpack.c.b16 %v3253, %v3249
        %v3430 = vpack.c.b16 %v3254, %v3250
        %v3431 = vpack.c.b16 %v3255, %v3251
        %v3432 = vpack.c.b16 %v3256, %v3252
        %v3433 = vpack.c.b16 %v3261, %v3257
        %v3434 = vpack.c.b16 %v3262, %v3258
        %v3435 = vpack.c.b16 %v3263, %v3259
        %v3436 = vpack.c.b16 %v3264, %v3260
        %v3437 = vpack.c.b16 %v3269, %v3265
        %v3438 = vpack.c.b16 %v3270, %v3266
        %v3439 = vpack.c.b16 %v3271, %v3267
        %v3440 = vpack.c.b16 %v3272, %v3268
        %v3441 = vpack.c.b16 %v3277, %v3273
        %v3442 = vpack.c.b16 %v3278, %v3274
        %v3443 = vpack.c.b16 %v3279, %v3275
        %v3444 = vpack.c.b16 %v3280, %v3276
        %v3445 = vpack.c.b16 %v3285, %v3281
        %v3446 = vpack.c.b16 %v3286, %v3282
        %v3447 = vpack.c.b16 %v3287, %v3283
        %v3448 = vpack.c.b16 %v3288, %v3284
        %v3449 = vpack.c.b16 %v3293, %v3289
        %v3450 = vpack.c.b16 %v3294, %v3290
        %v3451 = vpack.c.b16 %v3295, %v3291
        %v3452 = vpack.c.b16 %v3296, %v3292
        %v3453 = vpack.c.b16 %v3301, %v3297
        %v3454 = vpack.c.b16 %v3302, %v3298
        %v3455 = vpack.c.b16 %v3303, %v3299
        %v3456 = vpack.c.b16 %v3304, %v3300
        %v3457 = vpack.c.b16 %v3309, %v3305
        %v3458 = vpack.c.b16 %v3310, %v3306
        %v3459 = vpack.c.b16 %v3311, %v3307
        %v3460 = vpack.c.b16 %v3312, %v3308
        %v3461 = vpack.c.b16 %v3317, %v3313
        %v3462 = vpack.c.b16 %v3318, %v3314
        %v3463 = vpack.c.b16 %v3319, %v3315
        %v3464 = vpack.c.b16 %v3320, %v3316
        %v3465 = vpack.c.b16 %v3325, %v3321
        %v3466 = vpack.c.b16 %v3326, %v3322
        %v3467 = vpack.c.b16 %v3327, %v3323
        %v3468 = vpack.c.b16 %v3328, %v3324
        %v3469 = vpack.c.b16 %v3333, %v3329
        %v3470 = vpack.c.b16 %v3334, %v3330
        %v3471 = vpack.c.b16 %v3335, %v3331
        %v3472 = vpack.c.b16 %v3336, %v3332
        %v3473 = vpack.c.b16 %v3341, %v3337
        %v3474 = vpack.c.b16 %v3342, %v3338
        %v3475 = vpack.c.b16 %v3343, %v3339
        %v3476 = vpack.c.b16 %v3344, %v3340
        %v3477 = vpack.c.b16 %v3349, %v3345
        %v3478 = vpack.c.b16 %v3350, %v3346
        %v3479 = vpack.c.b16 %v3351, %v3347
        %v3480 = vpack.c.b16 %v3352, %v3348
        %3609 = vmatprep.subr.bf16.mxu0 %v3382
        %3610 = vmatpush1.bf16.msra.mxu0 %v3381
        %3611 = vmatprep.subr.bf16.mxu0 %v3378
        %3612 = vmatpush1.bf16.msra.mxu0 %v3377
        %3613 = vmatprep.subr.bf16.mxu0 %v3374
        %3614 = vmatpush1.bf16.msra.mxu0 %v3373
        %3615 = vmatprep.subr.bf16.mxu0 %v3370
        %3616 = vmatpush1.bf16.msra.mxu0 %v3369
        %3617 = vmatprep.subr.bf16.mxu0 %v3366
        %3618 = vmatpush1.bf16.msra.mxu0 %v3365
        %3619 = vmatprep.subr.bf16.mxu0 %v3362
        %3620 = vmatpush1.bf16.msra.mxu0 %v3361
        %3621 = vmatprep.subr.bf16.mxu0 %v3358
        %3622 = vmatpush1.bf16.msra.mxu0 %v3357
        %3623 = vmatprep.subr.bf16.mxu0 %v3354
        %3624 = vmatpush1.bf16.msra.mxu0 %v3353
        %3625 = vmatprep.subr.bf16.mxu0 %v3414
        %3626 = vmatpush2.bf16.msra.mxu0 %v3413
        %3627 = vmatprep.subr.bf16.mxu0 %v3410
        %3628 = vmatpush2.bf16.msra.mxu0 %v3409
        %3629 = vmatprep.subr.bf16.mxu0 %v3406
        %3630 = vmatpush2.bf16.msra.mxu0 %v3405
        %3631 = vmatprep.subr.bf16.mxu0 %v3402
        %3632 = vmatpush2.bf16.msra.mxu0 %v3401
        %3633 = vmatprep.subr.bf16.mxu0 %v3398
        %3634 = vmatpush2.bf16.msra.mxu0 %v3397
        %3635 = vmatprep.subr.bf16.mxu0 %v3394
        %3636 = vmatpush2.bf16.msra.mxu0 %v3393
        %3637 = vmatprep.subr.bf16.mxu0 %v3390
        %3638 = vmatpush2.bf16.msra.mxu0 %v3389
        %3639 = vmatprep.subr.bf16.mxu0 %v3386
        %3640 = vmatpush2.bf16.msra.mxu0 %v3385
        %3641 = vmatprep.mubr.bf16.mxu0 %v2804
        %3642 = vmatmul.mubr.bf16.gmra.mxu0 %v2803
        %v3643 = vpop.f32.mrf.mxu0
        %v3644 = vadd.f32 %v2952, %v3643
        %v3645 = vpop.f32.mrf.mxu0
        %v3646 = vadd.f32 %v2956, %v3645
        %v3647 = vpop.f32.mrf.mxu0
        %v3648 = vadd.f32 %v2952, %v3647
        %v3649 = vpop.f32.mrf.mxu0
        %v3650 = vadd.f32 %v2956, %v3649
        %3651 = vmatprep.mubr.bf16.mxu0 %v2808
        %3652 = vmatmul.mubr.bf16.gmra.mxu0 %v2807
        %v3653 = vpop.f32.mrf.mxu0
        %v3654 = vadd.f32 %v2952, %v3653
        %v3655 = vpop.f32.mrf.mxu0
        %v3656 = vadd.f32 %v2956, %v3655
        %v3657 = vpop.f32.mrf.mxu0
        %v3658 = vadd.f32 %v2952, %v3657
        %v3659 = vpop.f32.mrf.mxu0
        %v3660 = vadd.f32 %v2956, %v3659
        %3661 = vmatprep.mubr.bf16.mxu0 %v2812
        %3662 = vmatmul.mubr.bf16.gmra.mxu0 %v2811
        %v3663 = vpop.f32.mrf.mxu0
        %v3664 = vadd.f32 %v2952, %v3663
        %v3665 = vpop.f32.mrf.mxu0
        %v3666 = vadd.f32 %v2956, %v3665
        %v3667 = vpop.f32.mrf.mxu0
        %v3668 = vadd.f32 %v2952, %v3667
        %v3669 = vpop.f32.mrf.mxu0
        %v3670 = vadd.f32 %v2956, %v3669
        %3671 = vmatprep.mubr.bf16.mxu0 %v2816
        %3672 = vmatmul.mubr.bf16.gmra.mxu0 %v2815
        %v3673 = vpop.f32.mrf.mxu0
        %v3674 = vadd.f32 %v2952, %v3673
        %v3675 = vpop.f32.mrf.mxu0
        %v3676 = vadd.f32 %v2956, %v3675
        %v3677 = vpop.f32.mrf.mxu0
        %v3678 = vadd.f32 %v2952, %v3677
        %v3679 = vpop.f32.mrf.mxu0
        %v3680 = vadd.f32 %v2956, %v3679
        %3681 = vdwg.mxu0
        %3682 = vmatprep.subr.bf16.mxu0 %v3446
        %3683 = vmatpush1.bf16.msra.mxu0 %v3445
        %3684 = vmatprep.subr.bf16.mxu0 %v3442
        %3685 = vmatpush1.bf16.msra.mxu0 %v3441
        %3686 = vmatprep.subr.bf16.mxu0 %v3438
        %3687 = vmatpush1.bf16.msra.mxu0 %v3437
        %3688 = vmatprep.subr.bf16.mxu0 %v3434
        %3689 = vmatpush1.bf16.msra.mxu0 %v3433
        %3690 = vmatprep.subr.bf16.mxu0 %v3430
        %3691 = vmatpush1.bf16.msra.mxu0 %v3429
        %3692 = vmatprep.subr.bf16.mxu0 %v3426
        %3693 = vmatpush1.bf16.msra.mxu0 %v3425
        %3694 = vmatprep.subr.bf16.mxu0 %v3422
        %3695 = vmatpush1.bf16.msra.mxu0 %v3421
        %3696 = vmatprep.subr.bf16.mxu0 %v3418
        %3697 = vmatpush1.bf16.msra.mxu0 %v3417
        %3698 = vmatprep.subr.bf16.mxu0 %v3478
        %3699 = vmatpush2.bf16.msra.mxu0 %v3477
        %3700 = vmatprep.subr.bf16.mxu0 %v3474
        %3701 = vmatpush2.bf16.msra.mxu0 %v3473
        %3702 = vmatprep.subr.bf16.mxu0 %v3470
        %3703 = vmatpush2.bf16.msra.mxu0 %v3469
        %3704 = vmatprep.subr.bf16.mxu0 %v3466
        %3705 = vmatpush2.bf16.msra.mxu0 %v3465
        %3706 = vmatprep.subr.bf16.mxu0 %v3462
        %3707 = vmatpush2.bf16.msra.mxu0 %v3461
        %3708 = vmatprep.subr.bf16.mxu0 %v3458
        %3709 = vmatpush2.bf16.msra.mxu0 %v3457
        %3710 = vmatprep.subr.bf16.mxu0 %v3454
        %3711 = vmatpush2.bf16.msra.mxu0 %v3453
        %3712 = vmatprep.subr.bf16.mxu0 %v3450
        %3713 = vmatpush2.bf16.msra.mxu0 %v3449
        %3714 = vmatprep.mubr.bf16.mxu0 %v2806
        %3715 = vmatmul.mubr.bf16.gmra.mxu0 %v2805
        %v3716 = vpop.f32.mrf.mxu0
        %v3717 = vadd.f32 %v3644, %v3716
        %v3718 = vpop.f32.mrf.mxu0
        %v3719 = vadd.f32 %v3646, %v3718
        %v3720 = vpop.f32.mrf.mxu0
        %v3721 = vadd.f32 %v3648, %v3720
        %v3722 = vpop.f32.mrf.mxu0
        %v3723 = vadd.f32 %v3650, %v3722
        %3724 = vmatprep.mubr.bf16.mxu0 %v2810
        %3725 = vmatmul.mubr.bf16.gmra.mxu0 %v2809
        %v3726 = vpop.f32.mrf.mxu0
        %v3727 = vadd.f32 %v3654, %v3726
        %v3728 = vpop.f32.mrf.mxu0
        %v3729 = vadd.f32 %v3656, %v3728
        %v3730 = vpop.f32.mrf.mxu0
        %v3731 = vadd.f32 %v3658, %v3730
        %v3732 = vpop.f32.mrf.mxu0
        %v3733 = vadd.f32 %v3660, %v3732
        %3734 = vmatprep.mubr.bf16.mxu0 %v2814
        %3735 = vmatmul.mubr.bf16.gmra.mxu0 %v2813
        %v3736 = vpop.f32.mrf.mxu0
        %v3737 = vadd.f32 %v3664, %v3736
        %v3738 = vpop.f32.mrf.mxu0
        %v3739 = vadd.f32 %v3666, %v3738
        %v3740 = vpop.f32.mrf.mxu0
        %v3741 = vadd.f32 %v3668, %v3740
        %v3742 = vpop.f32.mrf.mxu0
        %v3743 = vadd.f32 %v3670, %v3742
        %3744 = vmatprep.mubr.bf16.mxu0 %v2818
        %3745 = vmatmul.mubr.bf16.gmra.mxu0 %v2817
        %v3746 = vpop.f32.mrf.mxu0
        %v3747 = vadd.f32 %v3674, %v3746
        %v3748 = vpop.f32.mrf.mxu0
        %v3749 = vadd.f32 %v3676, %v3748
        %v3750 = vpop.f32.mrf.mxu0
        %v3751 = vadd.f32 %v3678, %v3750
        %v3752 = vpop.f32.mrf.mxu0
        %v3753 = vadd.f32 %v3680, %v3752
        %3754 = vdwg.mxu0
        %3755 = vmatprep.subr.bf16.mxu0 %v3384
        %3756 = vmatpush1.bf16.msra.mxu0 %v3383
        %3757 = vmatprep.subr.bf16.mxu0 %v3380
        %3758 = vmatpush1.bf16.msra.mxu0 %v3379
        %3759 = vmatprep.subr.bf16.mxu0 %v3376
        %3760 = vmatpush1.bf16.msra.mxu0 %v3375
        %3761 = vmatprep.subr.bf16.mxu0 %v3372
        %3762 = vmatpush1.bf16.msra.mxu0 %v3371
        %3763 = vmatprep.subr.bf16.mxu0 %v3368
        %3764 = vmatpush1.bf16.msra.mxu0 %v3367
        %3765 = vmatprep.subr.bf16.mxu0 %v3364
        %3766 = vmatpush1.bf16.msra.mxu0 %v3363
        %3767 = vmatprep.subr.bf16.mxu0 %v3360
        %3768 = vmatpush1.bf16.msra.mxu0 %v3359
        %3769 = vmatprep.subr.bf16.mxu0 %v3356
        %3770 = vmatpush1.bf16.msra.mxu0 %v3355
        %3771 = vmatprep.subr.bf16.mxu0 %v3416
        %3772 = vmatpush2.bf16.msra.mxu0 %v3415
        %3773 = vmatprep.subr.bf16.mxu0 %v3412
        %3774 = vmatpush2.bf16.msra.mxu0 %v3411
        %3775 = vmatprep.subr.bf16.mxu0 %v3408
        %3776 = vmatpush2.bf16.msra.mxu0 %v3407
        %3777 = vmatprep.subr.bf16.mxu0 %v3404
        %3778 = vmatpush2.bf16.msra.mxu0 %v3403
        %3779 = vmatprep.subr.bf16.mxu0 %v3400
        %3780 = vmatpush2.bf16.msra.mxu0 %v3399
        %3781 = vmatprep.subr.bf16.mxu0 %v3396
        %3782 = vmatpush2.bf16.msra.mxu0 %v3395
        %3783 = vmatprep.subr.bf16.mxu0 %v3392
        %3784 = vmatpush2.bf16.msra.mxu0 %v3391
        %3785 = vmatprep.subr.bf16.mxu0 %v3388
        %3786 = vmatpush2.bf16.msra.mxu0 %v3387
        %3787 = vmatprep.mubr.bf16.mxu0 %v2804
        %3788 = vmatmul.mubr.bf16.gmra.mxu0 %v2803
        %v3789 = vpop.f32.mrf.mxu0
        %v3790 = vadd.f32 %v2960, %v3789
        %v3791 = vpop.f32.mrf.mxu0
        %v3792 = vadd.f32 %v2964, %v3791
        %v3793 = vpop.f32.mrf.mxu0
        %v3794 = vadd.f32 %v2960, %v3793
        %v3795 = vpop.f32.mrf.mxu0
        %v3796 = vadd.f32 %v2964, %v3795
        %3797 = vmatprep.mubr.bf16.mxu0 %v2808
        %3798 = vmatmul.mubr.bf16.gmra.mxu0 %v2807
        %v3799 = vpop.f32.mrf.mxu0
        %v3800 = vadd.f32 %v2960, %v3799
        %v3801 = vpop.f32.mrf.mxu0
        %v3802 = vadd.f32 %v2964, %v3801
        %v3803 = vpop.f32.mrf.mxu0
        %v3804 = vadd.f32 %v2960, %v3803
        %v3805 = vpop.f32.mrf.mxu0
        %v3806 = vadd.f32 %v2964, %v3805
        %3807 = vmatprep.mubr.bf16.mxu0 %v2812
        %3808 = vmatmul.mubr.bf16.gmra.mxu0 %v2811
        %v3809 = vpop.f32.mrf.mxu0
        %v3810 = vadd.f32 %v2960, %v3809
        %v3811 = vpop.f32.mrf.mxu0
        %v3812 = vadd.f32 %v2964, %v3811
        %v3813 = vpop.f32.mrf.mxu0
        %v3814 = vadd.f32 %v2960, %v3813
        %v3815 = vpop.f32.mrf.mxu0
        %v3816 = vadd.f32 %v2964, %v3815
        %3817 = vmatprep.mubr.bf16.mxu0 %v2816
        %3818 = vmatmul.mubr.bf16.gmra.mxu0 %v2815
        %v3819 = vpop.f32.mrf.mxu0
        %v3820 = vadd.f32 %v2960, %v3819
        %v3821 = vpop.f32.mrf.mxu0
        %v3822 = vadd.f32 %v2964, %v3821
        %v3823 = vpop.f32.mrf.mxu0
        %v3824 = vadd.f32 %v2960, %v3823
        %v3825 = vpop.f32.mrf.mxu0
        %v3826 = vadd.f32 %v2964, %v3825
        %3827 = vdwg.mxu0
        %3828 = vmatprep.subr.bf16.mxu0 %v3448
        %3829 = vmatpush1.bf16.msra.mxu0 %v3447
        %3830 = vmatprep.subr.bf16.mxu0 %v3444
        %3831 = vmatpush1.bf16.msra.mxu0 %v3443
        %3832 = vmatprep.subr.bf16.mxu0 %v3440
        %3833 = vmatpush1.bf16.msra.mxu0 %v3439
        %3834 = vmatprep.subr.bf16.mxu0 %v3436
        %3835 = vmatpush1.bf16.msra.mxu0 %v3435
        %3836 = vmatprep.subr.bf16.mxu0 %v3432
        %3837 = vmatpush1.bf16.msra.mxu0 %v3431
        %3838 = vmatprep.subr.bf16.mxu0 %v3428
        %3839 = vmatpush1.bf16.msra.mxu0 %v3427
        %3840 = vmatprep.subr.bf16.mxu0 %v3424
        %3841 = vmatpush1.bf16.msra.mxu0 %v3423
        %3842 = vmatprep.subr.bf16.mxu0 %v3420
        %3843 = vmatpush1.bf16.msra.mxu0 %v3419
        %3844 = vmatprep.subr.bf16.mxu0 %v3480
        %3845 = vmatpush2.bf16.msra.mxu0 %v3479
        %3846 = vmatprep.subr.bf16.mxu0 %v3476
        %3847 = vmatpush2.bf16.msra.mxu0 %v3475
        %3848 = vmatprep.subr.bf16.mxu0 %v3472
        %3849 = vmatpush2.bf16.msra.mxu0 %v3471
        %3850 = vmatprep.subr.bf16.mxu0 %v3468
        %3851 = vmatpush2.bf16.msra.mxu0 %v3467
        %3852 = vmatprep.subr.bf16.mxu0 %v3464
        %3853 = vmatpush2.bf16.msra.mxu0 %v3463
        %3854 = vmatprep.subr.bf16.mxu0 %v3460
        %3855 = vmatpush2.bf16.msra.mxu0 %v3459
        %3856 = vmatprep.subr.bf16.mxu0 %v3456
        %3857 = vmatpush2.bf16.msra.mxu0 %v3455
        %3858 = vmatprep.subr.bf16.mxu0 %v3452
        %3859 = vmatpush2.bf16.msra.mxu0 %v3451
        %3860 = vmatprep.mubr.bf16.mxu0 %v2806
        %3861 = vmatmul.mubr.bf16.gmra.mxu0 %v2805
        %v3862 = vpop.f32.mrf.mxu0
        %v3863 = vadd.f32 %v3790, %v3862
        %v3864 = vpop.f32.mrf.mxu0
        %v3865 = vadd.f32 %v3792, %v3864
        %v3866 = vpop.f32.mrf.mxu0
        %v3867 = vadd.f32 %v3794, %v3866
        %v3868 = vpop.f32.mrf.mxu0
        %v3869 = vadd.f32 %v3796, %v3868
        %3870 = vmatprep.mubr.bf16.mxu0 %v2810
        %3871 = vmatmul.mubr.bf16.gmra.mxu0 %v2809
        %v3872 = vpop.f32.mrf.mxu0
        %v3873 = vadd.f32 %v3800, %v3872
        %v3874 = vpop.f32.mrf.mxu0
        %v3875 = vadd.f32 %v3802, %v3874
        %v3876 = vpop.f32.mrf.mxu0
        %v3877 = vadd.f32 %v3804, %v3876
        %v3878 = vpop.f32.mrf.mxu0
        %v3879 = vadd.f32 %v3806, %v3878
        %3880 = vmatprep.mubr.bf16.mxu0 %v2814
        %3881 = vmatmul.mubr.bf16.gmra.mxu0 %v2813
        %v3882 = vpop.f32.mrf.mxu0
        %v3883 = vadd.f32 %v3810, %v3882
        %v3884 = vpop.f32.mrf.mxu0
        %v3885 = vadd.f32 %v3812, %v3884
        %v3886 = vpop.f32.mrf.mxu0
        %v3887 = vadd.f32 %v3814, %v3886
        %v3888 = vpop.f32.mrf.mxu0
        %v3889 = vadd.f32 %v3816, %v3888
        %3890 = vmatprep.mubr.bf16.mxu0 %v2818
        %3891 = vmatmul.mubr.bf16.gmra.mxu0 %v2817
        %v3892 = vpop.f32.mrf.mxu0
        %v3893 = vadd.f32 %v3820, %v3892
        %v3894 = vpop.f32.mrf.mxu0
        %v3895 = vadd.f32 %v3822, %v3894
        %v3896 = vpop.f32.mrf.mxu0
        %v3897 = vadd.f32 %v3824, %v3896
        %v3898 = vpop.f32.mrf.mxu0
        %v3899 = vadd.f32 %v3826, %v3898
        %3900 = vdwg.mxu0
        %v3901 = vtanh.pop %v3717
        %v3902 = vtanh.pop %v3719
        %v3903 = vtanh.pop %v3721
        %v3904 = vtanh.pop %v3723
        %v3905 = vtanh.pop %v3727
        %v3906 = vtanh.pop %v3729
        %v3907 = vtanh.pop %v3731
        %v3908 = vtanh.pop %v3733
        %v3909 = vtanh.pop %v3737
        %v3910 = vtanh.pop %v3739
        %v3911 = vtanh.pop %v3741
        %v3912 = vtanh.pop %v3743
        %v3913 = vtanh.pop %v3747
        %v3914 = vtanh.pop %v3749
        %v3915 = vtanh.pop %v3751
        %v3916 = vtanh.pop %v3753
        %v3917 = vxor.u32 %v3863, 2147483648
        %v3918 = vxor.u32 %v3865, 2147483648
        %v3919 = vxor.u32 %v3867, 2147483648
        %v3920 = vxor.u32 %v3869, 2147483648
        %v3921 = vxor.u32 %v3873, 2147483648
        %v3922 = vxor.u32 %v3875, 2147483648
        %v3923 = vxor.u32 %v3877, 2147483648
        %v3924 = vxor.u32 %v3879, 2147483648
        %v3925 = vxor.u32 %v3883, 2147483648
        %v3926 = vxor.u32 %v3885, 2147483648
        %v3927 = vxor.u32 %v3887, 2147483648
        %v3928 = vxor.u32 %v3889, 2147483648
        %v3929 = vxor.u32 %v3893, 2147483648
        %v3930 = vxor.u32 %v3895, 2147483648
        %v3931 = vxor.u32 %v3897, 2147483648
        %v3932 = vxor.u32 %v3899, 2147483648
        %v3933 = vmul.f32 %v3917, 1.442695
        %v3934 = vpow.pop %v3933
        %v3935 = vmul.f32 %v3918, 1.442695
        %v3936 = vpow.pop %v3935
        %v3937 = vmul.f32 %v3919, 1.442695
        %v3938 = vpow.pop %v3937
        %v3939 = vmul.f32 %v3920, 1.442695
        %v3940 = vpow.pop %v3939
        %v3941 = vmul.f32 %v3921, 1.442695
        %v3942 = vpow.pop %v3941
        %v3943 = vmul.f32 %v3922, 1.442695
        %v3944 = vpow.pop %v3943
        %v3945 = vmul.f32 %v3923, 1.442695
        %v3946 = vpow.pop %v3945
        %v3947 = vmul.f32 %v3924, 1.442695
        %v3948 = vpow.pop %v3947
        %v3949 = vmul.f32 %v3925, 1.442695
        %v3950 = vpow.pop %v3949
        %v3951 = vmul.f32 %v3926, 1.442695
        %v3952 = vpow.pop %v3951
        %v3953 = vmul.f32 %v3927, 1.442695
        %v3954 = vpow.pop %v3953
        %v3955 = vmul.f32 %v3928, 1.442695
        %v3956 = vpow.pop %v3955
        %v3957 = vmul.f32 %v3929, 1.442695
        %v3958 = vpow.pop %v3957
        %v3959 = vmul.f32 %v3930, 1.442695
        %v3960 = vpow.pop %v3959
        %v3961 = vmul.f32 %v3931, 1.442695
        %v3962 = vpow.pop %v3961
        %v3963 = vmul.f32 %v3932, 1.442695
        %v3964 = vpow.pop %v3963
        %v3965 = vadd.f32 %v3934, 1.0
        %v3966 = vadd.f32 %v3936, 1.0
        %v3967 = vadd.f32 %v3938, 1.0
        %v3968 = vadd.f32 %v3940, 1.0
        %v3969 = vadd.f32 %v3942, 1.0
        %v3970 = vadd.f32 %v3944, 1.0
        %v3971 = vadd.f32 %v3946, 1.0
        %v3972 = vadd.f32 %v3948, 1.0
        %v3973 = vadd.f32 %v3950, 1.0
        %v3974 = vadd.f32 %v3952, 1.0
        %v3975 = vadd.f32 %v3954, 1.0
        %v3976 = vadd.f32 %v3956, 1.0
        %v3977 = vadd.f32 %v3958, 1.0
        %v3978 = vadd.f32 %v3960, 1.0
        %v3979 = vadd.f32 %v3962, 1.0
        %v3980 = vadd.f32 %v3964, 1.0
        %v3981 = vrcp.pop %v3965
        %v3982 = vmul.f32 1.0, %v3981
        %v3983 = vrcp.pop %v3966
        %v3984 = vmul.f32 1.0, %v3983
        %v3985 = vrcp.pop %v3967
        %v3986 = vmul.f32 1.0, %v3985
        %v3987 = vrcp.pop %v3968
        %v3988 = vmul.f32 1.0, %v3987
        %v3989 = vrcp.pop %v3969
        %v3990 = vmul.f32 1.0, %v3989
        %v3991 = vrcp.pop %v3970
        %v3992 = vmul.f32 1.0, %v3991
        %v3993 = vrcp.pop %v3971
        %v3994 = vmul.f32 1.0, %v3993
        %v3995 = vrcp.pop %v3972
        %v3996 = vmul.f32 1.0, %v3995
        %v3997 = vrcp.pop %v3973
        %v3998 = vmul.f32 1.0, %v3997
        %v3999 = vrcp.pop %v3974
        %v4000 = vmul.f32 1.0, %v3999
        %v4001 = vrcp.pop %v3975
        %v4002 = vmul.f32 1.0, %v4001
        %v4003 = vrcp.pop %v3976
        %v4004 = vmul.f32 1.0, %v4003
        %v4005 = vrcp.pop %v3977
        %v4006 = vmul.f32 1.0, %v4005
        %v4007 = vrcp.pop %v3978
        %v4008 = vmul.f32 1.0, %v4007
        %v4009 = vrcp.pop %v3979
        %v4010 = vmul.f32 1.0, %v4009
        %v4011 = vrcp.pop %v3980
        %v4012 = vmul.f32 1.0, %v4011
        %v4013 = vmul.f32 %v3901, %v3982
        %v4014 = vmul.f32 %v3902, %v3984
        %v4015 = vmul.f32 %v3903, %v3986
        %v4016 = vmul.f32 %v3904, %v3988
        %v4017 = vmul.f32 %v3905, %v3990
        %v4018 = vmul.f32 %v3906, %v3992
        %v4019 = vmul.f32 %v3907, %v3994
        %v4020 = vmul.f32 %v3908, %v3996
        %v4021 = vmul.f32 %v3909, %v3998
        %v4022 = vmul.f32 %v3910, %v4000
        %v4023 = vmul.f32 %v3911, %v4002
        %v4024 = vmul.f32 %v3912, %v4004
        %v4025 = vmul.f32 %v3913, %v4006
        %v4026 = vmul.f32 %v3914, %v4008
        %v4027 = vmul.f32 %v3915, %v4010
        %v4028 = vmul.f32 %v3916, %v4012
        %v4029 = vld [vmem:[#allocation9] sm:$0x3]
        %v4031 = vlaneseq
        %v4032 = vshrl.u32 %v4031, 7
        %v4033 = vsub.s32 0, %v4032
        %v4034 = vrot.slane %v4029, %v4033
        %v4035 = vlaneseq
        %v4036 = vshrl.u32 %v4035, 7
        %v4037 = vsub.s32 1, %v4036
        %v4038 = vrot.slane %v4029, %v4037
        %v4041 = vmul.f32 %v4013, %v4034
        %v4042 = vmul.f32 %v4014, %v4038
        %v4043 = vmul.f32 %v4015, %v4034
        %v4044 = vmul.f32 %v4016, %v4038
        %v4045 = vmul.f32 %v4017, %v4034
        %v4046 = vmul.f32 %v4018, %v4038
        %v4047 = vmul.f32 %v4019, %v4034
        %v4048 = vmul.f32 %v4020, %v4038
        %v4049 = vmul.f32 %v4021, %v4034
        %v4050 = vmul.f32 %v4022, %v4038
        %v4051 = vmul.f32 %v4023, %v4034
        %v4052 = vmul.f32 %v4024, %v4038
        %v4053 = vmul.f32 %v4025, %v4034
        %v4054 = vmul.f32 %v4026, %v4038
        %v4055 = vmul.f32 %v4027, %v4034
        %v4056 = vmul.f32 %v4028, %v4038
        %v4057 = vadd.f32 %v4041, %v4042
        %4058 = vadd.xlane.f32.xlu0 %v4057
        %v4059 = vpop.xlane.xlu0 %4058
        %v4060 = vadd.f32 %v4043, %v4044
        %4061 = vadd.xlane.f32.xlu0 %v4060
        %v4062 = vpop.xlane.xlu0 %4061
        %v4063 = vadd.f32 %v4045, %v4046
        %4064 = vadd.xlane.f32.xlu0 %v4063
        %v4065 = vpop.xlane.xlu0 %4064
        %v4066 = vadd.f32 %v4047, %v4048
        %4067 = vadd.xlane.f32.xlu0 %v4066
        %v4068 = vpop.xlane.xlu0 %4067
        %v4069 = vadd.f32 %v4049, %v4050
        %4070 = vadd.xlane.f32.xlu0 %v4069
        %v4071 = vpop.xlane.xlu0 %4070
        %v4072 = vadd.f32 %v4051, %v4052
        %4073 = vadd.xlane.f32.xlu0 %v4072
        %v4074 = vpop.xlane.xlu0 %4073
        %v4075 = vadd.f32 %v4053, %v4054
        %4076 = vadd.xlane.f32.xlu0 %v4075
        %v4077 = vpop.xlane.xlu0 %4076
        %v4078 = vadd.f32 %v4055, %v4056
        %4079 = vadd.xlane.f32.xlu0 %v4078
        %v4080 = vpop.xlane.xlu0 %4079
        %v4081 = vld [vmem:[#allocation2] sm:$0x1]
        %v4083 = vlaneseq
        %v4084 = vshrl.u32 %v4083, 7
        %v4085 = vsub.s32 0, %v4084
        %v4086 = vrot.slane %v4081, %v4085
        %4087 = vset.pattern.permute.xlu0 0
        %4088 = vperm.xlu0 %4087, %v4086
        %v4089 = vpop.permute.xlu0 %4088
        %v4091 = vadd.f32 %v4059, %v4089
        %v4092 = vadd.f32 %v4062, %v4089
        %v4093 = vadd.f32 %v4065, %v4089
        %v4094 = vadd.f32 %v4068, %v4089
        %v4095 = vadd.f32 %v4071, %v4089
        %v4096 = vadd.f32 %v4074, %v4089
        %v4097 = vadd.f32 %v4077, %v4089
        %v4098 = vadd.f32 %v4080, %v4089
        %v4107 = vlaneseq
        %v4108 = vand.u32 %v4107, 127
        %v4109 = vlaneseq
        %v4110 = vshrl.u32 %v4109, 7
        %v4111 = vsub.s32 %v4108, %v4110
        %v4112 = vrot.slane %v4091, %v4111
        %v4113 = vlaneseq
        %v4114 = vshrl.u32 %v4113, 7
        %v4115 = vsub.s32 %v4108, %v4114
        %v4116 = vrot.slane %v4092, %v4115
        %v4117 = vlaneseq
        %v4118 = vshrl.u32 %v4117, 7
        %v4119 = vsub.s32 %v4108, %v4118
        %v4120 = vrot.slane %v4093, %v4119
        %v4121 = vlaneseq
        %v4122 = vshrl.u32 %v4121, 7
        %v4123 = vsub.s32 %v4108, %v4122
        %v4124 = vrot.slane %v4094, %v4123
        %v4125 = vlaneseq
        %v4126 = vshrl.u32 %v4125, 7
        %v4127 = vsub.s32 %v4108, %v4126
        %v4128 = vrot.slane %v4095, %v4127
        %v4129 = vlaneseq
        %v4130 = vshrl.u32 %v4129, 7
        %v4131 = vsub.s32 %v4108, %v4130
        %v4132 = vrot.slane %v4096, %v4131
        %v4133 = vlaneseq
        %v4134 = vshrl.u32 %v4133, 7
        %v4135 = vsub.s32 %v4108, %v4134
        %v4136 = vrot.slane %v4097, %v4135
        %v4137 = vlaneseq
        %v4138 = vshrl.u32 %v4137, 7
        %v4139 = vsub.s32 %v4108, %v4138
        %v4140 = vrot.slane %v4098, %v4139
        %vm4141 = vcmask 1041409
        %v4142 = vsel %vm4141, %v4116, %v4112
        %vm4143 = vcmask 1042434
        %v4144 = vsel %vm4143, %v4120, %v4142
        %vm4145 = vcmask 1043459
        %v4146 = vsel %vm4145, %v4124, %v4144
        %vm4147 = vcmask 1044484
        %v4148 = vsel %vm4147, %v4128, %v4146
        %vm4149 = vcmask 1045509
        %v4150 = vsel %vm4149, %v4132, %v4148
        %vm4151 = vcmask 1046534
        %v4152 = vsel %vm4151, %v4136, %v4150
        %vm4153 = vcmask 1047559
        %v4154 = vsel %vm4153, %v4140, %v4152
        %vm4156 = vcmask 64512
        %v4157 = vsel %vm4156, %v4154, -inf
        %4158 = vmax.xlane.f32.xlu0 %v4157
        %v4159 = vpop.xlane.xlu0 %4158
        %v4161 = vlaneseq
        %v4162 = vshrl.u32 %v4161, 7
        %v4163 = vsub.s32 0, %v4162
        %v4164 = vrot.slane %v4159, %v4163
        %v4165 = vlaneseq
        %v4166 = vshrl.u32 %v4165, 7
        %v4167 = vsub.s32 1, %v4166
        %v4168 = vrot.slane %v4159, %v4167
        %v4169 = vlaneseq
        %v4170 = vshrl.u32 %v4169, 7
        %v4171 = vsub.s32 2, %v4170
        %v4172 = vrot.slane %v4159, %v4171
        %v4173 = vlaneseq
        %v4174 = vshrl.u32 %v4173, 7
        %v4175 = vsub.s32 3, %v4174
        %v4176 = vrot.slane %v4159, %v4175
        %v4177 = vlaneseq
        %v4178 = vshrl.u32 %v4177, 7
        %v4179 = vsub.s32 4, %v4178
        %v4180 = vrot.slane %v4159, %v4179
        %v4181 = vlaneseq
        %v4182 = vshrl.u32 %v4181, 7
        %v4183 = vsub.s32 5, %v4182
        %v4184 = vrot.slane %v4159, %v4183
        %v4185 = vlaneseq
        %v4186 = vshrl.u32 %v4185, 7
        %v4187 = vsub.s32 6, %v4186
        %v4188 = vrot.slane %v4159, %v4187
        %v4189 = vlaneseq
        %v4190 = vshrl.u32 %v4189, 7
        %v4191 = vsub.s32 7, %v4190
        %v4192 = vrot.slane %v4159, %v4191
        %v4201 = vsub.f32 %v4091, %v4164
        %v4202 = vsub.f32 %v4092, %v4168
        %v4203 = vsub.f32 %v4093, %v4172
        %v4204 = vsub.f32 %v4094, %v4176
        %v4205 = vsub.f32 %v4095, %v4180
        %v4206 = vsub.f32 %v4096, %v4184
        %v4207 = vsub.f32 %v4097, %v4188
        %v4208 = vsub.f32 %v4098, %v4192
        %v4209 = vmul.f32 %v4201, 1.442695
        %v4210 = vpow.pop %v4209
        %v4211 = vmul.f32 %v4202, 1.442695
        %v4212 = vpow.pop %v4211
        %v4213 = vmul.f32 %v4203, 1.442695
        %v4214 = vpow.pop %v4213
        %v4215 = vmul.f32 %v4204, 1.442695
        %v4216 = vpow.pop %v4215
        %v4217 = vmul.f32 %v4205, 1.442695
        %v4218 = vpow.pop %v4217
        %v4219 = vmul.f32 %v4206, 1.442695
        %v4220 = vpow.pop %v4219
        %v4221 = vmul.f32 %v4207, 1.442695
        %v4222 = vpow.pop %v4221
        %v4223 = vmul.f32 %v4208, 1.442695
        %v4224 = vpow.pop %v4223
        %4233 = vset.pattern.permute.xlu0 0
        %4234 = vperm.xlu0 %4233, %v4210
        %v4235 = vpop.permute.xlu0 %4234
        %4236 = vset.pattern.permute.xlu0 0
        %4237 = vperm.xlu0 %4236, %v4212
        %v4238 = vpop.permute.xlu0 %4237
        %4239 = vset.pattern.permute.xlu0 0
        %4240 = vperm.xlu0 %4239, %v4214
        %v4241 = vpop.permute.xlu0 %4240
        %4242 = vset.pattern.permute.xlu0 0
        %4243 = vperm.xlu0 %4242, %v4216
        %v4244 = vpop.permute.xlu0 %4243
        %4245 = vset.pattern.permute.xlu0 0
        %4246 = vperm.xlu0 %4245, %v4218
        %v4247 = vpop.permute.xlu0 %4246
        %4248 = vset.pattern.permute.xlu0 0
        %4249 = vperm.xlu0 %4248, %v4220
        %v4250 = vpop.permute.xlu0 %4249
        %4251 = vset.pattern.permute.xlu0 0
        %4252 = vperm.xlu0 %4251, %v4222
        %v4253 = vpop.permute.xlu0 %4252
        %4254 = vset.pattern.permute.xlu0 0
        %4255 = vperm.xlu0 %4254, %v4224
        %v4256 = vpop.permute.xlu0 %4255
        %v4257 = vlaneseq
        %v4258 = vshrl.u32 %v4257, 7
        %v4259 = vsub.s32 %v4108, %v4258
        %v4260 = vrot.slane %v4235, %v4259
        %v4261 = vlaneseq
        %v4262 = vshrl.u32 %v4261, 7
        %v4263 = vsub.s32 %v4108, %v4262
        %v4264 = vrot.slane %v4238, %v4263
        %v4265 = vlaneseq
        %v4266 = vshrl.u32 %v4265, 7
        %v4267 = vsub.s32 %v4108, %v4266
        %v4268 = vrot.slane %v4241, %v4267
        %v4269 = vlaneseq
        %v4270 = vshrl.u32 %v4269, 7
        %v4271 = vsub.s32 %v4108, %v4270
        %v4272 = vrot.slane %v4244, %v4271
        %v4273 = vlaneseq
        %v4274 = vshrl.u32 %v4273, 7
        %v4275 = vsub.s32 %v4108, %v4274
        %v4276 = vrot.slane %v4247, %v4275
        %v4277 = vlaneseq
        %v4278 = vshrl.u32 %v4277, 7
        %v4279 = vsub.s32 %v4108, %v4278
        %v4280 = vrot.slane %v4250, %v4279
        %v4281 = vlaneseq
        %v4282 = vshrl.u32 %v4281, 7
        %v4283 = vsub.s32 %v4108, %v4282
        %v4284 = vrot.slane %v4253, %v4283
        %v4285 = vlaneseq
        %v4286 = vshrl.u32 %v4285, 7
        %v4287 = vsub.s32 %v4108, %v4286
        %v4288 = vrot.slane %v4256, %v4287
        %v4289 = vsel %vm4141, %v4264, %v4260
        %v4290 = vsel %vm4143, %v4268, %v4289
        %v4291 = vsel %vm4145, %v4272, %v4290
        %v4292 = vsel %vm4147, %v4276, %v4291
        %v4293 = vsel %vm4149, %v4280, %v4292
        %v4294 = vsel %vm4151, %v4284, %v4293
        %v4295 = vsel %vm4153, %v4288, %v4294
        %v4297 = vsel %vm4156, %v4295, 0.0
        %4298 = vadd.xlane.f32.xlu0 %v4297
        %v4299 = vpop.xlane.xlu0 %4298
        %v4300 = vrcp.pop %v4299
        %v4302 = vlaneseq
        %v4303 = vshrl.u32 %v4302, 7
        %v4304 = vsub.s32 0, %v4303
        %v4305 = vrot.slane %v4300, %v4304
        %v4306 = vlaneseq
        %v4307 = vshrl.u32 %v4306, 7
        %v4308 = vsub.s32 1, %v4307
        %v4309 = vrot.slane %v4300, %v4308
        %v4310 = vlaneseq
        %v4311 = vshrl.u32 %v4310, 7
        %v4312 = vsub.s32 2, %v4311
        %v4313 = vrot.slane %v4300, %v4312
        %v4314 = vlaneseq
        %v4315 = vshrl.u32 %v4314, 7
        %v4316 = vsub.s32 3, %v4315
        %v4317 = vrot.slane %v4300, %v4316
        %v4318 = vlaneseq
        %v4319 = vshrl.u32 %v4318, 7
        %v4320 = vsub.s32 4, %v4319
        %v4321 = vrot.slane %v4300, %v4320
        %v4322 = vlaneseq
        %v4323 = vshrl.u32 %v4322, 7
        %v4324 = vsub.s32 5, %v4323
        %v4325 = vrot.slane %v4300, %v4324
        %v4326 = vlaneseq
        %v4327 = vshrl.u32 %v4326, 7
        %v4328 = vsub.s32 6, %v4327
        %v4329 = vrot.slane %v4300, %v4328
        %v4330 = vlaneseq
        %v4331 = vshrl.u32 %v4330, 7
        %v4332 = vsub.s32 7, %v4331
        %v4333 = vrot.slane %v4300, %v4332
        %v4342 = vmul.f32 %v4210, %v4305
        %v4343 = vmul.f32 %v4212, %v4309
        %v4344 = vmul.f32 %v4214, %v4313
        %v4345 = vmul.f32 %v4216, %v4317
        %v4346 = vmul.f32 %v4218, %v4321
        %v4347 = vmul.f32 %v4220, %v4325
        %v4348 = vmul.f32 %v4222, %v4329
        %v4349 = vmul.f32 %v4224, %v4333
        %4351 = vset.pattern.permute.xlu0 0
        %4352 = vperm.xlu0 %4351, %v4342
        %v4353 = vpop.permute.xlu0 %4352
        %4356 = vset.pattern.permute.xlu0 0
        %4357 = vperm.xlu0 %4356, %v4343
        %v4358 = vpop.permute.xlu0 %4357
        %4361 = vset.pattern.permute.xlu0 0
        %4362 = vperm.xlu0 %4361, %v4344
        %v4363 = vpop.permute.xlu0 %4362
        %4366 = vset.pattern.permute.xlu0 0
        %4367 = vperm.xlu0 %4366, %v4345
        %v4368 = vpop.permute.xlu0 %4367
        %4371 = vset.pattern.permute.xlu0 0
        %4372 = vperm.xlu0 %4371, %v4346
        %v4373 = vpop.permute.xlu0 %4372
        %4376 = vset.pattern.permute.xlu0 0
        %4377 = vperm.xlu0 %4376, %v4347
        %v4378 = vpop.permute.xlu0 %4377
        %4381 = vset.pattern.permute.xlu0 0
        %4382 = vperm.xlu0 %4381, %v4348
        %v4383 = vpop.permute.xlu0 %4382
        %4386 = vset.pattern.permute.xlu0 0
        %4387 = vperm.xlu0 %4386, %v4349
        %v4388 = vpop.permute.xlu0 %4387
        %v4390 = vmul.f32 %v4353, %v2771
        %v4391 = vmul.f32 %v4353, %v2772
        %v4392 = vmul.f32 %v4353, %v2773
        %v4393 = vmul.f32 %v4353, %v2774
        %v4394 = vmul.f32 %v4358, %v2775
        %v4395 = vmul.f32 %v4358, %v2776
        %v4396 = vmul.f32 %v4358, %v2777
        %v4397 = vmul.f32 %v4358, %v2778
        %v4398 = vmul.f32 %v4363, %v2779
        %v4399 = vmul.f32 %v4363, %v2780
        %v4400 = vmul.f32 %v4363, %v2781
        %v4401 = vmul.f32 %v4363, %v2782
        %v4402 = vmul.f32 %v4368, %v2783
        %v4403 = vmul.f32 %v4368, %v2784
        %v4404 = vmul.f32 %v4368, %v2785
        %v4405 = vmul.f32 %v4368, %v2786
        %v4406 = vmul.f32 %v4373, %v2787
        %v4407 = vmul.f32 %v4373, %v2788
        %v4408 = vmul.f32 %v4373, %v2789
        %v4409 = vmul.f32 %v4373, %v2790
        %v4410 = vmul.f32 %v4378, %v2791
        %v4411 = vmul.f32 %v4378, %v2792
        %v4412 = vmul.f32 %v4378, %v2793
        %v4413 = vmul.f32 %v4378, %v2794
        %v4414 = vmul.f32 %v4383, %v2795
        %v4415 = vmul.f32 %v4383, %v2796
        %v4416 = vmul.f32 %v4383, %v2797
        %v4417 = vmul.f32 %v4383, %v2798
        %v4418 = vmul.f32 %v4388, %v2799
        %v4419 = vmul.f32 %v4388, %v2800
        %v4420 = vmul.f32 %v4388, %v2801
        %v4421 = vmul.f32 %v4388, %v2802
        %v4422 = vrot.slane %v4390, 4
        %v4423 = vadd.f32 %v4390, %v4422
        %v4424 = vrot.slane %v4423, 2
        %v4425 = vadd.f32 %v4423, %v4424
        %v4426 = vrot.slane %v4425, 1
        %v4427 = vadd.f32 %v4425, %v4426
        %v4428 = vrot.slane %v4391, 4
        %v4429 = vadd.f32 %v4391, %v4428
        %v4430 = vrot.slane %v4429, 2
        %v4431 = vadd.f32 %v4429, %v4430
        %v4432 = vrot.slane %v4431, 1
        %v4433 = vadd.f32 %v4431, %v4432
        %v4434 = vrot.slane %v4392, 4
        %v4435 = vadd.f32 %v4392, %v4434
        %v4436 = vrot.slane %v4435, 2
        %v4437 = vadd.f32 %v4435, %v4436
        %v4438 = vrot.slane %v4437, 1
        %v4439 = vadd.f32 %v4437, %v4438
        %v4440 = vrot.slane %v4393, 4
        %v4441 = vadd.f32 %v4393, %v4440
        %v4442 = vrot.slane %v4441, 2
        %v4443 = vadd.f32 %v4441, %v4442
        %v4444 = vrot.slane %v4443, 1
        %v4445 = vadd.f32 %v4443, %v4444
        %v4446 = vrot.slane %v4394, 4
        %v4447 = vadd.f32 %v4394, %v4446
        %v4448 = vrot.slane %v4447, 2
        %v4449 = vadd.f32 %v4447, %v4448
        %v4450 = vrot.slane %v4449, 1
        %v4451 = vadd.f32 %v4449, %v4450
        %v4452 = vrot.slane %v4395, 4
        %v4453 = vadd.f32 %v4395, %v4452
        %v4454 = vrot.slane %v4453, 2
        %v4455 = vadd.f32 %v4453, %v4454
        %v4456 = vrot.slane %v4455, 1
        %v4457 = vadd.f32 %v4455, %v4456
        %v4458 = vrot.slane %v4396, 4
        %v4459 = vadd.f32 %v4396, %v4458
        %v4460 = vrot.slane %v4459, 2
        %v4461 = vadd.f32 %v4459, %v4460
        %v4462 = vrot.slane %v4461, 1
        %v4463 = vadd.f32 %v4461, %v4462
        %v4464 = vrot.slane %v4397, 4
        %v4465 = vadd.f32 %v4397, %v4464
        %v4466 = vrot.slane %v4465, 2
        %v4467 = vadd.f32 %v4465, %v4466
        %v4468 = vrot.slane %v4467, 1
        %v4469 = vadd.f32 %v4467, %v4468
        %v4470 = vrot.slane %v4398, 4
        %v4471 = vadd.f32 %v4398, %v4470
        %v4472 = vrot.slane %v4471, 2
        %v4473 = vadd.f32 %v4471, %v4472
        %v4474 = vrot.slane %v4473, 1
        %v4475 = vadd.f32 %v4473, %v4474
        %v4476 = vrot.slane %v4399, 4
        %v4477 = vadd.f32 %v4399, %v4476
        %v4478 = vrot.slane %v4477, 2
        %v4479 = vadd.f32 %v4477, %v4478
        %v4480 = vrot.slane %v4479, 1
        %v4481 = vadd.f32 %v4479, %v4480
        %v4482 = vrot.slane %v4400, 4
        %v4483 = vadd.f32 %v4400, %v4482
        %v4484 = vrot.slane %v4483, 2
        %v4485 = vadd.f32 %v4483, %v4484
        %v4486 = vrot.slane %v4485, 1
        %v4487 = vadd.f32 %v4485, %v4486
        %v4488 = vrot.slane %v4401, 4
        %v4489 = vadd.f32 %v4401, %v4488
        %v4490 = vrot.slane %v4489, 2
        %v4491 = vadd.f32 %v4489, %v4490
        %v4492 = vrot.slane %v4491, 1
        %v4493 = vadd.f32 %v4491, %v4492
        %v4494 = vrot.slane %v4402, 4
        %v4495 = vadd.f32 %v4402, %v4494
        %v4496 = vrot.slane %v4495, 2
        %v4497 = vadd.f32 %v4495, %v4496
        %v4498 = vrot.slane %v4497, 1
        %v4499 = vadd.f32 %v4497, %v4498
        %v4500 = vrot.slane %v4403, 4
        %v4501 = vadd.f32 %v4403, %v4500
        %v4502 = vrot.slane %v4501, 2
        %v4503 = vadd.f32 %v4501, %v4502
        %v4504 = vrot.slane %v4503, 1
        %v4505 = vadd.f32 %v4503, %v4504
        %v4506 = vrot.slane %v4404, 4
        %v4507 = vadd.f32 %v4404, %v4506
        %v4508 = vrot.slane %v4507, 2
        %v4509 = vadd.f32 %v4507, %v4508
        %v4510 = vrot.slane %v4509, 1
        %v4511 = vadd.f32 %v4509, %v4510
        %v4512 = vrot.slane %v4405, 4
        %v4513 = vadd.f32 %v4405, %v4512
        %v4514 = vrot.slane %v4513, 2
        %v4515 = vadd.f32 %v4513, %v4514
        %v4516 = vrot.slane %v4515, 1
        %v4517 = vadd.f32 %v4515, %v4516
        %v4518 = vrot.slane %v4406, 4
        %v4519 = vadd.f32 %v4406, %v4518
        %v4520 = vrot.slane %v4519, 2
        %v4521 = vadd.f32 %v4519, %v4520
        %v4522 = vrot.slane %v4521, 1
        %v4523 = vadd.f32 %v4521, %v4522
        %v4524 = vrot.slane %v4407, 4
        %v4525 = vadd.f32 %v4407, %v4524
        %v4526 = vrot.slane %v4525, 2
        %v4527 = vadd.f32 %v4525, %v4526
        %v4528 = vrot.slane %v4527, 1
        %v4529 = vadd.f32 %v4527, %v4528
        %v4530 = vrot.slane %v4408, 4
        %v4531 = vadd.f32 %v4408, %v4530
        %v4532 = vrot.slane %v4531, 2
        %v4533 = vadd.f32 %v4531, %v4532
        %v4534 = vrot.slane %v4533, 1
        %v4535 = vadd.f32 %v4533, %v4534
        %v4536 = vrot.slane %v4409, 4
        %v4537 = vadd.f32 %v4409, %v4536
        %v4538 = vrot.slane %v4537, 2
        %v4539 = vadd.f32 %v4537, %v4538
        %v4540 = vrot.slane %v4539, 1
        %v4541 = vadd.f32 %v4539, %v4540
        %v4542 = vrot.slane %v4410, 4
        %v4543 = vadd.f32 %v4410, %v4542
        %v4544 = vrot.slane %v4543, 2
        %v4545 = vadd.f32 %v4543, %v4544
        %v4546 = vrot.slane %v4545, 1
        %v4547 = vadd.f32 %v4545, %v4546
        %v4548 = vrot.slane %v4411, 4
        %v4549 = vadd.f32 %v4411, %v4548
        %v4550 = vrot.slane %v4549, 2
        %v4551 = vadd.f32 %v4549, %v4550
        %v4552 = vrot.slane %v4551, 1
        %v4553 = vadd.f32 %v4551, %v4552
        %v4554 = vrot.slane %v4412, 4
        %v4555 = vadd.f32 %v4412, %v4554
        %v4556 = vrot.slane %v4555, 2
        %v4557 = vadd.f32 %v4555, %v4556
        %v4558 = vrot.slane %v4557, 1
        %v4559 = vadd.f32 %v4557, %v4558
        %v4560 = vrot.slane %v4413, 4
        %v4561 = vadd.f32 %v4413, %v4560
        %v4562 = vrot.slane %v4561, 2
        %v4563 = vadd.f32 %v4561, %v4562
        %v4564 = vrot.slane %v4563, 1
        %v4565 = vadd.f32 %v4563, %v4564
        %v4566 = vrot.slane %v4414, 4
        %v4567 = vadd.f32 %v4414, %v4566
        %v4568 = vrot.slane %v4567, 2
        %v4569 = vadd.f32 %v4567, %v4568
        %v4570 = vrot.slane %v4569, 1
        %v4571 = vadd.f32 %v4569, %v4570
        %v4572 = vrot.slane %v4415, 4
        %v4573 = vadd.f32 %v4415, %v4572
        %v4574 = vrot.slane %v4573, 2
        %v4575 = vadd.f32 %v4573, %v4574
        %v4576 = vrot.slane %v4575, 1
        %v4577 = vadd.f32 %v4575, %v4576
        %v4578 = vrot.slane %v4416, 4
        %v4579 = vadd.f32 %v4416, %v4578
        %v4580 = vrot.slane %v4579, 2
        %v4581 = vadd.f32 %v4579, %v4580
        %v4582 = vrot.slane %v4581, 1
        %v4583 = vadd.f32 %v4581, %v4582
        %v4584 = vrot.slane %v4417, 4
        %v4585 = vadd.f32 %v4417, %v4584
        %v4586 = vrot.slane %v4585, 2
        %v4587 = vadd.f32 %v4585, %v4586
        %v4588 = vrot.slane %v4587, 1
        %v4589 = vadd.f32 %v4587, %v4588
        %v4590 = vrot.slane %v4418, 4
        %v4591 = vadd.f32 %v4418, %v4590
        %v4592 = vrot.slane %v4591, 2
        %v4593 = vadd.f32 %v4591, %v4592
        %v4594 = vrot.slane %v4593, 1
        %v4595 = vadd.f32 %v4593, %v4594
        %v4596 = vrot.slane %v4419, 4
        %v4597 = vadd.f32 %v4419, %v4596
        %v4598 = vrot.slane %v4597, 2
        %v4599 = vadd.f32 %v4597, %v4598
        %v4600 = vrot.slane %v4599, 1
        %v4601 = vadd.f32 %v4599, %v4600
        %v4602 = vrot.slane %v4420, 4
        %v4603 = vadd.f32 %v4420, %v4602
        %v4604 = vrot.slane %v4603, 2
        %v4605 = vadd.f32 %v4603, %v4604
        %v4606 = vrot.slane %v4605, 1
        %v4607 = vadd.f32 %v4605, %v4606
        %v4608 = vrot.slane %v4421, 4
        %v4609 = vadd.f32 %v4421, %v4608
        %v4610 = vrot.slane %v4609, 2
        %v4611 = vadd.f32 %v4609, %v4610
        %v4612 = vrot.slane %v4611, 1
        %v4613 = vadd.f32 %v4611, %v4612
        %v4614 = vld [vmem:[%s7] sm:$0xf]
        %v4616 = vlaneseq
        %v4617 = vshrl.u32 %v4616, 7
        %v4618 = vsub.s32 0, %v4617
        %v4619 = vrot.slane %v4614, %v4618
        %v4620 = vlaneseq
        %v4621 = vshrl.u32 %v4620, 7
        %v4622 = vsub.s32 1, %v4621
        %v4623 = vrot.slane %v4614, %v4622
        %v4624 = vlaneseq
        %v4625 = vshrl.u32 %v4624, 7
        %v4626 = vsub.s32 2, %v4625
        %v4627 = vrot.slane %v4614, %v4626
        %v4628 = vlaneseq
        %v4629 = vshrl.u32 %v4628, 7
        %v4630 = vsub.s32 3, %v4629
        %v4631 = vrot.slane %v4614, %v4630
        %v4636 = vmul.f32 %v4427, %v4619
        %v4637 = vmul.f32 %v4433, %v4623
        %v4638 = vmul.f32 %v4439, %v4627
        %v4639 = vmul.f32 %v4445, %v4631
        %v4640 = vmul.f32 %v4451, %v4619
        %v4641 = vmul.f32 %v4457, %v4623
        %v4642 = vmul.f32 %v4463, %v4627
        %v4643 = vmul.f32 %v4469, %v4631
        %v4644 = vmul.f32 %v4475, %v4619
        %v4645 = vmul.f32 %v4481, %v4623
        %v4646 = vmul.f32 %v4487, %v4627
        %v4647 = vmul.f32 %v4493, %v4631
        %v4648 = vmul.f32 %v4499, %v4619
        %v4649 = vmul.f32 %v4505, %v4623
        %v4650 = vmul.f32 %v4511, %v4627
        %v4651 = vmul.f32 %v4517, %v4631
        %v4652 = vmul.f32 %v4523, %v4619
        %v4653 = vmul.f32 %v4529, %v4623
        %v4654 = vmul.f32 %v4535, %v4627
        %v4655 = vmul.f32 %v4541, %v4631
        %v4656 = vmul.f32 %v4547, %v4619
        %v4657 = vmul.f32 %v4553, %v4623
        %v4658 = vmul.f32 %v4559, %v4627
        %v4659 = vmul.f32 %v4565, %v4631
        %v4660 = vmul.f32 %v4571, %v4619
        %v4661 = vmul.f32 %v4577, %v4623
        %v4662 = vmul.f32 %v4583, %v4627
        %v4663 = vmul.f32 %v4589, %v4631
        %v4664 = vmul.f32 %v4595, %v4619
        %v4665 = vmul.f32 %v4601, %v4623
        %v4666 = vmul.f32 %v4607, %v4627
        %v4667 = vmul.f32 %v4613, %v4631
        %v4700 = vrot.slane %v4640, 7
        %v4701 = vsel %vm4141, %v4700, %v4636
        %v4702 = vrot.slane %v4644, 6
        %v4703 = vsel %vm4143, %v4702, %v4701
        %v4704 = vrot.slane %v4648, 5
        %v4705 = vsel %vm4145, %v4704, %v4703
        %v4706 = vrot.slane %v4652, 4
        %v4707 = vsel %vm4147, %v4706, %v4705
        %v4708 = vrot.slane %v4656, 3
        %v4709 = vsel %vm4149, %v4708, %v4707
        %v4710 = vrot.slane %v4660, 2
        %v4711 = vsel %vm4151, %v4710, %v4709
        %v4712 = vrot.slane %v4664, 1
        %v4713 = vsel %vm4153, %v4712, %v4711
        %v4714 = vrot.slane %v4641, 7
        %v4715 = vsel %vm4141, %v4714, %v4637
        %v4716 = vrot.slane %v4645, 6
        %v4717 = vsel %vm4143, %v4716, %v4715
        %v4718 = vrot.slane %v4649, 5
        %v4719 = vsel %vm4145, %v4718, %v4717
        %v4720 = vrot.slane %v4653, 4
        %v4721 = vsel %vm4147, %v4720, %v4719
        %v4722 = vrot.slane %v4657, 3
        %v4723 = vsel %vm4149, %v4722, %v4721
        %v4724 = vrot.slane %v4661, 2
        %v4725 = vsel %vm4151, %v4724, %v4723
        %v4726 = vrot.slane %v4665, 1
        %v4727 = vsel %vm4153, %v4726, %v4725
        %v4728 = vrot.slane %v4642, 7
        %v4729 = vsel %vm4141, %v4728, %v4638
        %v4730 = vrot.slane %v4646, 6
        %v4731 = vsel %vm4143, %v4730, %v4729
        %v4732 = vrot.slane %v4650, 5
        %v4733 = vsel %vm4145, %v4732, %v4731
        %v4734 = vrot.slane %v4654, 4
        %v4735 = vsel %vm4147, %v4734, %v4733
        %v4736 = vrot.slane %v4658, 3
        %v4737 = vsel %vm4149, %v4736, %v4735
        %v4738 = vrot.slane %v4662, 2
        %v4739 = vsel %vm4151, %v4738, %v4737
        %v4740 = vrot.slane %v4666, 1
        %v4741 = vsel %vm4153, %v4740, %v4739
        %v4742 = vrot.slane %v4643, 7
        %v4743 = vsel %vm4141, %v4742, %v4639
        %v4744 = vrot.slane %v4647, 6
        %v4745 = vsel %vm4143, %v4744, %v4743
        %v4746 = vrot.slane %v4651, 5
        %v4747 = vsel %vm4145, %v4746, %v4745
        %v4748 = vrot.slane %v4655, 4
        %v4749 = vsel %vm4147, %v4748, %v4747
        %v4750 = vrot.slane %v4659, 3
        %v4751 = vsel %vm4149, %v4750, %v4749
        %v4752 = vrot.slane %v4663, 2
        %v4753 = vsel %vm4151, %v4752, %v4751
        %v4754 = vrot.slane %v4667, 1
        %v4755 = vsel %vm4153, %v4754, %v4753
        %v4760 = vadd.f32 %v4713, %v4727
        %v4761 = vadd.f32 %v4760, %v4741
        %v4762 = vadd.f32 %v4761, %v4755
        %4763 = vadd.xlane.f32.xlu0 %v4762
        %v4764 = vpop.xlane.xlu0 %4763
        %v4765 = vld [vmem:[#allocation3] sm:$0x1]
        %v4767 = vlaneseq
        %v4768 = vshrl.u32 %v4767, 7
        %v4769 = vsub.s32 0, %v4768
        %v4770 = vrot.slane %v4765, %v4769
        %v4772 = vadd.f32 %v4764, %v4770
        %vm4773 = vcmask 7168
        %4774 = vst.msk [vmem:[%s432] sm:$0xff] %vm4773, %v4772
        %v4775 = vlaneseq
        %v4776 = vshrl.u32 %v4775, 7
        %v4777 = vsub.s32 %v4108, %v4776
        %v4778 = vrot.slane %v4353, %v4777
        %v4779 = vlaneseq
        %v4780 = vshrl.u32 %v4779, 7
        %v4781 = vsub.s32 %v4108, %v4780
        %v4782 = vrot.slane %v4358, %v4781
        %v4783 = vlaneseq
        %v4784 = vshrl.u32 %v4783, 7
        %v4785 = vsub.s32 %v4108, %v4784
        %v4786 = vrot.slane %v4363, %v4785
        %v4787 = vlaneseq
        %v4788 = vshrl.u32 %v4787, 7
        %v4789 = vsub.s32 %v4108, %v4788
        %v4790 = vrot.slane %v4368, %v4789
        %v4791 = vlaneseq
        %v4792 = vshrl.u32 %v4791, 7
        %v4793 = vsub.s32 %v4108, %v4792
        %v4794 = vrot.slane %v4373, %v4793
        %v4795 = vlaneseq
        %v4796 = vshrl.u32 %v4795, 7
        %v4797 = vsub.s32 %v4108, %v4796
        %v4798 = vrot.slane %v4378, %v4797
        %v4799 = vlaneseq
        %v4800 = vshrl.u32 %v4799, 7
        %v4801 = vsub.s32 %v4108, %v4800
        %v4802 = vrot.slane %v4383, %v4801
        %v4803 = vlaneseq
        %v4804 = vshrl.u32 %v4803, 7
        %v4805 = vsub.s32 %v4108, %v4804
        %v4806 = vrot.slane %v4388, %v4805
        %v4807 = vsel %vm4141, %v4782, %v4778
        %v4808 = vsel %vm4143, %v4786, %v4807
        %v4809 = vsel %vm4145, %v4790, %v4808
        %v4810 = vsel %vm4147, %v4794, %v4809
        %v4811 = vsel %vm4149, %v4798, %v4810
        %v4812 = vsel %vm4151, %v4802, %v4811
        %v4813 = vsel %vm4153, %v4806, %v4812
        %4815 = vst.msk [vmem:[%s436] sm:$0xff] %vm4156, %v4813
        %p4816 = scmp.lt.s32.totalorder %s31, 1
        %s4817 = scalar_select %p4816, %s31, 1
        %s4818 = smul.addr %s4817, 8
        %s4819 = scalar_lea.vmem %s9, %s4818
        %p4820 = scmp.lt.s32.totalorder %s31, 1
        %s4821 = scalar_select %p4820, %s31, 1
        %s4822 = smul.addr %s4821, 8
        %s4823 = scalar_lea.vmem %s10, %s4822
        // Predicated region
        $region73: #{tpu_custom_call.1} parent=55 // pred_check
          %p4824 = pneg %p243
        $region74: #{tpu_custom_call.1} parent=55 // pred_check_branch
          %4826 = sbr.rel (%p4824) target = $region76
        $region75: #{tpu_custom_call.1} parent=55 // pred_region
          _
        $region76: #{tpu_custom_call.1} parent=55 // pred_fallthru
          _
        // Predicated region
        $region77: #{tpu_custom_call.1} parent=55 // pred_check
          %p4827 = pneg %p269
        $region78: #{tpu_custom_call.1} parent=55 // pred_check_branch
          %4829 = sbr.rel (%p4827) target = $region80
        $region79: #{tpu_custom_call.1} parent=55 // pred_region
          _
        $region80: #{tpu_custom_call.1} parent=55 // pred_fallthru
          _
      $region56: #{tpu_custom_call.1} parent=5 // pred_fallthru
        _
      %p4830 = scmp.le.s32.totalorder 2, %s26
      // Predicated region
      $region81: #{tpu_custom_call.1} parent=5 // pred_check
        %p4831 = pneg %p4830
      $region82: #{tpu_custom_call.1} parent=5 // pred_check_branch
        %4833 = sbr.rel (%p4831) target = $region84
      $region83: #{tpu_custom_call.1} parent=5 // pred_region
        %s4834 = ssub.s32 %s26, 2
        // Predicated region
        $region85: #{tpu_custom_call.1} parent=83 // pred_check
          %p4835 = pneg %p249
        $region86: #{tpu_custom_call.1} parent=83 // pred_check_branch
          %4837 = sbr.rel (%p4835) target = $region88
        $region87: #{tpu_custom_call.1} parent=83 // pred_region
          %p4838 = scmp.lt.s32.totalorder %s32, 1
          %s4839 = scalar_select %p4838, %s32, 1
          %s4840 = smul.addr %s4839, 8
          %s4841 = scalar_lea.vmem %s9, %s4840
        $region88: #{tpu_custom_call.1} parent=83 // pred_fallthru
          _
        // Predicated region
        $region89: #{tpu_custom_call.1} parent=83 // pred_check
          %p4842 = pneg %p275
        $region90: #{tpu_custom_call.1} parent=83 // pred_check_branch
          %4844 = sbr.rel (%p4842) target = $region92
        $region91: #{tpu_custom_call.1} parent=83 // pred_region
          %p4845 = scmp.lt.s32.totalorder %s32, 1
          %s4846 = scalar_select %p4845, %s32, 1
          %s4847 = smul.addr %s4846, 8
          %s4848 = scalar_lea.vmem %s10, %s4847
        $region92: #{tpu_custom_call.1} parent=83 // pred_fallthru
          _
      $region84: #{tpu_custom_call.1} parent=5 // pred_fallthru
        _
    $region6: #{tpu_custom_call.1} parent=1 // loop_footer
      %s30 = sadd.s32 1, %s26
    $region7: #{tpu_custom_call.1} parent=1 // loop_footer_branch
      %25 = sbr.rel target = $region3
    $region8: #{tpu_custom_call.1} parent=1 // loop_exit
      _
    %4849 = vsyncpa [#allocation5], 1
    %s4850 = scalar_lea.sflag [#allocation5], 1
    %4851 = vsyncpa %s4850, 1
    %4852 = vsyncpa [#allocation7], 1
    %4853 = vsyncpa [#allocation10], 1

</llo_original>
